<compile_context>
chip_gen: v7x
topology: tpu7x:2x2x1
jax: 0.10.0
libtpu: 0.0.40
codegen_flags: <defaults>
</compile_context>

<pallas_src>
import math
from functools import partial

import jax
import jax.numpy as jnp
from jax.experimental import pallas as pl
from jax.experimental.pallas import tpu as pltpu

# Config mirroring `args`: hidden_size=32, num_hidden_layers (= num_heads)=4,
# num_intent_clusters=2, vanilla_attention=False.
HIDDEN = 32
NUM_HEADS = 4
HEAD_DIM = HIDDEN // NUM_HEADS          # attention_head_size
NUM_CLUSTERS = 2
N_SEQS = 4                              # N (batch of sequences)
SEQ_LEN = 8                             # C
EPS = 1e-12


def _attention_kernel(seq_ref, mask_ref, wqkv_ref, bqkv_ref, wd_ref, bd_ref,
                      gamma_ref, beta_ref, hid_ref, map_ref, *, n, c, e, h):
    """Fused self-attention over all N*C rows in one shot.

    seq_ref : (n*c, e)   rows are (sequence, position) row-major
    mask_ref: (n, c, c)  additive mask already paired per element (see wrapper)
    """
    hd = e // h
    r = n * c
    scale = 1.0 / math.sqrt(e)          # module divides scores by sqrt(hidden_size)

    x = seq_ref[...]                                                   # (r, e)

    # --- fused QKV projection: one MXU matmul + one bias add for all rows -------------
    qkv = jnp.dot(x, wqkv_ref[...], preferred_element_type=jnp.float32) + bqkv_ref[...]
    q = qkv[:, 0:e] * scale             # fold 1/sqrt(hidden) into q once
    k = qkv[:, e:2 * e]
    v = qkv[:, 2 * e:3 * e]

    # --- stack heads on a leading batch axis: block b = head*n + seq_idx --------------
    def stack_heads(m2d):
        return jnp.concatenate(
            [m2d[:, i * hd:(i + 1) * hd].reshape(n, c, hd) for i in range(h)], axis=0)

    qs = stack_heads(q)                                                # (h*n, c, hd)
    ks = stack_heads(k)
    vs = stack_heads(v)
    mask_all = jnp.concatenate([mask_ref[...]] * h, axis=0)            # (h*n, c, c)

    # --- one batched score matmul + one fused softmax pass over all heads -------------
    s = jnp.einsum('bqd,bkd->bqk', qs, ks,
                   preferred_element_type=jnp.float32) + mask_all
    s = s - jnp.max(s, axis=-1, keepdims=True)
    ex = jnp.exp(s)
    p = ex * pl.reciprocal(jnp.sum(ex, axis=-1, keepdims=True), approx=True)
    # attn_dropout: identity in eval mode
    ctx = jnp.einsum('bqk,bkd->bqd', p, vs,
                     preferred_element_type=jnp.float32)               # (h*n, c, hd)

    # --- output dense as a sum over per-head weight slices (no lane-axis concat) ------
    wd = wd_ref[...]
    hs = jnp.zeros((r, e), jnp.float32)
    for i in range(h):
        ctx_i = ctx[i * n:(i + 1) * n].reshape(r, hd)
        hs = hs + jnp.dot(ctx_i, wd[i * hd:(i + 1) * hd, :],
                          preferred_element_type=jnp.float32)
    hs = hs + bd_ref[...]
    # output_dropout: identity in eval mode

    # --- residual + LayerNorm (biased variance, eps=1e-12, matches torch) -------------
    y = hs + x
    mu = jnp.mean(y, axis=-1, keepdims=True)
    var = jnp.mean((y - mu) ** 2, axis=-1, keepdims=True)
    normed = (y - mu) * jax.lax.rsqrt(var + EPS)
    hid_ref[...] = normed * gamma_ref[...] + beta_ref[...]

    # --- attention map: mean of probs over heads ---------------------------------------
    psum = p[0:n]
    for i in range(1, h):
        psum = psum + p[i * n:(i + 1) * n]
    map_ref[...] = psum * (1.0 / h)


def clustered_attention_chunking(seq, attention_mask, cluster_id, params,
                                 num_intent_clusters=NUM_CLUSTERS,
                                 num_heads=NUM_HEADS):
    n, c, e = seq.shape
    chunk = n // num_intent_clusters
    nt = chunk * num_intent_clusters
    assert nt == n, "example keeps N divisible by num_intent_clusters"

    # Chunking/sorting plumbing (plain JAX): with key=None every batch element is
    # attended independently, so sort -> chunk -> attend -> concat -> unsort reduces to
    #   output[i]       = SelfAttention(seq[i], attention_mask[reverse_indices[i]])
    #   attention_map[i] likewise.
    sorted_indices = jnp.argsort(cluster_id)
    reverse_indices = jnp.argsort(sorted_indices)
    mask3 = attention_mask[:, 0] if attention_mask.ndim == 4 else attention_mask
    mask_paired = jnp.take(mask3, reverse_indices, axis=0)            # (n, c, c)

    seq2d = seq.reshape(n * c, e)                                     # fuse batch -> rows
    wqkv, bqkv, wd, bd, gamma, beta = params

    kernel = partial(_attention_kernel, n=n, c=c, e=e, h=num_heads)

    grid_spec = pltpu.PrefetchScalarGridSpec(
        num_scalar_prefetch=0,
        grid=(1,),                                   # single invocation, no grid loop
        in_specs=[
            pl.BlockSpec((n * c, e), lambda i: (0, 0)),       # seq (fused rows)
            pl.BlockSpec((n, c, c), lambda i: (0, 0, 0)),     # paired additive mask
            pl.BlockSpec((e, 3 * e), lambda i: (0, 0)),       # fused Wqkv (in, 3*out)
            pl.BlockSpec((1, 3 * e), lambda i: (0, 0)),       # fused bqkv
            pl.BlockSpec((e, e), lambda i: (0, 0)),           # Wdense
            pl.BlockSpec((1, e), lambda i: (0, 0)),           # bdense
            pl.BlockSpec((1, e), lambda i: (0, 0)),           # ln gamma
            pl.BlockSpec((1, e), lambda i: (0, 0)),           # ln beta
        ],
        out_specs=[
            pl.BlockSpec((n * c, e), lambda i: (0, 0)),       # hidden (flattened rows)
            pl.BlockSpec((n, c, c), lambda i: (0, 0, 0)),     # attention map
        ],
    )

    hid2d, amap = pl.pallas_call(
        kernel,
        out_shape=(jax.ShapeDtypeStruct((n * c, e), jnp.float32),
                   jax.ShapeDtypeStruct((n, c, c), jnp.float32)),
        grid_spec=grid_spec,
        compiler_params=pltpu.CompilerParams(dimension_semantics=("arbitrary",)),
    )(seq2d, mask_paired, wqkv, bqkv, wd, bd, gamma, beta)

    output = hid2d.reshape(n, c, e)
    return output, amap


def init_params(key):
    """Deterministic linear / layernorm params (shapes from the module __init__).
    Linear weights are stored pre-transposed as (in, out); Wq|Wk|Wv fused to (in, 3*out)."""
    ks = jax.random.split(key, 8)

    def linear(kw, kb, fan_in, fan_out):
        bound = 1.0 / math.sqrt(fan_in)
        w = jax.random.uniform(kw, (fan_in, fan_out), jnp.float32, -bound, bound)
        b = jax.random.uniform(kb, (1, fan_out), jnp.float32, -bound, bound)
        return w, b

    wq, bq = linear(ks[0], ks[1], HIDDEN, HIDDEN)
    wk, bk = linear(ks[2], ks[3], HIDDEN, HIDDEN)
    wv, bv = linear(ks[4], ks[5], HIDDEN, HIDDEN)
    wd, bd = linear(ks[6], ks[7], HIDDEN, HIDDEN)
    wqkv = jnp.concatenate([wq, wk, wv], axis=1)      # (E, 3E)
    bqkv = jnp.concatenate([bq, bk, bv], axis=1)      # (1, 3E)
    gamma = jnp.ones((1, HIDDEN), jnp.float32)
    beta = jnp.zeros((1, HIDDEN), jnp.float32)
    return (wqkv, bqkv, wd, bd, gamma, beta)


if __name__ == "__main__":
    key = jax.random.PRNGKey(0)
    k_seq, k_par = jax.random.split(key, 2)

    seq = jax.random.normal(k_seq, (N_SEQS, SEQ_LEN, HIDDEN), jnp.float32)

    # Key-padding style additive mask, 4D (N, 1, C, C) as the module slices it.
    lengths = jnp.array([SEQ_LEN, SEQ_LEN - 3, SEQ_LEN - 1, SEQ_LEN - 2], jnp.int32)
    valid = jnp.arange(SEQ_LEN)[None, :] < lengths[:, None]              # (N, C)
    attention_mask = jnp.broadcast_to(
        jnp.where(valid, 0.0, -1e9)[:, None, None, :],
        (N_SEQS, 1, SEQ_LEN, SEQ_LEN)).astype(jnp.float32)

    # cluster assignment per sequence (length N), nontrivial permutation after argsort
    cluster_id = jnp.array([1, 0, 0, 1], jnp.int32)

    params = init_params(k_par)

    output, attention_map = clustered_attention_chunking(seq, attention_mask,
                                                         cluster_id, params)
    jax.block_until_ready((output, attention_map))

    assert output.shape == (N_SEQS, SEQ_LEN, HIDDEN)
    assert attention_map.shape == (N_SEQS, SEQ_LEN, SEQ_LEN)
    print("KERNEL_OK")
</pallas_src>

<mosaic_0001>
module attributes {stable_mosaic.version = 11 : i64} {
  func.func @_attention_kernel(%arg0: i32, %arg1: memref<32x32xf32, #tpu.memory_space<vmem>>, %arg2: memref<4x8x8xf32, #tpu.memory_space<vmem>>, %arg3: memref<32x96xf32, #tpu.memory_space<vmem>>, %arg4: memref<1x96xf32, #tpu.memory_space<vmem>>, %arg5: memref<32x32xf32, #tpu.memory_space<vmem>>, %arg6: memref<1x32xf32, #tpu.memory_space<vmem>>, %arg7: memref<1x32xf32, #tpu.memory_space<vmem>>, %arg8: memref<1x32xf32, #tpu.memory_space<vmem>>, %arg9: memref<32x32xf32, #tpu.memory_space<vmem>>, %arg10: memref<4x8x8xf32, #tpu.memory_space<vmem>>) attributes {dimension_semantics = [#tpu.dimension_semantics<arbitrary>], iteration_bounds = array<i64: 1>, scalar_prefetch = 0 : i64, scratch_operands = 0 : i64, tpu.core_type = #tpu.core_type<tc>, window_params = [{pipeline_mode = #tpu.pipeline_mode<synchronous>, transform_indices = @transform_0, window_bounds = array<i64: 32, 32>}, {pipeline_mode = #tpu.pipeline_mode<synchronous>, transform_indices = @transform_1, window_bounds = array<i64: 4, 8, 8>}, {pipeline_mode = #tpu.pipeline_mode<synchronous>, transform_indices = @transform_2, window_bounds = array<i64: 32, 96>}, {pipeline_mode = #tpu.pipeline_mode<synchronous>, transform_indices = @transform_3, window_bounds = array<i64: 1, 96>}, {pipeline_mode = #tpu.pipeline_mode<synchronous>, transform_indices = @transform_4, window_bounds = array<i64: 32, 32>}, {pipeline_mode = #tpu.pipeline_mode<synchronous>, transform_indices = @transform_5, window_bounds = array<i64: 1, 32>}, {pipeline_mode = #tpu.pipeline_mode<synchronous>, transform_indices = @transform_6, window_bounds = array<i64: 1, 32>}, {pipeline_mode = #tpu.pipeline_mode<synchronous>, transform_indices = @transform_7, window_bounds = array<i64: 1, 32>}, {pipeline_mode = #tpu.pipeline_mode<synchronous>, transform_indices = @transform_8, window_bounds = array<i64: 32, 32>}, {pipeline_mode = #tpu.pipeline_mode<synchronous>, transform_indices = @transform_9, window_bounds = array<i64: 4, 8, 8>}]} {
    %c0 = arith.constant 0 : index
    %c0_0 = arith.constant 0 : index
    %0 = vector.load %arg1[%c0, %c0_0] : memref<32x32xf32, #tpu.memory_space<vmem>>, vector<32x32xf32>
    %c0_1 = arith.constant 0 : index
    %c0_2 = arith.constant 0 : index
    %1 = vector.load %arg3[%c0_1, %c0_2] : memref<32x96xf32, #tpu.memory_space<vmem>>, vector<32x96xf32>
    %cst = arith.constant dense<0.000000e+00> : vector<32x96xf32>
    %2 = tpu.matmul %0, %1, %cst {dimension_numbers = #tpu.dot_dimension_numbers<[1], [0], [0], [1], [0, 0, 1, 1], [], []>} : vector<32x32xf32>, vector<32x96xf32>, vector<32x96xf32> -> vector<32x96xf32>
    %c0_3 = arith.constant 0 : index
    %c0_4 = arith.constant 0 : index
    %3 = vector.load %arg4[%c0_3, %c0_4] : memref<1x96xf32, #tpu.memory_space<vmem>>, vector<1x96xf32>
    %4 = vector.broadcast %3 : vector<1x96xf32> to vector<32x96xf32>
    %5 = arith.addf %2, %4 : vector<32x96xf32>
    %6 = vector.extract_strided_slice %5 {offsets = [0, 0], sizes = [32, 32], strides = [1, 1]} : vector<32x96xf32> to vector<32x32xf32>
    %cst_5 = arith.constant 0.176776692 : f32
    %7 = vector.broadcast %cst_5 : f32 to vector<32x32xf32>
    %8 = arith.mulf %6, %7 : vector<32x32xf32>
    %9 = vector.extract_strided_slice %5 {offsets = [0, 32], sizes = [32, 32], strides = [1, 1]} : vector<32x96xf32> to vector<32x32xf32>
    %10 = vector.extract_strided_slice %5 {offsets = [0, 64], sizes = [32, 32], strides = [1, 1]} : vector<32x96xf32> to vector<32x32xf32>
    %11 = vector.extract_strided_slice %8 {offsets = [0, 0], sizes = [32, 8], strides = [1, 1]} : vector<32x32xf32> to vector<32x8xf32>
    %12 = vector.shape_cast %11 : vector<32x8xf32> to vector<4x8x8xf32>
    %13 = vector.extract_strided_slice %8 {offsets = [0, 8], sizes = [32, 8], strides = [1, 1]} : vector<32x32xf32> to vector<32x8xf32>
    %14 = vector.shape_cast %13 : vector<32x8xf32> to vector<4x8x8xf32>
    %15 = vector.extract_strided_slice %8 {offsets = [0, 16], sizes = [32, 8], strides = [1, 1]} : vector<32x32xf32> to vector<32x8xf32>
    %16 = vector.shape_cast %15 : vector<32x8xf32> to vector<4x8x8xf32>
    %17 = vector.extract_strided_slice %8 {offsets = [0, 24], sizes = [32, 8], strides = [1, 1]} : vector<32x32xf32> to vector<32x8xf32>
    %18 = vector.shape_cast %17 : vector<32x8xf32> to vector<4x8x8xf32>
    %19 = tpu.concatenate %12, %14, %16, %18 in 0 : vector<4x8x8xf32>, vector<4x8x8xf32>, vector<4x8x8xf32>, vector<4x8x8xf32> -> vector<16x8x8xf32>
    %20 = vector.extract_strided_slice %9 {offsets = [0, 0], sizes = [32, 8], strides = [1, 1]} : vector<32x32xf32> to vector<32x8xf32>
    %21 = vector.shape_cast %20 : vector<32x8xf32> to vector<4x8x8xf32>
    %22 = vector.extract_strided_slice %9 {offsets = [0, 8], sizes = [32, 8], strides = [1, 1]} : vector<32x32xf32> to vector<32x8xf32>
    %23 = vector.shape_cast %22 : vector<32x8xf32> to vector<4x8x8xf32>
    %24 = vector.extract_strided_slice %9 {offsets = [0, 16], sizes = [32, 8], strides = [1, 1]} : vector<32x32xf32> to vector<32x8xf32>
    %25 = vector.shape_cast %24 : vector<32x8xf32> to vector<4x8x8xf32>
    %26 = vector.extract_strided_slice %9 {offsets = [0, 24], sizes = [32, 8], strides = [1, 1]} : vector<32x32xf32> to vector<32x8xf32>
    %27 = vector.shape_cast %26 : vector<32x8xf32> to vector<4x8x8xf32>
    %28 = tpu.concatenate %21, %23, %25, %27 in 0 : vector<4x8x8xf32>, vector<4x8x8xf32>, vector<4x8x8xf32>, vector<4x8x8xf32> -> vector<16x8x8xf32>
    %29 = vector.extract_strided_slice %10 {offsets = [0, 0], sizes = [32, 8], strides = [1, 1]} : vector<32x32xf32> to vector<32x8xf32>
    %30 = vector.shape_cast %29 : vector<32x8xf32> to vector<4x8x8xf32>
    %31 = vector.extract_strided_slice %10 {offsets = [0, 8], sizes = [32, 8], strides = [1, 1]} : vector<32x32xf32> to vector<32x8xf32>
    %32 = vector.shape_cast %31 : vector<32x8xf32> to vector<4x8x8xf32>
    %33 = vector.extract_strided_slice %10 {offsets = [0, 16], sizes = [32, 8], strides = [1, 1]} : vector<32x32xf32> to vector<32x8xf32>
    %34 = vector.shape_cast %33 : vector<32x8xf32> to vector<4x8x8xf32>
    %35 = vector.extract_strided_slice %10 {offsets = [0, 24], sizes = [32, 8], strides = [1, 1]} : vector<32x32xf32> to vector<32x8xf32>
    %36 = vector.shape_cast %35 : vector<32x8xf32> to vector<4x8x8xf32>
    %37 = tpu.concatenate %30, %32, %34, %36 in 0 : vector<4x8x8xf32>, vector<4x8x8xf32>, vector<4x8x8xf32>, vector<4x8x8xf32> -> vector<16x8x8xf32>
    %c0_6 = arith.constant 0 : index
    %c0_7 = arith.constant 0 : index
    %c0_8 = arith.constant 0 : index
    %38 = vector.load %arg2[%c0_6, %c0_7, %c0_8] : memref<4x8x8xf32, #tpu.memory_space<vmem>>, vector<4x8x8xf32>
    %39 = tpu.concatenate %38, %38, %38, %38 in 0 : vector<4x8x8xf32>, vector<4x8x8xf32>, vector<4x8x8xf32>, vector<4x8x8xf32> -> vector<16x8x8xf32>
    "tpu.trace_start"() <{level = 10 : i32, message = "bqd,bkd->bqk"}> : () -> ()
    %cst_9 = arith.constant dense<0.000000e+00> : vector<16x8x8xf32>
    %40 = tpu.matmul %19, %28, %cst_9 {dimension_numbers = #tpu.dot_dimension_numbers<[2], [2], [1], [1], [0, 0, 0, 1, 1, 1], [0], [0]>} : vector<16x8x8xf32>, vector<16x8x8xf32>, vector<16x8x8xf32> -> vector<16x8x8xf32>
    "tpu.trace_stop"() : () -> ()
    %41 = arith.addf %40, %39 : vector<16x8x8xf32>
    %cst_10 = arith.constant dense<0xFF800000> : vector<16x8xf32>
    %42 = vector.multi_reduction <maximumf>, %41, %cst_10 [2] : vector<16x8x8xf32> to vector<16x8xf32>
    %43 = vector.shape_cast %42 : vector<16x8xf32> to vector<16x8x1xf32>
    %44 = vector.broadcast %43 : vector<16x8x1xf32> to vector<16x8x8xf32>
    %45 = arith.subf %41, %44 : vector<16x8x8xf32>
    %46 = math.exp %45 : vector<16x8x8xf32>
    %cst_11 = arith.constant dense<0.000000e+00> : vector<16x8xf32>
    %47 = vector.multi_reduction <add>, %46, %cst_11 [2] : vector<16x8x8xf32> to vector<16x8xf32>
    %48 = vector.shape_cast %47 : vector<16x8xf32> to vector<16x8x1xf32>
    %49 = tpu.reciprocal %48 {approx = true} : vector<16x8x1xf32> -> vector<16x8x1xf32>
    %50 = vector.broadcast %49 : vector<16x8x1xf32> to vector<16x8x8xf32>
    %51 = arith.mulf %46, %50 : vector<16x8x8xf32>
    "tpu.trace_start"() <{level = 10 : i32, message = "bqk,bkd->bqd"}> : () -> ()
    %cst_12 = arith.constant dense<0.000000e+00> : vector<16x8x8xf32>
    %52 = tpu.matmul %51, %37, %cst_12 {dimension_numbers = #tpu.dot_dimension_numbers<[2], [1], [1], [2], [0, 0, 0, 1, 1, 2], [0], [0]>} : vector<16x8x8xf32>, vector<16x8x8xf32>, vector<16x8x8xf32> -> vector<16x8x8xf32>
    "tpu.trace_stop"() : () -> ()
    %c0_13 = arith.constant 0 : index
    %c0_14 = arith.constant 0 : index
    %53 = vector.load %arg5[%c0_13, %c0_14] : memref<32x32xf32, #tpu.memory_space<vmem>>, vector<32x32xf32>
    %cst_15 = arith.constant 0.000000e+00 : f32
    %54 = vector.broadcast %cst_15 : f32 to vector<32x32xf32>
    %55 = vector.extract_strided_slice %52 {offsets = [0, 0, 0], sizes = [4, 8, 8], strides = [1, 1, 1]} : vector<16x8x8xf32> to vector<4x8x8xf32>
    %56 = vector.shape_cast %55 : vector<4x8x8xf32> to vector<32x8xf32>
    %57 = vector.extract_strided_slice %53 {offsets = [0, 0], sizes = [8, 32], strides = [1, 1]} : vector<32x32xf32> to vector<8x32xf32>
    %cst_16 = arith.constant dense<0.000000e+00> : vector<32x32xf32>
    %58 = tpu.matmul %56, %57, %cst_16 {dimension_numbers = #tpu.dot_dimension_numbers<[1], [0], [0], [1], [0, 0, 1, 1], [], []>} : vector<32x8xf32>, vector<8x32xf32>, vector<32x32xf32> -> vector<32x32xf32>
    %59 = arith.addf %54, %58 : vector<32x32xf32>
    %60 = vector.extract_strided_slice %52 {offsets = [4, 0, 0], sizes = [4, 8, 8], strides = [1, 1, 1]} : vector<16x8x8xf32> to vector<4x8x8xf32>
    %61 = vector.shape_cast %60 : vector<4x8x8xf32> to vector<32x8xf32>
    %62 = vector.extract_strided_slice %53 {offsets = [8, 0], sizes = [8, 32], strides = [1, 1]} : vector<32x32xf32> to vector<8x32xf32>
    %cst_17 = arith.constant dense<0.000000e+00> : vector<32x32xf32>
    %63 = tpu.matmul %61, %62, %cst_17 {dimension_numbers = #tpu.dot_dimension_numbers<[1], [0], [0], [1], [0, 0, 1, 1], [], []>} : vector<32x8xf32>, vector<8x32xf32>, vector<32x32xf32> -> vector<32x32xf32>
    %64 = arith.addf %59, %63 : vector<32x32xf32>
    %65 = vector.extract_strided_slice %52 {offsets = [8, 0, 0], sizes = [4, 8, 8], strides = [1, 1, 1]} : vector<16x8x8xf32> to vector<4x8x8xf32>
    %66 = vector.shape_cast %65 : vector<4x8x8xf32> to vector<32x8xf32>
    %67 = vector.extract_strided_slice %53 {offsets = [16, 0], sizes = [8, 32], strides = [1, 1]} : vector<32x32xf32> to vector<8x32xf32>
    %cst_18 = arith.constant dense<0.000000e+00> : vector<32x32xf32>
    %68 = tpu.matmul %66, %67, %cst_18 {dimension_numbers = #tpu.dot_dimension_numbers<[1], [0], [0], [1], [0, 0, 1, 1], [], []>} : vector<32x8xf32>, vector<8x32xf32>, vector<32x32xf32> -> vector<32x32xf32>
    %69 = arith.addf %64, %68 : vector<32x32xf32>
    %70 = vector.extract_strided_slice %52 {offsets = [12, 0, 0], sizes = [4, 8, 8], strides = [1, 1, 1]} : vector<16x8x8xf32> to vector<4x8x8xf32>
    %71 = vector.shape_cast %70 : vector<4x8x8xf32> to vector<32x8xf32>
    %72 = vector.extract_strided_slice %53 {offsets = [24, 0], sizes = [8, 32], strides = [1, 1]} : vector<32x32xf32> to vector<8x32xf32>
    %cst_19 = arith.constant dense<0.000000e+00> : vector<32x32xf32>
    %73 = tpu.matmul %71, %72, %cst_19 {dimension_numbers = #tpu.dot_dimension_numbers<[1], [0], [0], [1], [0, 0, 1, 1], [], []>} : vector<32x8xf32>, vector<8x32xf32>, vector<32x32xf32> -> vector<32x32xf32>
    %74 = arith.addf %69, %73 : vector<32x32xf32>
    %c0_20 = arith.constant 0 : index
    %c0_21 = arith.constant 0 : index
    %75 = vector.load %arg6[%c0_20, %c0_21] : memref<1x32xf32, #tpu.memory_space<vmem>>, vector<1x32xf32>
    %76 = vector.broadcast %75 : vector<1x32xf32> to vector<32x32xf32>
    %77 = arith.addf %74, %76 : vector<32x32xf32>
    %78 = arith.addf %77, %0 : vector<32x32xf32>
    %cst_22 = arith.constant dense<0.000000e+00> : vector<32xf32>
    %79 = vector.multi_reduction <add>, %78, %cst_22 [1] : vector<32x32xf32> to vector<32xf32>
    %80 = vector.shape_cast %79 : vector<32xf32> to vector<32x1xf32>
    %cst_23 = arith.constant 3.200000e+01 : f32
    %81 = vector.broadcast %cst_23 : f32 to vector<32x1xf32>
    %82 = arith.divf %80, %81 : vector<32x1xf32>
    %83 = vector.broadcast %82 : vector<32x1xf32> to vector<32x32xf32>
    %84 = arith.subf %78, %83 : vector<32x32xf32>
    %85 = arith.mulf %84, %84 : vector<32x32xf32>
    %cst_24 = arith.constant dense<0.000000e+00> : vector<32xf32>
    %86 = vector.multi_reduction <add>, %85, %cst_24 [1] : vector<32x32xf32> to vector<32xf32>
    %87 = vector.shape_cast %86 : vector<32xf32> to vector<32x1xf32>
    %cst_25 = arith.constant 3.200000e+01 : f32
    %88 = vector.broadcast %cst_25 : f32 to vector<32x1xf32>
    %89 = arith.divf %87, %88 : vector<32x1xf32>
    %90 = vector.broadcast %82 : vector<32x1xf32> to vector<32x32xf32>
    %91 = arith.subf %78, %90 : vector<32x32xf32>
    %cst_26 = arith.constant 9.99999996E-13 : f32
    %92 = vector.broadcast %cst_26 : f32 to vector<32x1xf32>
    %93 = arith.addf %89, %92 : vector<32x1xf32>
    %94 = math.rsqrt %93 : vector<32x1xf32>
    %95 = vector.broadcast %94 : vector<32x1xf32> to vector<32x32xf32>
    %96 = arith.mulf %91, %95 : vector<32x32xf32>
    %c0_27 = arith.constant 0 : index
    %c0_28 = arith.constant 0 : index
    %97 = vector.load %arg7[%c0_27, %c0_28] : memref<1x32xf32, #tpu.memory_space<vmem>>, vector<1x32xf32>
    %98 = vector.broadcast %97 : vector<1x32xf32> to vector<32x32xf32>
    %99 = arith.mulf %96, %98 : vector<32x32xf32>
    %c0_29 = arith.constant 0 : index
    %c0_30 = arith.constant 0 : index
    %100 = vector.load %arg8[%c0_29, %c0_30] : memref<1x32xf32, #tpu.memory_space<vmem>>, vector<1x32xf32>
    %101 = vector.broadcast %100 : vector<1x32xf32> to vector<32x32xf32>
    %102 = arith.addf %99, %101 : vector<32x32xf32>
    %c0_31 = arith.constant 0 : index
    %c0_32 = arith.constant 0 : index
    %103 = vector.load %arg9[%c0_31, %c0_32] : memref<32x32xf32, #tpu.memory_space<vmem>>, vector<32x32xf32>
    tpu.vector_store %arg9[%c0_31, %c0_32], %102 {strides = array<i32>} : memref<32x32xf32, #tpu.memory_space<vmem>>, vector<32x32xf32>,
    %104 = vector.extract_strided_slice %51 {offsets = [0, 0, 0], sizes = [4, 8, 8], strides = [1, 1, 1]} : vector<16x8x8xf32> to vector<4x8x8xf32>
    %105 = vector.extract_strided_slice %51 {offsets = [4, 0, 0], sizes = [4, 8, 8], strides = [1, 1, 1]} : vector<16x8x8xf32> to vector<4x8x8xf32>
    %106 = arith.addf %104, %105 : vector<4x8x8xf32>
    %107 = vector.extract_strided_slice %51 {offsets = [8, 0, 0], sizes = [4, 8, 8], strides = [1, 1, 1]} : vector<16x8x8xf32> to vector<4x8x8xf32>
    %108 = arith.addf %106, %107 : vector<4x8x8xf32>
    %109 = vector.extract_strided_slice %51 {offsets = [12, 0, 0], sizes = [4, 8, 8], strides = [1, 1, 1]} : vector<16x8x8xf32> to vector<4x8x8xf32>
    %110 = arith.addf %108, %109 : vector<4x8x8xf32>
    %cst_33 = arith.constant 2.500000e-01 : f32
    %111 = vector.broadcast %cst_33 : f32 to vector<4x8x8xf32>
    %112 = arith.mulf %110, %111 : vector<4x8x8xf32>
    %c0_34 = arith.constant 0 : index
    %c0_35 = arith.constant 0 : index
    %c0_36 = arith.constant 0 : index
    %113 = vector.load %arg10[%c0_34, %c0_35, %c0_36] : memref<4x8x8xf32, #tpu.memory_space<vmem>>, vector<4x8x8xf32>
    tpu.vector_store %arg10[%c0_34, %c0_35, %c0_36], %112 {strides = array<i32>} : memref<4x8x8xf32, #tpu.memory_space<vmem>>, vector<4x8x8xf32>,
    return
  }
  func.func @transform_0(%arg0: i32) -> (i32, i32) {
    %c0_i32 = arith.constant 0 : i32
    %c0_i32_0 = arith.constant 0 : i32
    %c0_i32_1 = arith.constant 0 : i32
    return %c0_i32, %c0_i32_0 : i32, i32
  }
  func.func @transform_1(%arg0: i32) -> (i32, i32, i32) {
    %c0_i32 = arith.constant 0 : i32
    %c0_i32_0 = arith.constant 0 : i32
    %c0_i32_1 = arith.constant 0 : i32
    %c0_i32_2 = arith.constant 0 : i32
    return %c0_i32, %c0_i32_0, %c0_i32_1 : i32, i32, i32
  }
  func.func @transform_2(%arg0: i32) -> (i32, i32) {
    %c0_i32 = arith.constant 0 : i32
    %c0_i32_0 = arith.constant 0 : i32
    %c0_i32_1 = arith.constant 0 : i32
    return %c0_i32, %c0_i32_0 : i32, i32
  }
  func.func @transform_3(%arg0: i32) -> (i32, i32) {
    %c0_i32 = arith.constant 0 : i32
    %c0_i32_0 = arith.constant 0 : i32
    %c0_i32_1 = arith.constant 0 : i32
    return %c0_i32, %c0_i32_0 : i32, i32
  }
  func.func @transform_4(%arg0: i32) -> (i32, i32) {
    %c0_i32 = arith.constant 0 : i32
    %c0_i32_0 = arith.constant 0 : i32
    %c0_i32_1 = arith.constant 0 : i32
    return %c0_i32, %c0_i32_0 : i32, i32
  }
  func.func @transform_5(%arg0: i32) -> (i32, i32) {
    %c0_i32 = arith.constant 0 : i32
    %c0_i32_0 = arith.constant 0 : i32
    %c0_i32_1 = arith.constant 0 : i32
    return %c0_i32, %c0_i32_0 : i32, i32
  }
  func.func @transform_6(%arg0: i32) -> (i32, i32) {
    %c0_i32 = arith.constant 0 : i32
    %c0_i32_0 = arith.constant 0 : i32
    %c0_i32_1 = arith.constant 0 : i32
    return %c0_i32, %c0_i32_0 : i32, i32
  }
  func.func @transform_7(%arg0: i32) -> (i32, i32) {
    %c0_i32 = arith.constant 0 : i32
    %c0_i32_0 = arith.constant 0 : i32
    %c0_i32_1 = arith.constant 0 : i32
    return %c0_i32, %c0_i32_0 : i32, i32
  }
  func.func @transform_8(%arg0: i32) -> (i32, i32) {
    %c0_i32 = arith.constant 0 : i32
    %c0_i32_0 = arith.constant 0 : i32
    %c0_i32_1 = arith.constant 0 : i32
    return %c0_i32, %c0_i32_0 : i32, i32
  }
  func.func @transform_9(%arg0: i32) -> (i32, i32, i32) {
    %c0_i32 = arith.constant 0 : i32
    %c0_i32_0 = arith.constant 0 : i32
    %c0_i32_1 = arith.constant 0 : i32
    %c0_i32_2 = arith.constant 0 : i32
    return %c0_i32, %c0_i32_0, %c0_i32_1 : i32, i32, i32
  }
}

</mosaic_0001>

<llo_original>
// kernel: tpu_custom_call.1
$region0: #{tpu_custom_call.1}
  #allocation0 [shape = 'u32[]', space=smem, size = 0x4, offset = 0x4, fixed_abs, tag = 'smem constant byte address 0x4 - core index']
  #allocation1 [shape = 'u32[144,128]{1,0:T(1,128)}', space=vmem, size = 0x12000, scoped, tag = 'internal scratch']
  %s0 = inlined_call_operand.hbm [shape: f32[32,32], index: 0, kind: input, shape index: {}]
  %s1 = inlined_call_operand.hbm [shape: f32[4,8,8], index: 1, kind: input, shape index: {}]
  %s2 = inlined_call_operand.hbm [shape: f32[32,96], index: 2, kind: input, shape index: {}]
  %s3 = inlined_call_operand.vmem [shape: f32[1,96], index: 3, kind: input, shape index: {}]
  %s4 = inlined_call_operand.hbm [shape: f32[32,32], index: 4, kind: input, shape index: {}]
  %s5 = inlined_call_operand.vmem [shape: f32[1,32], index: 5, kind: input, shape index: {}]
  %s6 = inlined_call_operand.vmem [shape: f32[1,32], index: 6, kind: input, shape index: {}]
  %s7 = inlined_call_operand.vmem [shape: f32[1,32], index: 7, kind: input, shape index: {}]
  %s8 = inlined_call_operand.hbm [shape: f32[32,32], index: 8, kind: output, shape index: {0}]
  %s9 = inlined_call_operand.hbm [shape: f32[4,8,8], index: 9, kind: output, shape index: {1}]
  %10 = xla_tuple %s8, %s9
  %s11 = sld [smem:[#allocation0]]
  $region66: #{tpu_custom_call.1} parent=0
    _
  %s13 = ssub.s32 1, %s11
  %s14 = scalar_select 0, %s13, %s11
  $region1: #{tpu_custom_call.1} parent=0
    #allocation2 [shape = 'u8[16384]{0}', space=vmem, size = 0x4000, scoped, tag = 'input window, operand 0, single buffered']
    #allocation3 [shape = 's32[1]{0}', space=sflag, size = 0x4, scoped, tag = 'scoped memory for tpu_custom_call.1']
    #allocation4 [shape = 's32[1]{0}', space=sflag, size = 0x4, scoped, tag = 'scoped memory for tpu_custom_call.1']
    #allocation5 [shape = 'u8[16384]{0}', space=vmem, size = 0x4000, scoped, tag = 'input window, operand 1, single buffered']
    #allocation6 [shape = 's32[1]{0}', space=sflag, size = 0x4, scoped, tag = 'scoped memory for tpu_custom_call.1']
    #allocation7 [shape = 'u8[16384]{0}', space=vmem, size = 0x4000, scoped, tag = 'input window, operand 2, single buffered']
    #allocation8 [shape = 'u8[16384]{0}', space=vmem, size = 0x4000, scoped, tag = 'input window, operand 4, single buffered']
    #allocation9 [shape = 's32[1]{0}', space=sflag, size = 0x4, scoped, tag = 'scoped memory for tpu_custom_call.1']
    #allocation10 [shape = 'u8[16384]{0}', space=vmem, size = 0x4000, scoped, tag = 'output window, operand 0, single buffered']
    #allocation11 [shape = 'u8[16384]{0}', space=vmem, size = 0x4000, scoped, tag = 'output window, operand 1, single buffered']
    #allocation12 [shape = 's32[1]{0}', space=sflag, size = 0x4, scoped, tag = 'scoped memory for tpu_custom_call.1']
    %15 = vsyncpa [#allocation3], 0
    %16 = vsyncpa [#allocation6], 0
    %17 = vsyncpa [#allocation9], 0
    %18 = vsyncpa [#allocation4], 0
    %19 = vsyncpa [#allocation12], 0
    // Predicated region
    $region2: #{tpu_custom_call.1} parent=1 // pred_check
      _
    $region3: #{tpu_custom_call.1} parent=1 // pred_check_branch
      %21 = sbr.rel (0) target = $region5
    $region4: #{tpu_custom_call.1} parent=1 // pred_region
      %s23 = ssub.s32 512, 512
      %24 = vsyncadd [#allocation3], %s23
      %s25 = sshll.u32 [#allocation2], 4
      %s26 = int_to_ptr.vmem [resolvable:$true] %s25
      %31 = dma.hbm_to_vmem [thread:$0]  %s0, 512, %s26, [#allocation3], 128, 128, 8
    $region5: #{tpu_custom_call.1} parent=1 // pred_fallthru
      _
    // Predicated region
    $region6: #{tpu_custom_call.1} parent=1 // pred_check
      _
    $region7: #{tpu_custom_call.1} parent=1 // pred_check_branch
      %33 = sbr.rel (0) target = $region9
    $region8: #{tpu_custom_call.1} parent=1 // pred_region
      %s35 = ssub.s32 512, 512
      %36 = vsyncadd [#allocation6], %s35
      %s37 = sshll.u32 [#allocation5], 4
      %s38 = int_to_ptr.vmem [resolvable:$true] %s37
      %43 = dma.hbm_to_vmem [thread:$0]  %s1, 512, %s38, [#allocation6], 128, 128, 8
    $region9: #{tpu_custom_call.1} parent=1 // pred_fallthru
      _
    // Predicated region
    $region10: #{tpu_custom_call.1} parent=1 // pred_check
      _
    $region11: #{tpu_custom_call.1} parent=1 // pred_check_branch
      %45 = sbr.rel (0) target = $region13
    $region12: #{tpu_custom_call.1} parent=1 // pred_region
      %s47 = ssub.s32 512, 512
      %48 = vsyncadd [#allocation6], %s47
      %s49 = sshll.u32 [#allocation7], 4
      %s50 = int_to_ptr.vmem [resolvable:$true] %s49
      %55 = dma.hbm_to_vmem [thread:$0]  %s2, 512, %s50, [#allocation6], 128, 128, 8
    $region13: #{tpu_custom_call.1} parent=1 // pred_fallthru
      _
    // Predicated region
    $region14: #{tpu_custom_call.1} parent=1 // pred_check
      _
    $region15: #{tpu_custom_call.1} parent=1 // pred_check_branch
      %57 = sbr.rel (0) target = $region17
    $region16: #{tpu_custom_call.1} parent=1 // pred_region
      _
    $region17: #{tpu_custom_call.1} parent=1 // pred_fallthru
      _
    // Predicated region
    $region18: #{tpu_custom_call.1} parent=1 // pred_check
      _
    $region19: #{tpu_custom_call.1} parent=1 // pred_check_branch
      %59 = sbr.rel (0) target = $region21
    $region20: #{tpu_custom_call.1} parent=1 // pred_region
      %s61 = ssub.s32 512, 512
      %62 = vsyncadd [#allocation9], %s61
      %s63 = sshll.u32 [#allocation8], 4
      %s64 = int_to_ptr.vmem [resolvable:$true] %s63
      %69 = dma.hbm_to_vmem [thread:$0]  %s4, 512, %s64, [#allocation9], 128, 128, 8
    $region21: #{tpu_custom_call.1} parent=1 // pred_fallthru
      _
    // Predicated region
    $region22: #{tpu_custom_call.1} parent=1 // pred_check
      _
    $region23: #{tpu_custom_call.1} parent=1 // pred_check_branch
      %71 = sbr.rel (0) target = $region25
    $region24: #{tpu_custom_call.1} parent=1 // pred_region
      _
    $region25: #{tpu_custom_call.1} parent=1 // pred_fallthru
      _
    // Predicated region
    $region26: #{tpu_custom_call.1} parent=1 // pred_check
      _
    $region27: #{tpu_custom_call.1} parent=1 // pred_check_branch
      %73 = sbr.rel (0) target = $region29
    $region28: #{tpu_custom_call.1} parent=1 // pred_region
      _
    $region29: #{tpu_custom_call.1} parent=1 // pred_fallthru
      _
    // Predicated region
    $region30: #{tpu_custom_call.1} parent=1 // pred_check
      _
    $region31: #{tpu_custom_call.1} parent=1 // pred_check_branch
      %75 = sbr.rel (0) target = $region33
    $region32: #{tpu_custom_call.1} parent=1 // pred_region
      _
    $region33: #{tpu_custom_call.1} parent=1 // pred_fallthru
      _
    // Predicated region
    $region34: #{tpu_custom_call.1} parent=1 // pred_check
      _
    $region35: #{tpu_custom_call.1} parent=1 // pred_check_branch
      %77 = sbr.rel (0) target = $region37
    $region36: #{tpu_custom_call.1} parent=1 // pred_region
      %78 = dma.done [#allocation3], 512
    $region37: #{tpu_custom_call.1} parent=1 // pred_fallthru
      _
    // Predicated region
    $region38: #{tpu_custom_call.1} parent=1 // pred_check
      _
    $region39: #{tpu_custom_call.1} parent=1 // pred_check_branch
      %80 = sbr.rel (0) target = $region41
    $region40: #{tpu_custom_call.1} parent=1 // pred_region
      %81 = dma.done [#allocation6], 512
    $region41: #{tpu_custom_call.1} parent=1 // pred_fallthru
      _
    // Predicated region
    $region42: #{tpu_custom_call.1} parent=1 // pred_check
      _
    $region43: #{tpu_custom_call.1} parent=1 // pred_check_branch
      %83 = sbr.rel (0) target = $region45
    $region44: #{tpu_custom_call.1} parent=1 // pred_region
      %84 = dma.done [#allocation6], 512
    $region45: #{tpu_custom_call.1} parent=1 // pred_fallthru
      _
    // Predicated region
    $region46: #{tpu_custom_call.1} parent=1 // pred_check
      _
    $region47: #{tpu_custom_call.1} parent=1 // pred_check_branch
      %86 = sbr.rel (0) target = $region49
    $region48: #{tpu_custom_call.1} parent=1 // pred_region
      %87 = dma.done [#allocation9], 512
    $region49: #{tpu_custom_call.1} parent=1 // pred_fallthru
      _
    %v88 = vld [vmem:[#allocation2] sm:$0xff]
    %v89 = vld [vmem:[#allocation2 + $0x8] sm:$0xff]
    %v90 = vld [vmem:[#allocation2 + $0x10] sm:$0xff]
    %v91 = vld [vmem:[#allocation2 + $0x18] sm:$0xff]
    %v92 = vld [vmem:[#allocation7] sm:$0xff]
    %v93 = vld [vmem:[#allocation7 + $0x8] sm:$0xff]
    %v94 = vld [vmem:[#allocation7 + $0x10] sm:$0xff]
    %v95 = vld [vmem:[#allocation7 + $0x18] sm:$0xff]
    %v96 = vld [vmem:[%s3] sm:$0x1]
    %v98 = vlaneseq
    %v99 = vshrl.u32 %v98, 7
    %v100 = vsub.s32 0, %v99
    %v101 = vrot.slane %v96, %v100
    %vm103 = vcmask 261120
    %v105 = vsel %vm103, %v88, 0
    %v108 = vsel %vm103, %v89, 0
    %v111 = vsel %vm103, %v90, 0
    %v114 = vsel %vm103, %v91, 0
    %116 = vmatprep.subr.mxu0 0.0
    %117 = vmatpush1.msra.mxu0 %v92
    %118 = vmatprep.subr.mxu0 0.0
    %119 = vmatpush1.msra.mxu0 %v93
    %120 = vmatprep.subr.mxu0 0.0
    %121 = vmatpush1.msra.mxu0 %v94
    %122 = vmatprep.subr.mxu0 0.0
    %123 = vmatpush1.msra.mxu0 %v95
    %124 = vmatprep.subr.mxu0 0.0
    %125 = vmatpush1.msra.mxu0 0.0
    %126 = vmatprep.subr.mxu0 0.0
    %127 = vmatpush1.msra.mxu0 0.0
    %128 = vmatprep.subr.mxu0 0.0
    %129 = vmatpush1.msra.mxu0 0.0
    %130 = vmatprep.subr.mxu0 0.0
    %131 = vmatpush1.msra.mxu0 0.0
    %132 = vmatprep.subr.mxu0 0.0
    %133 = vmatpush1.msra.mxu0 0.0
    %134 = vmatprep.subr.mxu0 0.0
    %135 = vmatpush1.msra.mxu0 0.0
    %136 = vmatprep.subr.mxu0 0.0
    %137 = vmatpush1.msra.mxu0 0.0
    %138 = vmatprep.subr.mxu0 0.0
    %139 = vmatpush1.msra.mxu0 0.0
    %140 = vmatprep.subr.mxu0 0.0
    %141 = vmatpush1.msra.mxu0 0.0
    %142 = vmatprep.subr.mxu0 0.0
    %143 = vmatpush1.msra.mxu0 0.0
    %144 = vmatprep.subr.mxu0 0.0
    %145 = vmatpush1.msra.mxu0 0.0
    %146 = vmatprep.subr.mxu0 0.0
    %147 = vmatpush1.msra.mxu0 0.0
    %148 = vmatprep.subr.mxu0 0.0
    %149 = vmatpush1.msra.mxu0 0.0
    %150 = vmatprep.subr.mxu0 0.0
    %151 = vmatpush1.msra.mxu0 0.0
    %152 = vmatprep.subr.mxu0 0.0
    %153 = vmatpush1.msra.mxu0 0.0
    %154 = vmatprep.subr.mxu0 0.0
    %155 = vmatpush1.msra.mxu0 0.0
    %156 = vmatprep.subr.mxu0 0.0
    %157 = vmatpush1.msra.mxu0 0.0
    %158 = vmatprep.subr.mxu0 0.0
    %159 = vmatpush1.msra.mxu0 0.0
    %160 = vmatprep.subr.mxu0 0.0
    %161 = vmatpush1.msra.mxu0 0.0
    %162 = vmatprep.subr.mxu0 0.0
    %163 = vmatpush1.msra.mxu0 0.0
    %164 = vmatprep.subr.mxu0 0.0
    %165 = vmatpush1.msra.mxu0 0.0
    %166 = vmatprep.subr.mxu0 0.0
    %167 = vmatpush1.msra.mxu0 0.0
    %168 = vmatprep.subr.mxu0 0.0
    %169 = vmatpush1.msra.mxu0 0.0
    %170 = vmatprep.subr.mxu0 0.0
    %171 = vmatpush1.msra.mxu0 0.0
    %172 = vmatprep.subr.mxu0 0.0
    %173 = vmatpush1.msra.mxu0 0.0
    %174 = vmatprep.subr.mxu0 0.0
    %175 = vmatpush1.msra.mxu0 0.0
    %176 = vmatprep.subr.mxu0 0.0
    %177 = vmatpush1.msra.mxu0 0.0
    %178 = vmatprep.subr.mxu0 0.0
    %179 = vmatpush1.msra.mxu0 0.0
    %180 = vmatprep.mubr.f32.mxu0 0.0
    %181 = vmatmul.mubr.f32.gmra.mrb[0].mxu0 %v105
    %v182 = vpop.f32.mrb[0].mxu0
    %v183 = vadd.f32 %v101, %v182
    %v184 = vpop.f32.mrb[0].mxu0
    %185 = vmatprep.mubr.f32.mxu0 0.0
    %186 = vmatmul.mubr.f32.gmra.mrb[0].mxu0 %v108
    %v187 = vpop.f32.mrb[0].mxu0
    %v188 = vadd.f32 %v101, %v187
    %v189 = vpop.f32.mrb[0].mxu0
    %190 = vmatprep.mubr.f32.mxu0 0.0
    %191 = vmatmul.mubr.f32.gmra.mrb[0].mxu0 %v111
    %v192 = vpop.f32.mrb[0].mxu0
    %v193 = vadd.f32 %v101, %v192
    %v194 = vpop.f32.mrb[0].mxu0
    %195 = vmatprep.mubr.f32.mxu0 0.0
    %196 = vmatmul.mubr.f32.gmra.mrb[0].mxu0 %v114
    %v197 = vpop.f32.mrb[0].mxu0
    %v198 = vadd.f32 %v101, %v197
    %v199 = vpop.f32.mrb[0].mxu0
    %200 = vdwg.mxu0
    %v201 = vmul.f32 %v183, 0.17677669
    %v202 = vmul.f32 %v188, 0.17677669
    %v203 = vmul.f32 %v193, 0.17677669
    %v204 = vmul.f32 %v198, 0.17677669
    %209 = vrot.lane.b32.xlu0 %v201, 120
    %v210 = vpop.permute.xlu0 %209
    %211 = vrot.lane.b32.xlu0 %v202, 120
    %v212 = vpop.permute.xlu0 %211
    %213 = vrot.lane.b32.xlu0 %v203, 120
    %v214 = vpop.permute.xlu0 %213
    %215 = vrot.lane.b32.xlu0 %v204, 120
    %v216 = vpop.permute.xlu0 %215
    %217 = vrot.lane.b32.xlu0 %v201, 112
    %v218 = vpop.permute.xlu0 %217
    %219 = vrot.lane.b32.xlu0 %v202, 112
    %v220 = vpop.permute.xlu0 %219
    %221 = vrot.lane.b32.xlu0 %v203, 112
    %v222 = vpop.permute.xlu0 %221
    %223 = vrot.lane.b32.xlu0 %v204, 112
    %v224 = vpop.permute.xlu0 %223
    %225 = vrot.lane.b32.xlu0 %v201, 104
    %v226 = vpop.permute.xlu0 %225
    %227 = vrot.lane.b32.xlu0 %v202, 104
    %v228 = vpop.permute.xlu0 %227
    %229 = vrot.lane.b32.xlu0 %v203, 104
    %v230 = vpop.permute.xlu0 %229
    %231 = vrot.lane.b32.xlu0 %v204, 104
    %v232 = vpop.permute.xlu0 %231
    %237 = vrot.lane.b32.xlu0 %v183, 120
    %v238 = vpop.permute.xlu0 %237
    %239 = vrot.lane.b32.xlu0 %v188, 120
    %v240 = vpop.permute.xlu0 %239
    %241 = vrot.lane.b32.xlu0 %v193, 120
    %v242 = vpop.permute.xlu0 %241
    %243 = vrot.lane.b32.xlu0 %v198, 120
    %v244 = vpop.permute.xlu0 %243
    %245 = vrot.lane.b32.xlu0 %v183, 112
    %v246 = vpop.permute.xlu0 %245
    %247 = vrot.lane.b32.xlu0 %v188, 112
    %v248 = vpop.permute.xlu0 %247
    %249 = vrot.lane.b32.xlu0 %v193, 112
    %v250 = vpop.permute.xlu0 %249
    %251 = vrot.lane.b32.xlu0 %v198, 112
    %v252 = vpop.permute.xlu0 %251
    %253 = vrot.lane.b32.xlu0 %v183, 104
    %v254 = vpop.permute.xlu0 %253
    %255 = vrot.lane.b32.xlu0 %v188, 104
    %v256 = vpop.permute.xlu0 %255
    %257 = vrot.lane.b32.xlu0 %v193, 104
    %v258 = vpop.permute.xlu0 %257
    %259 = vrot.lane.b32.xlu0 %v198, 104
    %v260 = vpop.permute.xlu0 %259
    %v261 = vld [vmem:[#allocation5] sm:$0xff]
    %v262 = vld [vmem:[#allocation5 + $0x8] sm:$0xff]
    %v263 = vld [vmem:[#allocation5 + $0x10] sm:$0xff]
    %v264 = vld [vmem:[#allocation5 + $0x18] sm:$0xff]
    %265 = vrot.lane.b32.xlu0 %v183, 96
    %v266 = vpop.permute.xlu0 %265
    %vm267 = vcmask 64512
    %v268 = vsel %vm267, %v201, 0
    %v270 = vsel %vm267, %v266, 0
    %272 = vmatprep.subr.mxu0 0.0
    %273 = vmatpush1.xpose.msra.mxu0 %v270
    %274 = vmatprep.subr.mxu0 0.0
    %275 = vmatpush1.xpose.msra.mxu0 0.0
    %276 = vmatprep.subr.mxu0 0.0
    %277 = vmatpush1.xpose.msra.mxu0 0.0
    %278 = vmatprep.subr.mxu0 0.0
    %279 = vmatpush1.xpose.msra.mxu0 0.0
    %280 = vmatprep.subr.mxu0 0.0
    %281 = vmatpush1.xpose.msra.mxu0 0.0
    %282 = vmatprep.subr.mxu0 0.0
    %283 = vmatpush1.xpose.msra.mxu0 0.0
    %284 = vmatprep.subr.mxu0 0.0
    %285 = vmatpush1.xpose.msra.mxu0 0.0
    %286 = vmatprep.subr.mxu0 0.0
    %287 = vmatpush1.xpose.msra.mxu0 0.0
    %288 = vmatprep.subr.mxu0 0.0
    %289 = vmatpush1.xpose.msra.mxu0 0.0
    %290 = vmatprep.subr.mxu0 0.0
    %291 = vmatpush1.xpose.msra.mxu0 0.0
    %292 = vmatprep.subr.mxu0 0.0
    %293 = vmatpush1.xpose.msra.mxu0 0.0
    %294 = vmatprep.subr.mxu0 0.0
    %295 = vmatpush1.xpose.msra.mxu0 0.0
    %296 = vmatprep.subr.mxu0 0.0
    %297 = vmatpush1.xpose.msra.mxu0 0.0
    %298 = vmatprep.subr.mxu0 0.0
    %299 = vmatpush1.xpose.msra.mxu0 0.0
    %300 = vmatprep.subr.mxu0 0.0
    %301 = vmatpush1.xpose.msra.mxu0 0.0
    %302 = vmatprep.subr.mxu0 0.0
    %303 = vmatpush1.xpose.msra.mxu0 0.0
    %304 = vmatprep.subr.mxu0 0.0
    %305 = vmatpush1.xpose.msra.mxu0 0.0
    %306 = vmatprep.subr.mxu0 0.0
    %307 = vmatpush1.xpose.msra.mxu0 0.0
    %308 = vmatprep.subr.mxu0 0.0
    %309 = vmatpush1.xpose.msra.mxu0 0.0
    %310 = vmatprep.subr.mxu0 0.0
    %311 = vmatpush1.xpose.msra.mxu0 0.0
    %312 = vmatprep.subr.mxu0 0.0
    %313 = vmatpush1.xpose.msra.mxu0 0.0
    %314 = vmatprep.subr.mxu0 0.0
    %315 = vmatpush1.xpose.msra.mxu0 0.0
    %316 = vmatprep.subr.mxu0 0.0
    %317 = vmatpush1.xpose.msra.mxu0 0.0
    %318 = vmatprep.subr.mxu0 0.0
    %319 = vmatpush1.xpose.msra.mxu0 0.0
    %320 = vmatprep.subr.mxu0 0.0
    %321 = vmatpush1.xpose.msra.mxu0 0.0
    %322 = vmatprep.subr.mxu0 0.0
    %323 = vmatpush1.xpose.msra.mxu0 0.0
    %324 = vmatprep.subr.mxu0 0.0
    %325 = vmatpush1.xpose.msra.mxu0 0.0
    %326 = vmatprep.subr.mxu0 0.0
    %327 = vmatpush1.xpose.msra.mxu0 0.0
    %328 = vmatprep.subr.mxu0 0.0
    %329 = vmatpush1.xpose.msra.mxu0 0.0
    %330 = vmatprep.subr.mxu0 0.0
    %331 = vmatpush1.xpose.msra.mxu0 0.0
    %332 = vmatprep.subr.mxu0 0.0
    %333 = vmatpush1.xpose.msra.mxu0 0.0
    %334 = vmatprep.subr.mxu0 0.0
    %335 = vmatpush1.xpose.msra.mxu0 0.0
    %336 = vmatprep.mubr.f32.mxu0 0.0
    %337 = vmatmul.mubr.f32.gmra.mrb[0].mxu0 %v268
    %v338 = vpop.f32.mrb[0].mxu0
    %v339 = vadd.f32 %v261, %v338
    %v340 = vpop.f32.mrb[0].mxu0
    %341 = vdwg.mxu0
    %342 = vrot.lane.b32.xlu0 %v188, 96
    %v343 = vpop.permute.xlu0 %342
    %v344 = vsel %vm267, %v202, 0
    %v346 = vsel %vm267, %v343, 0
    %348 = vmatprep.subr.mxu0 0.0
    %349 = vmatpush1.xpose.msra.mxu0 %v346
    %350 = vmatprep.subr.mxu0 0.0
    %351 = vmatpush1.xpose.msra.mxu0 0.0
    %352 = vmatprep.subr.mxu0 0.0
    %353 = vmatpush1.xpose.msra.mxu0 0.0
    %354 = vmatprep.subr.mxu0 0.0
    %355 = vmatpush1.xpose.msra.mxu0 0.0
    %356 = vmatprep.subr.mxu0 0.0
    %357 = vmatpush1.xpose.msra.mxu0 0.0
    %358 = vmatprep.subr.mxu0 0.0
    %359 = vmatpush1.xpose.msra.mxu0 0.0
    %360 = vmatprep.subr.mxu0 0.0
    %361 = vmatpush1.xpose.msra.mxu0 0.0
    %362 = vmatprep.subr.mxu0 0.0
    %363 = vmatpush1.xpose.msra.mxu0 0.0
    %364 = vmatprep.subr.mxu0 0.0
    %365 = vmatpush1.xpose.msra.mxu0 0.0
    %366 = vmatprep.subr.mxu0 0.0
    %367 = vmatpush1.xpose.msra.mxu0 0.0
    %368 = vmatprep.subr.mxu0 0.0
    %369 = vmatpush1.xpose.msra.mxu0 0.0
    %370 = vmatprep.subr.mxu0 0.0
    %371 = vmatpush1.xpose.msra.mxu0 0.0
    %372 = vmatprep.subr.mxu0 0.0
    %373 = vmatpush1.xpose.msra.mxu0 0.0
    %374 = vmatprep.subr.mxu0 0.0
    %375 = vmatpush1.xpose.msra.mxu0 0.0
    %376 = vmatprep.subr.mxu0 0.0
    %377 = vmatpush1.xpose.msra.mxu0 0.0
    %378 = vmatprep.subr.mxu0 0.0
    %379 = vmatpush1.xpose.msra.mxu0 0.0
    %380 = vmatprep.subr.mxu0 0.0
    %381 = vmatpush1.xpose.msra.mxu0 0.0
    %382 = vmatprep.subr.mxu0 0.0
    %383 = vmatpush1.xpose.msra.mxu0 0.0
    %384 = vmatprep.subr.mxu0 0.0
    %385 = vmatpush1.xpose.msra.mxu0 0.0
    %386 = vmatprep.subr.mxu0 0.0
    %387 = vmatpush1.xpose.msra.mxu0 0.0
    %388 = vmatprep.subr.mxu0 0.0
    %389 = vmatpush1.xpose.msra.mxu0 0.0
    %390 = vmatprep.subr.mxu0 0.0
    %391 = vmatpush1.xpose.msra.mxu0 0.0
    %392 = vmatprep.subr.mxu0 0.0
    %393 = vmatpush1.xpose.msra.mxu0 0.0
    %394 = vmatprep.subr.mxu0 0.0
    %395 = vmatpush1.xpose.msra.mxu0 0.0
    %396 = vmatprep.subr.mxu0 0.0
    %397 = vmatpush1.xpose.msra.mxu0 0.0
    %398 = vmatprep.subr.mxu0 0.0
    %399 = vmatpush1.xpose.msra.mxu0 0.0
    %400 = vmatprep.subr.mxu0 0.0
    %401 = vmatpush1.xpose.msra.mxu0 0.0
    %402 = vmatprep.subr.mxu0 0.0
    %403 = vmatpush1.xpose.msra.mxu0 0.0
    %404 = vmatprep.subr.mxu0 0.0
    %405 = vmatpush1.xpose.msra.mxu0 0.0
    %406 = vmatprep.subr.mxu0 0.0
    %407 = vmatpush1.xpose.msra.mxu0 0.0
    %408 = vmatprep.subr.mxu0 0.0
    %409 = vmatpush1.xpose.msra.mxu0 0.0
    %410 = vmatprep.subr.mxu0 0.0
    %411 = vmatpush1.xpose.msra.mxu0 0.0
    %412 = vmatprep.mubr.f32.mxu0 0.0
    %413 = vmatmul.mubr.f32.gmra.mrb[0].mxu0 %v344
    %v414 = vpop.f32.mrb[0].mxu0
    %v415 = vadd.f32 %v262, %v414
    %v416 = vpop.f32.mrb[0].mxu0
    %417 = vdwg.mxu0
    %418 = vrot.lane.b32.xlu0 %v193, 96
    %v419 = vpop.permute.xlu0 %418
    %v420 = vsel %vm267, %v203, 0
    %v422 = vsel %vm267, %v419, 0
    %424 = vmatprep.subr.mxu0 0.0
    %425 = vmatpush1.xpose.msra.mxu0 %v422
    %426 = vmatprep.subr.mxu0 0.0
    %427 = vmatpush1.xpose.msra.mxu0 0.0
    %428 = vmatprep.subr.mxu0 0.0
    %429 = vmatpush1.xpose.msra.mxu0 0.0
    %430 = vmatprep.subr.mxu0 0.0
    %431 = vmatpush1.xpose.msra.mxu0 0.0
    %432 = vmatprep.subr.mxu0 0.0
    %433 = vmatpush1.xpose.msra.mxu0 0.0
    %434 = vmatprep.subr.mxu0 0.0
    %435 = vmatpush1.xpose.msra.mxu0 0.0
    %436 = vmatprep.subr.mxu0 0.0
    %437 = vmatpush1.xpose.msra.mxu0 0.0
    %438 = vmatprep.subr.mxu0 0.0
    %439 = vmatpush1.xpose.msra.mxu0 0.0
    %440 = vmatprep.subr.mxu0 0.0
    %441 = vmatpush1.xpose.msra.mxu0 0.0
    %442 = vmatprep.subr.mxu0 0.0
    %443 = vmatpush1.xpose.msra.mxu0 0.0
    %444 = vmatprep.subr.mxu0 0.0
    %445 = vmatpush1.xpose.msra.mxu0 0.0
    %446 = vmatprep.subr.mxu0 0.0
    %447 = vmatpush1.xpose.msra.mxu0 0.0
    %448 = vmatprep.subr.mxu0 0.0
    %449 = vmatpush1.xpose.msra.mxu0 0.0
    %450 = vmatprep.subr.mxu0 0.0
    %451 = vmatpush1.xpose.msra.mxu0 0.0
    %452 = vmatprep.subr.mxu0 0.0
    %453 = vmatpush1.xpose.msra.mxu0 0.0
    %454 = vmatprep.subr.mxu0 0.0
    %455 = vmatpush1.xpose.msra.mxu0 0.0
    %456 = vmatprep.subr.mxu0 0.0
    %457 = vmatpush1.xpose.msra.mxu0 0.0
    %458 = vmatprep.subr.mxu0 0.0
    %459 = vmatpush1.xpose.msra.mxu0 0.0
    %460 = vmatprep.subr.mxu0 0.0
    %461 = vmatpush1.xpose.msra.mxu0 0.0
    %462 = vmatprep.subr.mxu0 0.0
    %463 = vmatpush1.xpose.msra.mxu0 0.0
    %464 = vmatprep.subr.mxu0 0.0
    %465 = vmatpush1.xpose.msra.mxu0 0.0
    %466 = vmatprep.subr.mxu0 0.0
    %467 = vmatpush1.xpose.msra.mxu0 0.0
    %468 = vmatprep.subr.mxu0 0.0
    %469 = vmatpush1.xpose.msra.mxu0 0.0
    %470 = vmatprep.subr.mxu0 0.0
    %471 = vmatpush1.xpose.msra.mxu0 0.0
    %472 = vmatprep.subr.mxu0 0.0
    %473 = vmatpush1.xpose.msra.mxu0 0.0
    %474 = vmatprep.subr.mxu0 0.0
    %475 = vmatpush1.xpose.msra.mxu0 0.0
    %476 = vmatprep.subr.mxu0 0.0
    %477 = vmatpush1.xpose.msra.mxu0 0.0
    %478 = vmatprep.subr.mxu0 0.0
    %479 = vmatpush1.xpose.msra.mxu0 0.0
    %480 = vmatprep.subr.mxu0 0.0
    %481 = vmatpush1.xpose.msra.mxu0 0.0
    %482 = vmatprep.subr.mxu0 0.0
    %483 = vmatpush1.xpose.msra.mxu0 0.0
    %484 = vmatprep.subr.mxu0 0.0
    %485 = vmatpush1.xpose.msra.mxu0 0.0
    %486 = vmatprep.subr.mxu0 0.0
    %487 = vmatpush1.xpose.msra.mxu0 0.0
    %488 = vmatprep.mubr.f32.mxu0 0.0
    %489 = vmatmul.mubr.f32.gmra.mrb[0].mxu0 %v420
    %v490 = vpop.f32.mrb[0].mxu0
    %v491 = vadd.f32 %v263, %v490
    %v492 = vpop.f32.mrb[0].mxu0
    %493 = vdwg.mxu0
    %494 = vrot.lane.b32.xlu0 %v198, 96
    %v495 = vpop.permute.xlu0 %494
    %v496 = vsel %vm267, %v204, 0
    %v498 = vsel %vm267, %v495, 0
    %500 = vmatprep.subr.mxu0 0.0
    %501 = vmatpush1.xpose.msra.mxu0 %v498
    %502 = vmatprep.subr.mxu0 0.0
    %503 = vmatpush1.xpose.msra.mxu0 0.0
    %504 = vmatprep.subr.mxu0 0.0
    %505 = vmatpush1.xpose.msra.mxu0 0.0
    %506 = vmatprep.subr.mxu0 0.0
    %507 = vmatpush1.xpose.msra.mxu0 0.0
    %508 = vmatprep.subr.mxu0 0.0
    %509 = vmatpush1.xpose.msra.mxu0 0.0
    %510 = vmatprep.subr.mxu0 0.0
    %511 = vmatpush1.xpose.msra.mxu0 0.0
    %512 = vmatprep.subr.mxu0 0.0
    %513 = vmatpush1.xpose.msra.mxu0 0.0
    %514 = vmatprep.subr.mxu0 0.0
    %515 = vmatpush1.xpose.msra.mxu0 0.0
    %516 = vmatprep.subr.mxu0 0.0
    %517 = vmatpush1.xpose.msra.mxu0 0.0
    %518 = vmatprep.subr.mxu0 0.0
    %519 = vmatpush1.xpose.msra.mxu0 0.0
    %520 = vmatprep.subr.mxu0 0.0
    %521 = vmatpush1.xpose.msra.mxu0 0.0
    %522 = vmatprep.subr.mxu0 0.0
    %523 = vmatpush1.xpose.msra.mxu0 0.0
    %524 = vmatprep.subr.mxu0 0.0
    %525 = vmatpush1.xpose.msra.mxu0 0.0
    %526 = vmatprep.subr.mxu0 0.0
    %527 = vmatpush1.xpose.msra.mxu0 0.0
    %528 = vmatprep.subr.mxu0 0.0
    %529 = vmatpush1.xpose.msra.mxu0 0.0
    %530 = vmatprep.subr.mxu0 0.0
    %531 = vmatpush1.xpose.msra.mxu0 0.0
    %532 = vmatprep.subr.mxu0 0.0
    %533 = vmatpush1.xpose.msra.mxu0 0.0
    %534 = vmatprep.subr.mxu0 0.0
    %535 = vmatpush1.xpose.msra.mxu0 0.0
    %536 = vmatprep.subr.mxu0 0.0
    %537 = vmatpush1.xpose.msra.mxu0 0.0
    %538 = vmatprep.subr.mxu0 0.0
    %539 = vmatpush1.xpose.msra.mxu0 0.0
    %540 = vmatprep.subr.mxu0 0.0
    %541 = vmatpush1.xpose.msra.mxu0 0.0
    %542 = vmatprep.subr.mxu0 0.0
    %543 = vmatpush1.xpose.msra.mxu0 0.0
    %544 = vmatprep.subr.mxu0 0.0
    %545 = vmatpush1.xpose.msra.mxu0 0.0
    %546 = vmatprep.subr.mxu0 0.0
    %547 = vmatpush1.xpose.msra.mxu0 0.0
    %548 = vmatprep.subr.mxu0 0.0
    %549 = vmatpush1.xpose.msra.mxu0 0.0
    %550 = vmatprep.subr.mxu0 0.0
    %551 = vmatpush1.xpose.msra.mxu0 0.0
    %552 = vmatprep.subr.mxu0 0.0
    %553 = vmatpush1.xpose.msra.mxu0 0.0
    %554 = vmatprep.subr.mxu0 0.0
    %555 = vmatpush1.xpose.msra.mxu0 0.0
    %556 = vmatprep.subr.mxu0 0.0
    %557 = vmatpush1.xpose.msra.mxu0 0.0
    %558 = vmatprep.subr.mxu0 0.0
    %559 = vmatpush1.xpose.msra.mxu0 0.0
    %560 = vmatprep.subr.mxu0 0.0
    %561 = vmatpush1.xpose.msra.mxu0 0.0
    %562 = vmatprep.subr.mxu0 0.0
    %563 = vmatpush1.xpose.msra.mxu0 0.0
    %564 = vmatprep.mubr.f32.mxu0 0.0
    %565 = vmatmul.mubr.f32.gmra.mrb[0].mxu0 %v496
    %v566 = vpop.f32.mrb[0].mxu0
    %v567 = vadd.f32 %v264, %v566
    %v568 = vpop.f32.mrb[0].mxu0
    %569 = vdwg.mxu0
    %570 = vrot.lane.b32.xlu0 %v238, 96
    %v571 = vpop.permute.xlu0 %570
    %v572 = vsel %vm267, %v210, 0
    %v574 = vsel %vm267, %v571, 0
    %576 = vmatprep.subr.mxu0 0.0
    %577 = vmatpush1.xpose.msra.mxu0 %v574
    %578 = vmatprep.subr.mxu0 0.0
    %579 = vmatpush1.xpose.msra.mxu0 0.0
    %580 = vmatprep.subr.mxu0 0.0
    %581 = vmatpush1.xpose.msra.mxu0 0.0
    %582 = vmatprep.subr.mxu0 0.0
    %583 = vmatpush1.xpose.msra.mxu0 0.0
    %584 = vmatprep.subr.mxu0 0.0
    %585 = vmatpush1.xpose.msra.mxu0 0.0
    %586 = vmatprep.subr.mxu0 0.0
    %587 = vmatpush1.xpose.msra.mxu0 0.0
    %588 = vmatprep.subr.mxu0 0.0
    %589 = vmatpush1.xpose.msra.mxu0 0.0
    %590 = vmatprep.subr.mxu0 0.0
    %591 = vmatpush1.xpose.msra.mxu0 0.0
    %592 = vmatprep.subr.mxu0 0.0
    %593 = vmatpush1.xpose.msra.mxu0 0.0
    %594 = vmatprep.subr.mxu0 0.0
    %595 = vmatpush1.xpose.msra.mxu0 0.0
    %596 = vmatprep.subr.mxu0 0.0
    %597 = vmatpush1.xpose.msra.mxu0 0.0
    %598 = vmatprep.subr.mxu0 0.0
    %599 = vmatpush1.xpose.msra.mxu0 0.0
    %600 = vmatprep.subr.mxu0 0.0
    %601 = vmatpush1.xpose.msra.mxu0 0.0
    %602 = vmatprep.subr.mxu0 0.0
    %603 = vmatpush1.xpose.msra.mxu0 0.0
    %604 = vmatprep.subr.mxu0 0.0
    %605 = vmatpush1.xpose.msra.mxu0 0.0
    %606 = vmatprep.subr.mxu0 0.0
    %607 = vmatpush1.xpose.msra.mxu0 0.0
    %608 = vmatprep.subr.mxu0 0.0
    %609 = vmatpush1.xpose.msra.mxu0 0.0
    %610 = vmatprep.subr.mxu0 0.0
    %611 = vmatpush1.xpose.msra.mxu0 0.0
    %612 = vmatprep.subr.mxu0 0.0
    %613 = vmatpush1.xpose.msra.mxu0 0.0
    %614 = vmatprep.subr.mxu0 0.0
    %615 = vmatpush1.xpose.msra.mxu0 0.0
    %616 = vmatprep.subr.mxu0 0.0
    %617 = vmatpush1.xpose.msra.mxu0 0.0
    %618 = vmatprep.subr.mxu0 0.0
    %619 = vmatpush1.xpose.msra.mxu0 0.0
    %620 = vmatprep.subr.mxu0 0.0
    %621 = vmatpush1.xpose.msra.mxu0 0.0
    %622 = vmatprep.subr.mxu0 0.0
    %623 = vmatpush1.xpose.msra.mxu0 0.0
    %624 = vmatprep.subr.mxu0 0.0
    %625 = vmatpush1.xpose.msra.mxu0 0.0
    %626 = vmatprep.subr.mxu0 0.0
    %627 = vmatpush1.xpose.msra.mxu0 0.0
    %628 = vmatprep.subr.mxu0 0.0
    %629 = vmatpush1.xpose.msra.mxu0 0.0
    %630 = vmatprep.subr.mxu0 0.0
    %631 = vmatpush1.xpose.msra.mxu0 0.0
    %632 = vmatprep.subr.mxu0 0.0
    %633 = vmatpush1.xpose.msra.mxu0 0.0
    %634 = vmatprep.subr.mxu0 0.0
    %635 = vmatpush1.xpose.msra.mxu0 0.0
    %636 = vmatprep.subr.mxu0 0.0
    %637 = vmatpush1.xpose.msra.mxu0 0.0
    %638 = vmatprep.subr.mxu0 0.0
    %639 = vmatpush1.xpose.msra.mxu0 0.0
    %640 = vmatprep.mubr.f32.mxu0 0.0
    %641 = vmatmul.mubr.f32.gmra.mrb[0].mxu0 %v572
    %v642 = vpop.f32.mrb[0].mxu0
    %v643 = vadd.f32 %v261, %v642
    %v644 = vpop.f32.mrb[0].mxu0
    %645 = vdwg.mxu0
    %646 = vrot.lane.b32.xlu0 %v240, 96
    %v647 = vpop.permute.xlu0 %646
    %v648 = vsel %vm267, %v212, 0
    %v650 = vsel %vm267, %v647, 0
    %652 = vmatprep.subr.mxu0 0.0
    %653 = vmatpush1.xpose.msra.mxu0 %v650
    %654 = vmatprep.subr.mxu0 0.0
    %655 = vmatpush1.xpose.msra.mxu0 0.0
    %656 = vmatprep.subr.mxu0 0.0
    %657 = vmatpush1.xpose.msra.mxu0 0.0
    %658 = vmatprep.subr.mxu0 0.0
    %659 = vmatpush1.xpose.msra.mxu0 0.0
    %660 = vmatprep.subr.mxu0 0.0
    %661 = vmatpush1.xpose.msra.mxu0 0.0
    %662 = vmatprep.subr.mxu0 0.0
    %663 = vmatpush1.xpose.msra.mxu0 0.0
    %664 = vmatprep.subr.mxu0 0.0
    %665 = vmatpush1.xpose.msra.mxu0 0.0
    %666 = vmatprep.subr.mxu0 0.0
    %667 = vmatpush1.xpose.msra.mxu0 0.0
    %668 = vmatprep.subr.mxu0 0.0
    %669 = vmatpush1.xpose.msra.mxu0 0.0
    %670 = vmatprep.subr.mxu0 0.0
    %671 = vmatpush1.xpose.msra.mxu0 0.0
    %672 = vmatprep.subr.mxu0 0.0
    %673 = vmatpush1.xpose.msra.mxu0 0.0
    %674 = vmatprep.subr.mxu0 0.0
    %675 = vmatpush1.xpose.msra.mxu0 0.0
    %676 = vmatprep.subr.mxu0 0.0
    %677 = vmatpush1.xpose.msra.mxu0 0.0
    %678 = vmatprep.subr.mxu0 0.0
    %679 = vmatpush1.xpose.msra.mxu0 0.0
    %680 = vmatprep.subr.mxu0 0.0
    %681 = vmatpush1.xpose.msra.mxu0 0.0
    %682 = vmatprep.subr.mxu0 0.0
    %683 = vmatpush1.xpose.msra.mxu0 0.0
    %684 = vmatprep.subr.mxu0 0.0
    %685 = vmatpush1.xpose.msra.mxu0 0.0
    %686 = vmatprep.subr.mxu0 0.0
    %687 = vmatpush1.xpose.msra.mxu0 0.0
    %688 = vmatprep.subr.mxu0 0.0
    %689 = vmatpush1.xpose.msra.mxu0 0.0
    %690 = vmatprep.subr.mxu0 0.0
    %691 = vmatpush1.xpose.msra.mxu0 0.0
    %692 = vmatprep.subr.mxu0 0.0
    %693 = vmatpush1.xpose.msra.mxu0 0.0
    %694 = vmatprep.subr.mxu0 0.0
    %695 = vmatpush1.xpose.msra.mxu0 0.0
    %696 = vmatprep.subr.mxu0 0.0
    %697 = vmatpush1.xpose.msra.mxu0 0.0
    %698 = vmatprep.subr.mxu0 0.0
    %699 = vmatpush1.xpose.msra.mxu0 0.0
    %700 = vmatprep.subr.mxu0 0.0
    %701 = vmatpush1.xpose.msra.mxu0 0.0
    %702 = vmatprep.subr.mxu0 0.0
    %703 = vmatpush1.xpose.msra.mxu0 0.0
    %704 = vmatprep.subr.mxu0 0.0
    %705 = vmatpush1.xpose.msra.mxu0 0.0
    %706 = vmatprep.subr.mxu0 0.0
    %707 = vmatpush1.xpose.msra.mxu0 0.0
    %708 = vmatprep.subr.mxu0 0.0
    %709 = vmatpush1.xpose.msra.mxu0 0.0
    %710 = vmatprep.subr.mxu0 0.0
    %711 = vmatpush1.xpose.msra.mxu0 0.0
    %712 = vmatprep.subr.mxu0 0.0
    %713 = vmatpush1.xpose.msra.mxu0 0.0
    %714 = vmatprep.subr.mxu0 0.0
    %715 = vmatpush1.xpose.msra.mxu0 0.0
    %716 = vmatprep.mubr.f32.mxu0 0.0
    %717 = vmatmul.mubr.f32.gmra.mrb[0].mxu0 %v648
    %v718 = vpop.f32.mrb[0].mxu0
    %v719 = vadd.f32 %v262, %v718
    %v720 = vpop.f32.mrb[0].mxu0
    %721 = vdwg.mxu0
    %722 = vrot.lane.b32.xlu0 %v242, 96
    %v723 = vpop.permute.xlu0 %722
    %v724 = vsel %vm267, %v214, 0
    %v726 = vsel %vm267, %v723, 0
    %728 = vmatprep.subr.mxu0 0.0
    %729 = vmatpush1.xpose.msra.mxu0 %v726
    %730 = vmatprep.subr.mxu0 0.0
    %731 = vmatpush1.xpose.msra.mxu0 0.0
    %732 = vmatprep.subr.mxu0 0.0
    %733 = vmatpush1.xpose.msra.mxu0 0.0
    %734 = vmatprep.subr.mxu0 0.0
    %735 = vmatpush1.xpose.msra.mxu0 0.0
    %736 = vmatprep.subr.mxu0 0.0
    %737 = vmatpush1.xpose.msra.mxu0 0.0
    %738 = vmatprep.subr.mxu0 0.0
    %739 = vmatpush1.xpose.msra.mxu0 0.0
    %740 = vmatprep.subr.mxu0 0.0
    %741 = vmatpush1.xpose.msra.mxu0 0.0
    %742 = vmatprep.subr.mxu0 0.0
    %743 = vmatpush1.xpose.msra.mxu0 0.0
    %744 = vmatprep.subr.mxu0 0.0
    %745 = vmatpush1.xpose.msra.mxu0 0.0
    %746 = vmatprep.subr.mxu0 0.0
    %747 = vmatpush1.xpose.msra.mxu0 0.0
    %748 = vmatprep.subr.mxu0 0.0
    %749 = vmatpush1.xpose.msra.mxu0 0.0
    %750 = vmatprep.subr.mxu0 0.0
    %751 = vmatpush1.xpose.msra.mxu0 0.0
    %752 = vmatprep.subr.mxu0 0.0
    %753 = vmatpush1.xpose.msra.mxu0 0.0
    %754 = vmatprep.subr.mxu0 0.0
    %755 = vmatpush1.xpose.msra.mxu0 0.0
    %756 = vmatprep.subr.mxu0 0.0
    %757 = vmatpush1.xpose.msra.mxu0 0.0
    %758 = vmatprep.subr.mxu0 0.0
    %759 = vmatpush1.xpose.msra.mxu0 0.0
    %760 = vmatprep.subr.mxu0 0.0
    %761 = vmatpush1.xpose.msra.mxu0 0.0
    %762 = vmatprep.subr.mxu0 0.0
    %763 = vmatpush1.xpose.msra.mxu0 0.0
    %764 = vmatprep.subr.mxu0 0.0
    %765 = vmatpush1.xpose.msra.mxu0 0.0
    %766 = vmatprep.subr.mxu0 0.0
    %767 = vmatpush1.xpose.msra.mxu0 0.0
    %768 = vmatprep.subr.mxu0 0.0
    %769 = vmatpush1.xpose.msra.mxu0 0.0
    %770 = vmatprep.subr.mxu0 0.0
    %771 = vmatpush1.xpose.msra.mxu0 0.0
    %772 = vmatprep.subr.mxu0 0.0
    %773 = vmatpush1.xpose.msra.mxu0 0.0
    %774 = vmatprep.subr.mxu0 0.0
    %775 = vmatpush1.xpose.msra.mxu0 0.0
    %776 = vmatprep.subr.mxu0 0.0
    %777 = vmatpush1.xpose.msra.mxu0 0.0
    %778 = vmatprep.subr.mxu0 0.0
    %779 = vmatpush1.xpose.msra.mxu0 0.0
    %780 = vmatprep.subr.mxu0 0.0
    %781 = vmatpush1.xpose.msra.mxu0 0.0
    %782 = vmatprep.subr.mxu0 0.0
    %783 = vmatpush1.xpose.msra.mxu0 0.0
    %784 = vmatprep.subr.mxu0 0.0
    %785 = vmatpush1.xpose.msra.mxu0 0.0
    %786 = vmatprep.subr.mxu0 0.0
    %787 = vmatpush1.xpose.msra.mxu0 0.0
    %788 = vmatprep.subr.mxu0 0.0
    %789 = vmatpush1.xpose.msra.mxu0 0.0
    %790 = vmatprep.subr.mxu0 0.0
    %791 = vmatpush1.xpose.msra.mxu0 0.0
    %792 = vmatprep.mubr.f32.mxu0 0.0
    %793 = vmatmul.mubr.f32.gmra.mrb[0].mxu0 %v724
    %v794 = vpop.f32.mrb[0].mxu0
    %v795 = vadd.f32 %v263, %v794
    %v796 = vpop.f32.mrb[0].mxu0
    %797 = vdwg.mxu0
    %798 = vrot.lane.b32.xlu0 %v244, 96
    %v799 = vpop.permute.xlu0 %798
    %v800 = vsel %vm267, %v216, 0
    %v802 = vsel %vm267, %v799, 0
    %804 = vmatprep.subr.mxu0 0.0
    %805 = vmatpush1.xpose.msra.mxu0 %v802
    %806 = vmatprep.subr.mxu0 0.0
    %807 = vmatpush1.xpose.msra.mxu0 0.0
    %808 = vmatprep.subr.mxu0 0.0
    %809 = vmatpush1.xpose.msra.mxu0 0.0
    %810 = vmatprep.subr.mxu0 0.0
    %811 = vmatpush1.xpose.msra.mxu0 0.0
    %812 = vmatprep.subr.mxu0 0.0
    %813 = vmatpush1.xpose.msra.mxu0 0.0
    %814 = vmatprep.subr.mxu0 0.0
    %815 = vmatpush1.xpose.msra.mxu0 0.0
    %816 = vmatprep.subr.mxu0 0.0
    %817 = vmatpush1.xpose.msra.mxu0 0.0
    %818 = vmatprep.subr.mxu0 0.0
    %819 = vmatpush1.xpose.msra.mxu0 0.0
    %820 = vmatprep.subr.mxu0 0.0
    %821 = vmatpush1.xpose.msra.mxu0 0.0
    %822 = vmatprep.subr.mxu0 0.0
    %823 = vmatpush1.xpose.msra.mxu0 0.0
    %824 = vmatprep.subr.mxu0 0.0
    %825 = vmatpush1.xpose.msra.mxu0 0.0
    %826 = vmatprep.subr.mxu0 0.0
    %827 = vmatpush1.xpose.msra.mxu0 0.0
    %828 = vmatprep.subr.mxu0 0.0
    %829 = vmatpush1.xpose.msra.mxu0 0.0
    %830 = vmatprep.subr.mxu0 0.0
    %831 = vmatpush1.xpose.msra.mxu0 0.0
    %832 = vmatprep.subr.mxu0 0.0
    %833 = vmatpush1.xpose.msra.mxu0 0.0
    %834 = vmatprep.subr.mxu0 0.0
    %835 = vmatpush1.xpose.msra.mxu0 0.0
    %836 = vmatprep.subr.mxu0 0.0
    %837 = vmatpush1.xpose.msra.mxu0 0.0
    %838 = vmatprep.subr.mxu0 0.0
    %839 = vmatpush1.xpose.msra.mxu0 0.0
    %840 = vmatprep.subr.mxu0 0.0
    %841 = vmatpush1.xpose.msra.mxu0 0.0
    %842 = vmatprep.subr.mxu0 0.0
    %843 = vmatpush1.xpose.msra.mxu0 0.0
    %844 = vmatprep.subr.mxu0 0.0
    %845 = vmatpush1.xpose.msra.mxu0 0.0
    %846 = vmatprep.subr.mxu0 0.0
    %847 = vmatpush1.xpose.msra.mxu0 0.0
    %848 = vmatprep.subr.mxu0 0.0
    %849 = vmatpush1.xpose.msra.mxu0 0.0
    %850 = vmatprep.subr.mxu0 0.0
    %851 = vmatpush1.xpose.msra.mxu0 0.0
    %852 = vmatprep.subr.mxu0 0.0
    %853 = vmatpush1.xpose.msra.mxu0 0.0
    %854 = vmatprep.subr.mxu0 0.0
    %855 = vmatpush1.xpose.msra.mxu0 0.0
    %856 = vmatprep.subr.mxu0 0.0
    %857 = vmatpush1.xpose.msra.mxu0 0.0
    %858 = vmatprep.subr.mxu0 0.0
    %859 = vmatpush1.xpose.msra.mxu0 0.0
    %860 = vmatprep.subr.mxu0 0.0
    %861 = vmatpush1.xpose.msra.mxu0 0.0
    %862 = vmatprep.subr.mxu0 0.0
    %863 = vmatpush1.xpose.msra.mxu0 0.0
    %864 = vmatprep.subr.mxu0 0.0
    %865 = vmatpush1.xpose.msra.mxu0 0.0
    %866 = vmatprep.subr.mxu0 0.0
    %867 = vmatpush1.xpose.msra.mxu0 0.0
    %868 = vmatprep.mubr.f32.mxu0 0.0
    %869 = vmatmul.mubr.f32.gmra.mrb[0].mxu0 %v800
    %v870 = vpop.f32.mrb[0].mxu0
    %v871 = vadd.f32 %v264, %v870
    %v872 = vpop.f32.mrb[0].mxu0
    %873 = vdwg.mxu0
    %874 = vrot.lane.b32.xlu0 %v246, 96
    %v875 = vpop.permute.xlu0 %874
    %v876 = vsel %vm267, %v218, 0
    %v878 = vsel %vm267, %v875, 0
    %880 = vmatprep.subr.mxu0 0.0
    %881 = vmatpush1.xpose.msra.mxu0 %v878
    %882 = vmatprep.subr.mxu0 0.0
    %883 = vmatpush1.xpose.msra.mxu0 0.0
    %884 = vmatprep.subr.mxu0 0.0
    %885 = vmatpush1.xpose.msra.mxu0 0.0
    %886 = vmatprep.subr.mxu0 0.0
    %887 = vmatpush1.xpose.msra.mxu0 0.0
    %888 = vmatprep.subr.mxu0 0.0
    %889 = vmatpush1.xpose.msra.mxu0 0.0
    %890 = vmatprep.subr.mxu0 0.0
    %891 = vmatpush1.xpose.msra.mxu0 0.0
    %892 = vmatprep.subr.mxu0 0.0
    %893 = vmatpush1.xpose.msra.mxu0 0.0
    %894 = vmatprep.subr.mxu0 0.0
    %895 = vmatpush1.xpose.msra.mxu0 0.0
    %896 = vmatprep.subr.mxu0 0.0
    %897 = vmatpush1.xpose.msra.mxu0 0.0
    %898 = vmatprep.subr.mxu0 0.0
    %899 = vmatpush1.xpose.msra.mxu0 0.0
    %900 = vmatprep.subr.mxu0 0.0
    %901 = vmatpush1.xpose.msra.mxu0 0.0
    %902 = vmatprep.subr.mxu0 0.0
    %903 = vmatpush1.xpose.msra.mxu0 0.0
    %904 = vmatprep.subr.mxu0 0.0
    %905 = vmatpush1.xpose.msra.mxu0 0.0
    %906 = vmatprep.subr.mxu0 0.0
    %907 = vmatpush1.xpose.msra.mxu0 0.0
    %908 = vmatprep.subr.mxu0 0.0
    %909 = vmatpush1.xpose.msra.mxu0 0.0
    %910 = vmatprep.subr.mxu0 0.0
    %911 = vmatpush1.xpose.msra.mxu0 0.0
    %912 = vmatprep.subr.mxu0 0.0
    %913 = vmatpush1.xpose.msra.mxu0 0.0
    %914 = vmatprep.subr.mxu0 0.0
    %915 = vmatpush1.xpose.msra.mxu0 0.0
    %916 = vmatprep.subr.mxu0 0.0
    %917 = vmatpush1.xpose.msra.mxu0 0.0
    %918 = vmatprep.subr.mxu0 0.0
    %919 = vmatpush1.xpose.msra.mxu0 0.0
    %920 = vmatprep.subr.mxu0 0.0
    %921 = vmatpush1.xpose.msra.mxu0 0.0
    %922 = vmatprep.subr.mxu0 0.0
    %923 = vmatpush1.xpose.msra.mxu0 0.0
    %924 = vmatprep.subr.mxu0 0.0
    %925 = vmatpush1.xpose.msra.mxu0 0.0
    %926 = vmatprep.subr.mxu0 0.0
    %927 = vmatpush1.xpose.msra.mxu0 0.0
    %928 = vmatprep.subr.mxu0 0.0
    %929 = vmatpush1.xpose.msra.mxu0 0.0
    %930 = vmatprep.subr.mxu0 0.0
    %931 = vmatpush1.xpose.msra.mxu0 0.0
    %932 = vmatprep.subr.mxu0 0.0
    %933 = vmatpush1.xpose.msra.mxu0 0.0
    %934 = vmatprep.subr.mxu0 0.0
    %935 = vmatpush1.xpose.msra.mxu0 0.0
    %936 = vmatprep.subr.mxu0 0.0
    %937 = vmatpush1.xpose.msra.mxu0 0.0
    %938 = vmatprep.subr.mxu0 0.0
    %939 = vmatpush1.xpose.msra.mxu0 0.0
    %940 = vmatprep.subr.mxu0 0.0
    %941 = vmatpush1.xpose.msra.mxu0 0.0
    %942 = vmatprep.subr.mxu0 0.0
    %943 = vmatpush1.xpose.msra.mxu0 0.0
    %944 = vmatprep.mubr.f32.mxu0 0.0
    %945 = vmatmul.mubr.f32.gmra.mrb[0].mxu0 %v876
    %v946 = vpop.f32.mrb[0].mxu0
    %v947 = vadd.f32 %v261, %v946
    %v948 = vpop.f32.mrb[0].mxu0
    %949 = vdwg.mxu0
    %950 = vrot.lane.b32.xlu0 %v248, 96
    %v951 = vpop.permute.xlu0 %950
    %v952 = vsel %vm267, %v220, 0
    %v954 = vsel %vm267, %v951, 0
    %956 = vmatprep.subr.mxu0 0.0
    %957 = vmatpush1.xpose.msra.mxu0 %v954
    %958 = vmatprep.subr.mxu0 0.0
    %959 = vmatpush1.xpose.msra.mxu0 0.0
    %960 = vmatprep.subr.mxu0 0.0
    %961 = vmatpush1.xpose.msra.mxu0 0.0
    %962 = vmatprep.subr.mxu0 0.0
    %963 = vmatpush1.xpose.msra.mxu0 0.0
    %964 = vmatprep.subr.mxu0 0.0
    %965 = vmatpush1.xpose.msra.mxu0 0.0
    %966 = vmatprep.subr.mxu0 0.0
    %967 = vmatpush1.xpose.msra.mxu0 0.0
    %968 = vmatprep.subr.mxu0 0.0
    %969 = vmatpush1.xpose.msra.mxu0 0.0
    %970 = vmatprep.subr.mxu0 0.0
    %971 = vmatpush1.xpose.msra.mxu0 0.0
    %972 = vmatprep.subr.mxu0 0.0
    %973 = vmatpush1.xpose.msra.mxu0 0.0
    %974 = vmatprep.subr.mxu0 0.0
    %975 = vmatpush1.xpose.msra.mxu0 0.0
    %976 = vmatprep.subr.mxu0 0.0
    %977 = vmatpush1.xpose.msra.mxu0 0.0
    %978 = vmatprep.subr.mxu0 0.0
    %979 = vmatpush1.xpose.msra.mxu0 0.0
    %980 = vmatprep.subr.mxu0 0.0
    %981 = vmatpush1.xpose.msra.mxu0 0.0
    %982 = vmatprep.subr.mxu0 0.0
    %983 = vmatpush1.xpose.msra.mxu0 0.0
    %984 = vmatprep.subr.mxu0 0.0
    %985 = vmatpush1.xpose.msra.mxu0 0.0
    %986 = vmatprep.subr.mxu0 0.0
    %987 = vmatpush1.xpose.msra.mxu0 0.0
    %988 = vmatprep.subr.mxu0 0.0
    %989 = vmatpush1.xpose.msra.mxu0 0.0
    %990 = vmatprep.subr.mxu0 0.0
    %991 = vmatpush1.xpose.msra.mxu0 0.0
    %992 = vmatprep.subr.mxu0 0.0
    %993 = vmatpush1.xpose.msra.mxu0 0.0
    %994 = vmatprep.subr.mxu0 0.0
    %995 = vmatpush1.xpose.msra.mxu0 0.0
    %996 = vmatprep.subr.mxu0 0.0
    %997 = vmatpush1.xpose.msra.mxu0 0.0
    %998 = vmatprep.subr.mxu0 0.0
    %999 = vmatpush1.xpose.msra.mxu0 0.0
    %1000 = vmatprep.subr.mxu0 0.0
    %1001 = vmatpush1.xpose.msra.mxu0 0.0
    %1002 = vmatprep.subr.mxu0 0.0
    %1003 = vmatpush1.xpose.msra.mxu0 0.0
    %1004 = vmatprep.subr.mxu0 0.0
    %1005 = vmatpush1.xpose.msra.mxu0 0.0
    %1006 = vmatprep.subr.mxu0 0.0
    %1007 = vmatpush1.xpose.msra.mxu0 0.0
    %1008 = vmatprep.subr.mxu0 0.0
    %1009 = vmatpush1.xpose.msra.mxu0 0.0
    %1010 = vmatprep.subr.mxu0 0.0
    %1011 = vmatpush1.xpose.msra.mxu0 0.0
    %1012 = vmatprep.subr.mxu0 0.0
    %1013 = vmatpush1.xpose.msra.mxu0 0.0
    %1014 = vmatprep.subr.mxu0 0.0
    %1015 = vmatpush1.xpose.msra.mxu0 0.0
    %1016 = vmatprep.subr.mxu0 0.0
    %1017 = vmatpush1.xpose.msra.mxu0 0.0
    %1018 = vmatprep.subr.mxu0 0.0
    %1019 = vmatpush1.xpose.msra.mxu0 0.0
    %1020 = vmatprep.mubr.f32.mxu0 0.0
    %1021 = vmatmul.mubr.f32.gmra.mrb[0].mxu0 %v952
    %v1022 = vpop.f32.mrb[0].mxu0
    %v1023 = vadd.f32 %v262, %v1022
    %v1024 = vpop.f32.mrb[0].mxu0
    %1025 = vdwg.mxu0
    %1026 = vrot.lane.b32.xlu0 %v250, 96
    %v1027 = vpop.permute.xlu0 %1026
    %v1028 = vsel %vm267, %v222, 0
    %v1030 = vsel %vm267, %v1027, 0
    %1032 = vmatprep.subr.mxu0 0.0
    %1033 = vmatpush1.xpose.msra.mxu0 %v1030
    %1034 = vmatprep.subr.mxu0 0.0
    %1035 = vmatpush1.xpose.msra.mxu0 0.0
    %1036 = vmatprep.subr.mxu0 0.0
    %1037 = vmatpush1.xpose.msra.mxu0 0.0
    %1038 = vmatprep.subr.mxu0 0.0
    %1039 = vmatpush1.xpose.msra.mxu0 0.0
    %1040 = vmatprep.subr.mxu0 0.0
    %1041 = vmatpush1.xpose.msra.mxu0 0.0
    %1042 = vmatprep.subr.mxu0 0.0
    %1043 = vmatpush1.xpose.msra.mxu0 0.0
    %1044 = vmatprep.subr.mxu0 0.0
    %1045 = vmatpush1.xpose.msra.mxu0 0.0
    %1046 = vmatprep.subr.mxu0 0.0
    %1047 = vmatpush1.xpose.msra.mxu0 0.0
    %1048 = vmatprep.subr.mxu0 0.0
    %1049 = vmatpush1.xpose.msra.mxu0 0.0
    %1050 = vmatprep.subr.mxu0 0.0
    %1051 = vmatpush1.xpose.msra.mxu0 0.0
    %1052 = vmatprep.subr.mxu0 0.0
    %1053 = vmatpush1.xpose.msra.mxu0 0.0
    %1054 = vmatprep.subr.mxu0 0.0
    %1055 = vmatpush1.xpose.msra.mxu0 0.0
    %1056 = vmatprep.subr.mxu0 0.0
    %1057 = vmatpush1.xpose.msra.mxu0 0.0
    %1058 = vmatprep.subr.mxu0 0.0
    %1059 = vmatpush1.xpose.msra.mxu0 0.0
    %1060 = vmatprep.subr.mxu0 0.0
    %1061 = vmatpush1.xpose.msra.mxu0 0.0
    %1062 = vmatprep.subr.mxu0 0.0
    %1063 = vmatpush1.xpose.msra.mxu0 0.0
    %1064 = vmatprep.subr.mxu0 0.0
    %1065 = vmatpush1.xpose.msra.mxu0 0.0
    %1066 = vmatprep.subr.mxu0 0.0
    %1067 = vmatpush1.xpose.msra.mxu0 0.0
    %1068 = vmatprep.subr.mxu0 0.0
    %1069 = vmatpush1.xpose.msra.mxu0 0.0
    %1070 = vmatprep.subr.mxu0 0.0
    %1071 = vmatpush1.xpose.msra.mxu0 0.0
    %1072 = vmatprep.subr.mxu0 0.0
    %1073 = vmatpush1.xpose.msra.mxu0 0.0
    %1074 = vmatprep.subr.mxu0 0.0
    %1075 = vmatpush1.xpose.msra.mxu0 0.0
    %1076 = vmatprep.subr.mxu0 0.0
    %1077 = vmatpush1.xpose.msra.mxu0 0.0
    %1078 = vmatprep.subr.mxu0 0.0
    %1079 = vmatpush1.xpose.msra.mxu0 0.0
    %1080 = vmatprep.subr.mxu0 0.0
    %1081 = vmatpush1.xpose.msra.mxu0 0.0
    %1082 = vmatprep.subr.mxu0 0.0
    %1083 = vmatpush1.xpose.msra.mxu0 0.0
    %1084 = vmatprep.subr.mxu0 0.0
    %1085 = vmatpush1.xpose.msra.mxu0 0.0
    %1086 = vmatprep.subr.mxu0 0.0
    %1087 = vmatpush1.xpose.msra.mxu0 0.0
    %1088 = vmatprep.subr.mxu0 0.0
    %1089 = vmatpush1.xpose.msra.mxu0 0.0
    %1090 = vmatprep.subr.mxu0 0.0
    %1091 = vmatpush1.xpose.msra.mxu0 0.0
    %1092 = vmatprep.subr.mxu0 0.0
    %1093 = vmatpush1.xpose.msra.mxu0 0.0
    %1094 = vmatprep.subr.mxu0 0.0
    %1095 = vmatpush1.xpose.msra.mxu0 0.0
    %1096 = vmatprep.mubr.f32.mxu0 0.0
    %1097 = vmatmul.mubr.f32.gmra.mrb[0].mxu0 %v1028
    %v1098 = vpop.f32.mrb[0].mxu0
    %v1099 = vadd.f32 %v263, %v1098
    %v1100 = vpop.f32.mrb[0].mxu0
    %1101 = vdwg.mxu0
    %1102 = vrot.lane.b32.xlu0 %v252, 96
    %v1103 = vpop.permute.xlu0 %1102
    %v1104 = vsel %vm267, %v224, 0
    %v1106 = vsel %vm267, %v1103, 0
    %1108 = vmatprep.subr.mxu0 0.0
    %1109 = vmatpush1.xpose.msra.mxu0 %v1106
    %1110 = vmatprep.subr.mxu0 0.0
    %1111 = vmatpush1.xpose.msra.mxu0 0.0
    %1112 = vmatprep.subr.mxu0 0.0
    %1113 = vmatpush1.xpose.msra.mxu0 0.0
    %1114 = vmatprep.subr.mxu0 0.0
    %1115 = vmatpush1.xpose.msra.mxu0 0.0
    %1116 = vmatprep.subr.mxu0 0.0
    %1117 = vmatpush1.xpose.msra.mxu0 0.0
    %1118 = vmatprep.subr.mxu0 0.0
    %1119 = vmatpush1.xpose.msra.mxu0 0.0
    %1120 = vmatprep.subr.mxu0 0.0
    %1121 = vmatpush1.xpose.msra.mxu0 0.0
    %1122 = vmatprep.subr.mxu0 0.0
    %1123 = vmatpush1.xpose.msra.mxu0 0.0
    %1124 = vmatprep.subr.mxu0 0.0
    %1125 = vmatpush1.xpose.msra.mxu0 0.0
    %1126 = vmatprep.subr.mxu0 0.0
    %1127 = vmatpush1.xpose.msra.mxu0 0.0
    %1128 = vmatprep.subr.mxu0 0.0
    %1129 = vmatpush1.xpose.msra.mxu0 0.0
    %1130 = vmatprep.subr.mxu0 0.0
    %1131 = vmatpush1.xpose.msra.mxu0 0.0
    %1132 = vmatprep.subr.mxu0 0.0
    %1133 = vmatpush1.xpose.msra.mxu0 0.0
    %1134 = vmatprep.subr.mxu0 0.0
    %1135 = vmatpush1.xpose.msra.mxu0 0.0
    %1136 = vmatprep.subr.mxu0 0.0
    %1137 = vmatpush1.xpose.msra.mxu0 0.0
    %1138 = vmatprep.subr.mxu0 0.0
    %1139 = vmatpush1.xpose.msra.mxu0 0.0
    %1140 = vmatprep.subr.mxu0 0.0
    %1141 = vmatpush1.xpose.msra.mxu0 0.0
    %1142 = vmatprep.subr.mxu0 0.0
    %1143 = vmatpush1.xpose.msra.mxu0 0.0
    %1144 = vmatprep.subr.mxu0 0.0
    %1145 = vmatpush1.xpose.msra.mxu0 0.0
    %1146 = vmatprep.subr.mxu0 0.0
    %1147 = vmatpush1.xpose.msra.mxu0 0.0
    %1148 = vmatprep.subr.mxu0 0.0
    %1149 = vmatpush1.xpose.msra.mxu0 0.0
    %1150 = vmatprep.subr.mxu0 0.0
    %1151 = vmatpush1.xpose.msra.mxu0 0.0
    %1152 = vmatprep.subr.mxu0 0.0
    %1153 = vmatpush1.xpose.msra.mxu0 0.0
    %1154 = vmatprep.subr.mxu0 0.0
    %1155 = vmatpush1.xpose.msra.mxu0 0.0
    %1156 = vmatprep.subr.mxu0 0.0
    %1157 = vmatpush1.xpose.msra.mxu0 0.0
    %1158 = vmatprep.subr.mxu0 0.0
    %1159 = vmatpush1.xpose.msra.mxu0 0.0
    %1160 = vmatprep.subr.mxu0 0.0
    %1161 = vmatpush1.xpose.msra.mxu0 0.0
    %1162 = vmatprep.subr.mxu0 0.0
    %1163 = vmatpush1.xpose.msra.mxu0 0.0
    %1164 = vmatprep.subr.mxu0 0.0
    %1165 = vmatpush1.xpose.msra.mxu0 0.0
    %1166 = vmatprep.subr.mxu0 0.0
    %1167 = vmatpush1.xpose.msra.mxu0 0.0
    %1168 = vmatprep.subr.mxu0 0.0
    %1169 = vmatpush1.xpose.msra.mxu0 0.0
    %1170 = vmatprep.subr.mxu0 0.0
    %1171 = vmatpush1.xpose.msra.mxu0 0.0
    %1172 = vmatprep.mubr.f32.mxu0 0.0
    %1173 = vmatmul.mubr.f32.gmra.mrb[0].mxu0 %v1104
    %v1174 = vpop.f32.mrb[0].mxu0
    %v1175 = vadd.f32 %v264, %v1174
    %v1176 = vpop.f32.mrb[0].mxu0
    %1177 = vdwg.mxu0
    %1178 = vrot.lane.b32.xlu0 %v254, 96
    %v1179 = vpop.permute.xlu0 %1178
    %v1180 = vsel %vm267, %v226, 0
    %v1182 = vsel %vm267, %v1179, 0
    %1184 = vmatprep.subr.mxu0 0.0
    %1185 = vmatpush1.xpose.msra.mxu0 %v1182
    %1186 = vmatprep.subr.mxu0 0.0
    %1187 = vmatpush1.xpose.msra.mxu0 0.0
    %1188 = vmatprep.subr.mxu0 0.0
    %1189 = vmatpush1.xpose.msra.mxu0 0.0
    %1190 = vmatprep.subr.mxu0 0.0
    %1191 = vmatpush1.xpose.msra.mxu0 0.0
    %1192 = vmatprep.subr.mxu0 0.0
    %1193 = vmatpush1.xpose.msra.mxu0 0.0
    %1194 = vmatprep.subr.mxu0 0.0
    %1195 = vmatpush1.xpose.msra.mxu0 0.0
    %1196 = vmatprep.subr.mxu0 0.0
    %1197 = vmatpush1.xpose.msra.mxu0 0.0
    %1198 = vmatprep.subr.mxu0 0.0
    %1199 = vmatpush1.xpose.msra.mxu0 0.0
    %1200 = vmatprep.subr.mxu0 0.0
    %1201 = vmatpush1.xpose.msra.mxu0 0.0
    %1202 = vmatprep.subr.mxu0 0.0
    %1203 = vmatpush1.xpose.msra.mxu0 0.0
    %1204 = vmatprep.subr.mxu0 0.0
    %1205 = vmatpush1.xpose.msra.mxu0 0.0
    %1206 = vmatprep.subr.mxu0 0.0
    %1207 = vmatpush1.xpose.msra.mxu0 0.0
    %1208 = vmatprep.subr.mxu0 0.0
    %1209 = vmatpush1.xpose.msra.mxu0 0.0
    %1210 = vmatprep.subr.mxu0 0.0
    %1211 = vmatpush1.xpose.msra.mxu0 0.0
    %1212 = vmatprep.subr.mxu0 0.0
    %1213 = vmatpush1.xpose.msra.mxu0 0.0
    %1214 = vmatprep.subr.mxu0 0.0
    %1215 = vmatpush1.xpose.msra.mxu0 0.0
    %1216 = vmatprep.subr.mxu0 0.0
    %1217 = vmatpush1.xpose.msra.mxu0 0.0
    %1218 = vmatprep.subr.mxu0 0.0
    %1219 = vmatpush1.xpose.msra.mxu0 0.0
    %1220 = vmatprep.subr.mxu0 0.0
    %1221 = vmatpush1.xpose.msra.mxu0 0.0
    %1222 = vmatprep.subr.mxu0 0.0
    %1223 = vmatpush1.xpose.msra.mxu0 0.0
    %1224 = vmatprep.subr.mxu0 0.0
    %1225 = vmatpush1.xpose.msra.mxu0 0.0
    %1226 = vmatprep.subr.mxu0 0.0
    %1227 = vmatpush1.xpose.msra.mxu0 0.0
    %1228 = vmatprep.subr.mxu0 0.0
    %1229 = vmatpush1.xpose.msra.mxu0 0.0
    %1230 = vmatprep.subr.mxu0 0.0
    %1231 = vmatpush1.xpose.msra.mxu0 0.0
    %1232 = vmatprep.subr.mxu0 0.0
    %1233 = vmatpush1.xpose.msra.mxu0 0.0
    %1234 = vmatprep.subr.mxu0 0.0
    %1235 = vmatpush1.xpose.msra.mxu0 0.0
    %1236 = vmatprep.subr.mxu0 0.0
    %1237 = vmatpush1.xpose.msra.mxu0 0.0
    %1238 = vmatprep.subr.mxu0 0.0
    %1239 = vmatpush1.xpose.msra.mxu0 0.0
    %1240 = vmatprep.subr.mxu0 0.0
    %1241 = vmatpush1.xpose.msra.mxu0 0.0
    %1242 = vmatprep.subr.mxu0 0.0
    %1243 = vmatpush1.xpose.msra.mxu0 0.0
    %1244 = vmatprep.subr.mxu0 0.0
    %1245 = vmatpush1.xpose.msra.mxu0 0.0
    %1246 = vmatprep.subr.mxu0 0.0
    %1247 = vmatpush1.xpose.msra.mxu0 0.0
    %1248 = vmatprep.mubr.f32.mxu0 0.0
    %1249 = vmatmul.mubr.f32.gmra.mrb[0].mxu0 %v1180
    %v1250 = vpop.f32.mrb[0].mxu0
    %v1251 = vadd.f32 %v261, %v1250
    %v1252 = vpop.f32.mrb[0].mxu0
    %1253 = vdwg.mxu0
    %1254 = vrot.lane.b32.xlu0 %v256, 96
    %v1255 = vpop.permute.xlu0 %1254
    %v1256 = vsel %vm267, %v228, 0
    %v1258 = vsel %vm267, %v1255, 0
    %1260 = vmatprep.subr.mxu0 0.0
    %1261 = vmatpush1.xpose.msra.mxu0 %v1258
    %1262 = vmatprep.subr.mxu0 0.0
    %1263 = vmatpush1.xpose.msra.mxu0 0.0
    %1264 = vmatprep.subr.mxu0 0.0
    %1265 = vmatpush1.xpose.msra.mxu0 0.0
    %1266 = vmatprep.subr.mxu0 0.0
    %1267 = vmatpush1.xpose.msra.mxu0 0.0
    %1268 = vmatprep.subr.mxu0 0.0
    %1269 = vmatpush1.xpose.msra.mxu0 0.0
    %1270 = vmatprep.subr.mxu0 0.0
    %1271 = vmatpush1.xpose.msra.mxu0 0.0
    %1272 = vmatprep.subr.mxu0 0.0
    %1273 = vmatpush1.xpose.msra.mxu0 0.0
    %1274 = vmatprep.subr.mxu0 0.0
    %1275 = vmatpush1.xpose.msra.mxu0 0.0
    %1276 = vmatprep.subr.mxu0 0.0
    %1277 = vmatpush1.xpose.msra.mxu0 0.0
    %1278 = vmatprep.subr.mxu0 0.0
    %1279 = vmatpush1.xpose.msra.mxu0 0.0
    %1280 = vmatprep.subr.mxu0 0.0
    %1281 = vmatpush1.xpose.msra.mxu0 0.0
    %1282 = vmatprep.subr.mxu0 0.0
    %1283 = vmatpush1.xpose.msra.mxu0 0.0
    %1284 = vmatprep.subr.mxu0 0.0
    %1285 = vmatpush1.xpose.msra.mxu0 0.0
    %1286 = vmatprep.subr.mxu0 0.0
    %1287 = vmatpush1.xpose.msra.mxu0 0.0
    %1288 = vmatprep.subr.mxu0 0.0
    %1289 = vmatpush1.xpose.msra.mxu0 0.0
    %1290 = vmatprep.subr.mxu0 0.0
    %1291 = vmatpush1.xpose.msra.mxu0 0.0
    %1292 = vmatprep.subr.mxu0 0.0
    %1293 = vmatpush1.xpose.msra.mxu0 0.0
    %1294 = vmatprep.subr.mxu0 0.0
    %1295 = vmatpush1.xpose.msra.mxu0 0.0
    %1296 = vmatprep.subr.mxu0 0.0
    %1297 = vmatpush1.xpose.msra.mxu0 0.0
    %1298 = vmatprep.subr.mxu0 0.0
    %1299 = vmatpush1.xpose.msra.mxu0 0.0
    %1300 = vmatprep.subr.mxu0 0.0
    %1301 = vmatpush1.xpose.msra.mxu0 0.0
    %1302 = vmatprep.subr.mxu0 0.0
    %1303 = vmatpush1.xpose.msra.mxu0 0.0
    %1304 = vmatprep.subr.mxu0 0.0
    %1305 = vmatpush1.xpose.msra.mxu0 0.0
    %1306 = vmatprep.subr.mxu0 0.0
    %1307 = vmatpush1.xpose.msra.mxu0 0.0
    %1308 = vmatprep.subr.mxu0 0.0
    %1309 = vmatpush1.xpose.msra.mxu0 0.0
    %1310 = vmatprep.subr.mxu0 0.0
    %1311 = vmatpush1.xpose.msra.mxu0 0.0
    %1312 = vmatprep.subr.mxu0 0.0
    %1313 = vmatpush1.xpose.msra.mxu0 0.0
    %1314 = vmatprep.subr.mxu0 0.0
    %1315 = vmatpush1.xpose.msra.mxu0 0.0
    %1316 = vmatprep.subr.mxu0 0.0
    %1317 = vmatpush1.xpose.msra.mxu0 0.0
    %1318 = vmatprep.subr.mxu0 0.0
    %1319 = vmatpush1.xpose.msra.mxu0 0.0
    %1320 = vmatprep.subr.mxu0 0.0
    %1321 = vmatpush1.xpose.msra.mxu0 0.0
    %1322 = vmatprep.subr.mxu0 0.0
    %1323 = vmatpush1.xpose.msra.mxu0 0.0
    %1324 = vmatprep.mubr.f32.mxu0 0.0
    %1325 = vmatmul.mubr.f32.gmra.mrb[0].mxu0 %v1256
    %v1326 = vpop.f32.mrb[0].mxu0
    %v1327 = vadd.f32 %v262, %v1326
    %v1328 = vpop.f32.mrb[0].mxu0
    %1329 = vdwg.mxu0
    %1330 = vrot.lane.b32.xlu0 %v258, 96
    %v1331 = vpop.permute.xlu0 %1330
    %v1332 = vsel %vm267, %v230, 0
    %v1334 = vsel %vm267, %v1331, 0
    %1336 = vmatprep.subr.mxu0 0.0
    %1337 = vmatpush1.xpose.msra.mxu0 %v1334
    %1338 = vmatprep.subr.mxu0 0.0
    %1339 = vmatpush1.xpose.msra.mxu0 0.0
    %1340 = vmatprep.subr.mxu0 0.0
    %1341 = vmatpush1.xpose.msra.mxu0 0.0
    %1342 = vmatprep.subr.mxu0 0.0
    %1343 = vmatpush1.xpose.msra.mxu0 0.0
    %1344 = vmatprep.subr.mxu0 0.0
    %1345 = vmatpush1.xpose.msra.mxu0 0.0
    %1346 = vmatprep.subr.mxu0 0.0
    %1347 = vmatpush1.xpose.msra.mxu0 0.0
    %1348 = vmatprep.subr.mxu0 0.0
    %1349 = vmatpush1.xpose.msra.mxu0 0.0
    %1350 = vmatprep.subr.mxu0 0.0
    %1351 = vmatpush1.xpose.msra.mxu0 0.0
    %1352 = vmatprep.subr.mxu0 0.0
    %1353 = vmatpush1.xpose.msra.mxu0 0.0
    %1354 = vmatprep.subr.mxu0 0.0
    %1355 = vmatpush1.xpose.msra.mxu0 0.0
    %1356 = vmatprep.subr.mxu0 0.0
    %1357 = vmatpush1.xpose.msra.mxu0 0.0
    %1358 = vmatprep.subr.mxu0 0.0
    %1359 = vmatpush1.xpose.msra.mxu0 0.0
    %1360 = vmatprep.subr.mxu0 0.0
    %1361 = vmatpush1.xpose.msra.mxu0 0.0
    %1362 = vmatprep.subr.mxu0 0.0
    %1363 = vmatpush1.xpose.msra.mxu0 0.0
    %1364 = vmatprep.subr.mxu0 0.0
    %1365 = vmatpush1.xpose.msra.mxu0 0.0
    %1366 = vmatprep.subr.mxu0 0.0
    %1367 = vmatpush1.xpose.msra.mxu0 0.0
    %1368 = vmatprep.subr.mxu0 0.0
    %1369 = vmatpush1.xpose.msra.mxu0 0.0
    %1370 = vmatprep.subr.mxu0 0.0
    %1371 = vmatpush1.xpose.msra.mxu0 0.0
    %1372 = vmatprep.subr.mxu0 0.0
    %1373 = vmatpush1.xpose.msra.mxu0 0.0
    %1374 = vmatprep.subr.mxu0 0.0
    %1375 = vmatpush1.xpose.msra.mxu0 0.0
    %1376 = vmatprep.subr.mxu0 0.0
    %1377 = vmatpush1.xpose.msra.mxu0 0.0
    %1378 = vmatprep.subr.mxu0 0.0
    %1379 = vmatpush1.xpose.msra.mxu0 0.0
    %1380 = vmatprep.subr.mxu0 0.0
    %1381 = vmatpush1.xpose.msra.mxu0 0.0
    %1382 = vmatprep.subr.mxu0 0.0
    %1383 = vmatpush1.xpose.msra.mxu0 0.0
    %1384 = vmatprep.subr.mxu0 0.0
    %1385 = vmatpush1.xpose.msra.mxu0 0.0
    %1386 = vmatprep.subr.mxu0 0.0
    %1387 = vmatpush1.xpose.msra.mxu0 0.0
    %1388 = vmatprep.subr.mxu0 0.0
    %1389 = vmatpush1.xpose.msra.mxu0 0.0
    %1390 = vmatprep.subr.mxu0 0.0
    %1391 = vmatpush1.xpose.msra.mxu0 0.0
    %1392 = vmatprep.subr.mxu0 0.0
    %1393 = vmatpush1.xpose.msra.mxu0 0.0
    %1394 = vmatprep.subr.mxu0 0.0
    %1395 = vmatpush1.xpose.msra.mxu0 0.0
    %1396 = vmatprep.subr.mxu0 0.0
    %1397 = vmatpush1.xpose.msra.mxu0 0.0
    %1398 = vmatprep.subr.mxu0 0.0
    %1399 = vmatpush1.xpose.msra.mxu0 0.0
    %1400 = vmatprep.mubr.f32.mxu0 0.0
    %1401 = vmatmul.mubr.f32.gmra.mrb[0].mxu0 %v1332
    %v1402 = vpop.f32.mrb[0].mxu0
    %v1403 = vadd.f32 %v263, %v1402
    %v1404 = vpop.f32.mrb[0].mxu0
    %1405 = vdwg.mxu0
    %1406 = vrot.lane.b32.xlu0 %v260, 96
    %v1407 = vpop.permute.xlu0 %1406
    %v1408 = vsel %vm267, %v232, 0
    %v1410 = vsel %vm267, %v1407, 0
    %1412 = vmatprep.subr.mxu0 0.0
    %1413 = vmatpush1.xpose.msra.mxu0 %v1410
    %1414 = vmatprep.subr.mxu0 0.0
    %1415 = vmatpush1.xpose.msra.mxu0 0.0
    %1416 = vmatprep.subr.mxu0 0.0
    %1417 = vmatpush1.xpose.msra.mxu0 0.0
    %1418 = vmatprep.subr.mxu0 0.0
    %1419 = vmatpush1.xpose.msra.mxu0 0.0
    %1420 = vmatprep.subr.mxu0 0.0
    %1421 = vmatpush1.xpose.msra.mxu0 0.0
    %1422 = vmatprep.subr.mxu0 0.0
    %1423 = vmatpush1.xpose.msra.mxu0 0.0
    %1424 = vmatprep.subr.mxu0 0.0
    %1425 = vmatpush1.xpose.msra.mxu0 0.0
    %1426 = vmatprep.subr.mxu0 0.0
    %1427 = vmatpush1.xpose.msra.mxu0 0.0
    %1428 = vmatprep.subr.mxu0 0.0
    %1429 = vmatpush1.xpose.msra.mxu0 0.0
    %1430 = vmatprep.subr.mxu0 0.0
    %1431 = vmatpush1.xpose.msra.mxu0 0.0
    %1432 = vmatprep.subr.mxu0 0.0
    %1433 = vmatpush1.xpose.msra.mxu0 0.0
    %1434 = vmatprep.subr.mxu0 0.0
    %1435 = vmatpush1.xpose.msra.mxu0 0.0
    %1436 = vmatprep.subr.mxu0 0.0
    %1437 = vmatpush1.xpose.msra.mxu0 0.0
    %1438 = vmatprep.subr.mxu0 0.0
    %1439 = vmatpush1.xpose.msra.mxu0 0.0
    %1440 = vmatprep.subr.mxu0 0.0
    %1441 = vmatpush1.xpose.msra.mxu0 0.0
    %1442 = vmatprep.subr.mxu0 0.0
    %1443 = vmatpush1.xpose.msra.mxu0 0.0
    %1444 = vmatprep.subr.mxu0 0.0
    %1445 = vmatpush1.xpose.msra.mxu0 0.0
    %1446 = vmatprep.subr.mxu0 0.0
    %1447 = vmatpush1.xpose.msra.mxu0 0.0
    %1448 = vmatprep.subr.mxu0 0.0
    %1449 = vmatpush1.xpose.msra.mxu0 0.0
    %1450 = vmatprep.subr.mxu0 0.0
    %1451 = vmatpush1.xpose.msra.mxu0 0.0
    %1452 = vmatprep.subr.mxu0 0.0
    %1453 = vmatpush1.xpose.msra.mxu0 0.0
    %1454 = vmatprep.subr.mxu0 0.0
    %1455 = vmatpush1.xpose.msra.mxu0 0.0
    %1456 = vmatprep.subr.mxu0 0.0
    %1457 = vmatpush1.xpose.msra.mxu0 0.0
    %1458 = vmatprep.subr.mxu0 0.0
    %1459 = vmatpush1.xpose.msra.mxu0 0.0
    %1460 = vmatprep.subr.mxu0 0.0
    %1461 = vmatpush1.xpose.msra.mxu0 0.0
    %1462 = vmatprep.subr.mxu0 0.0
    %1463 = vmatpush1.xpose.msra.mxu0 0.0
    %1464 = vmatprep.subr.mxu0 0.0
    %1465 = vmatpush1.xpose.msra.mxu0 0.0
    %1466 = vmatprep.subr.mxu0 0.0
    %1467 = vmatpush1.xpose.msra.mxu0 0.0
    %1468 = vmatprep.subr.mxu0 0.0
    %1469 = vmatpush1.xpose.msra.mxu0 0.0
    %1470 = vmatprep.subr.mxu0 0.0
    %1471 = vmatpush1.xpose.msra.mxu0 0.0
    %1472 = vmatprep.subr.mxu0 0.0
    %1473 = vmatpush1.xpose.msra.mxu0 0.0
    %1474 = vmatprep.subr.mxu0 0.0
    %1475 = vmatpush1.xpose.msra.mxu0 0.0
    %1476 = vmatprep.mubr.f32.mxu0 0.0
    %1477 = vmatmul.mubr.f32.gmra.mrb[0].mxu0 %v1408
    %v1478 = vpop.f32.mrb[0].mxu0
    %v1479 = vadd.f32 %v264, %v1478
    %v1480 = vpop.f32.mrb[0].mxu0
    %1481 = vdwg.mxu0
    %v1482 = vsel %vm267, %v339, -inf
    %1483 = vmax.xlane.f32.xlu0 %v1482
    %v1484 = vpop.xlane.xlu0 %1483
    %v1485 = vsel %vm267, %v415, -inf
    %1486 = vmax.xlane.f32.xlu0 %v1485
    %v1487 = vpop.xlane.xlu0 %1486
    %v1488 = vsel %vm267, %v491, -inf
    %1489 = vmax.xlane.f32.xlu0 %v1488
    %v1490 = vpop.xlane.xlu0 %1489
    %v1491 = vsel %vm267, %v567, -inf
    %1492 = vmax.xlane.f32.xlu0 %v1491
    %v1493 = vpop.xlane.xlu0 %1492
    %v1494 = vsel %vm267, %v643, -inf
    %1495 = vmax.xlane.f32.xlu0 %v1494
    %v1496 = vpop.xlane.xlu0 %1495
    %v1497 = vsel %vm267, %v719, -inf
    %1498 = vmax.xlane.f32.xlu0 %v1497
    %v1499 = vpop.xlane.xlu0 %1498
    %v1500 = vsel %vm267, %v795, -inf
    %1501 = vmax.xlane.f32.xlu0 %v1500
    %v1502 = vpop.xlane.xlu0 %1501
    %v1503 = vsel %vm267, %v871, -inf
    %1504 = vmax.xlane.f32.xlu0 %v1503
    %v1505 = vpop.xlane.xlu0 %1504
    %v1506 = vsel %vm267, %v947, -inf
    %1507 = vmax.xlane.f32.xlu0 %v1506
    %v1508 = vpop.xlane.xlu0 %1507
    %v1509 = vsel %vm267, %v1023, -inf
    %1510 = vmax.xlane.f32.xlu0 %v1509
    %v1511 = vpop.xlane.xlu0 %1510
    %v1512 = vsel %vm267, %v1099, -inf
    %1513 = vmax.xlane.f32.xlu0 %v1512
    %v1514 = vpop.xlane.xlu0 %1513
    %v1515 = vsel %vm267, %v1175, -inf
    %1516 = vmax.xlane.f32.xlu0 %v1515
    %v1517 = vpop.xlane.xlu0 %1516
    %v1518 = vsel %vm267, %v1251, -inf
    %1519 = vmax.xlane.f32.xlu0 %v1518
    %v1520 = vpop.xlane.xlu0 %1519
    %v1521 = vsel %vm267, %v1327, -inf
    %1522 = vmax.xlane.f32.xlu0 %v1521
    %v1523 = vpop.xlane.xlu0 %1522
    %v1524 = vsel %vm267, %v1403, -inf
    %1525 = vmax.xlane.f32.xlu0 %v1524
    %v1526 = vpop.xlane.xlu0 %1525
    %v1527 = vsel %vm267, %v1479, -inf
    %1528 = vmax.xlane.f32.xlu0 %v1527
    %v1529 = vpop.xlane.xlu0 %1528
    %v1530 = vsub.f32 %v339, %v1484
    %v1531 = vsub.f32 %v415, %v1487
    %v1532 = vsub.f32 %v491, %v1490
    %v1533 = vsub.f32 %v567, %v1493
    %v1534 = vsub.f32 %v643, %v1496
    %v1535 = vsub.f32 %v719, %v1499
    %v1536 = vsub.f32 %v795, %v1502
    %v1537 = vsub.f32 %v871, %v1505
    %v1538 = vsub.f32 %v947, %v1508
    %v1539 = vsub.f32 %v1023, %v1511
    %v1540 = vsub.f32 %v1099, %v1514
    %v1541 = vsub.f32 %v1175, %v1517
    %v1542 = vsub.f32 %v1251, %v1520
    %v1543 = vsub.f32 %v1327, %v1523
    %v1544 = vsub.f32 %v1403, %v1526
    %v1545 = vsub.f32 %v1479, %v1529
    %v1546 = vmul.f32 %v1530, 1.442695
    %v1547 = vpow.pop %v1546
    %v1548 = vmul.f32 %v1531, 1.442695
    %v1549 = vpow.pop %v1548
    %v1550 = vmul.f32 %v1532, 1.442695
    %v1551 = vpow.pop %v1550
    %v1552 = vmul.f32 %v1533, 1.442695
    %v1553 = vpow.pop %v1552
    %v1554 = vmul.f32 %v1534, 1.442695
    %v1555 = vpow.pop %v1554
    %v1556 = vmul.f32 %v1535, 1.442695
    %v1557 = vpow.pop %v1556
    %v1558 = vmul.f32 %v1536, 1.442695
    %v1559 = vpow.pop %v1558
    %v1560 = vmul.f32 %v1537, 1.442695
    %v1561 = vpow.pop %v1560
    %v1562 = vmul.f32 %v1538, 1.442695
    %v1563 = vpow.pop %v1562
    %v1564 = vmul.f32 %v1539, 1.442695
    %v1565 = vpow.pop %v1564
    %v1566 = vmul.f32 %v1540, 1.442695
    %v1567 = vpow.pop %v1566
    %v1568 = vmul.f32 %v1541, 1.442695
    %v1569 = vpow.pop %v1568
    %v1570 = vmul.f32 %v1542, 1.442695
    %v1571 = vpow.pop %v1570
    %v1572 = vmul.f32 %v1543, 1.442695
    %v1573 = vpow.pop %v1572
    %v1574 = vmul.f32 %v1544, 1.442695
    %v1575 = vpow.pop %v1574
    %v1576 = vmul.f32 %v1545, 1.442695
    %v1577 = vpow.pop %v1576
    %v1578 = vsel %vm267, %v1547, 0.0
    %1579 = vadd.xlane.f32.xlu0 %v1578
    %v1580 = vpop.xlane.xlu0 %1579
    %v1581 = vsel %vm267, %v1549, 0.0
    %1582 = vadd.xlane.f32.xlu0 %v1581
    %v1583 = vpop.xlane.xlu0 %1582
    %v1584 = vsel %vm267, %v1551, 0.0
    %1585 = vadd.xlane.f32.xlu0 %v1584
    %v1586 = vpop.xlane.xlu0 %1585
    %v1587 = vsel %vm267, %v1553, 0.0
    %1588 = vadd.xlane.f32.xlu0 %v1587
    %v1589 = vpop.xlane.xlu0 %1588
    %v1590 = vsel %vm267, %v1555, 0.0
    %1591 = vadd.xlane.f32.xlu0 %v1590
    %v1592 = vpop.xlane.xlu0 %1591
    %v1593 = vsel %vm267, %v1557, 0.0
    %1594 = vadd.xlane.f32.xlu0 %v1593
    %v1595 = vpop.xlane.xlu0 %1594
    %v1596 = vsel %vm267, %v1559, 0.0
    %1597 = vadd.xlane.f32.xlu0 %v1596
    %v1598 = vpop.xlane.xlu0 %1597
    %v1599 = vsel %vm267, %v1561, 0.0
    %1600 = vadd.xlane.f32.xlu0 %v1599
    %v1601 = vpop.xlane.xlu0 %1600
    %v1602 = vsel %vm267, %v1563, 0.0
    %1603 = vadd.xlane.f32.xlu0 %v1602
    %v1604 = vpop.xlane.xlu0 %1603
    %v1605 = vsel %vm267, %v1565, 0.0
    %1606 = vadd.xlane.f32.xlu0 %v1605
    %v1607 = vpop.xlane.xlu0 %1606
    %v1608 = vsel %vm267, %v1567, 0.0
    %1609 = vadd.xlane.f32.xlu0 %v1608
    %v1610 = vpop.xlane.xlu0 %1609
    %v1611 = vsel %vm267, %v1569, 0.0
    %1612 = vadd.xlane.f32.xlu0 %v1611
    %v1613 = vpop.xlane.xlu0 %1612
    %v1614 = vsel %vm267, %v1571, 0.0
    %1615 = vadd.xlane.f32.xlu0 %v1614
    %v1616 = vpop.xlane.xlu0 %1615
    %v1617 = vsel %vm267, %v1573, 0.0
    %1618 = vadd.xlane.f32.xlu0 %v1617
    %v1619 = vpop.xlane.xlu0 %1618
    %v1620 = vsel %vm267, %v1575, 0.0
    %1621 = vadd.xlane.f32.xlu0 %v1620
    %v1622 = vpop.xlane.xlu0 %1621
    %v1623 = vsel %vm267, %v1577, 0.0
    %1624 = vadd.xlane.f32.xlu0 %v1623
    %v1625 = vpop.xlane.xlu0 %1624
    %v1626 = vrcp.pop %v1580
    %v1627 = vrcp.pop %v1583
    %v1628 = vrcp.pop %v1586
    %v1629 = vrcp.pop %v1589
    %v1630 = vrcp.pop %v1592
    %v1631 = vrcp.pop %v1595
    %v1632 = vrcp.pop %v1598
    %v1633 = vrcp.pop %v1601
    %v1634 = vrcp.pop %v1604
    %v1635 = vrcp.pop %v1607
    %v1636 = vrcp.pop %v1610
    %v1637 = vrcp.pop %v1613
    %v1638 = vrcp.pop %v1616
    %v1639 = vrcp.pop %v1619
    %v1640 = vrcp.pop %v1622
    %v1641 = vrcp.pop %v1625
    %v1642 = vmul.f32 %v1547, %v1626
    %v1643 = vmul.f32 %v1549, %v1627
    %v1644 = vmul.f32 %v1551, %v1628
    %v1645 = vmul.f32 %v1553, %v1629
    %v1646 = vmul.f32 %v1555, %v1630
    %v1647 = vmul.f32 %v1557, %v1631
    %v1648 = vmul.f32 %v1559, %v1632
    %v1649 = vmul.f32 %v1561, %v1633
    %v1650 = vmul.f32 %v1563, %v1634
    %v1651 = vmul.f32 %v1565, %v1635
    %v1652 = vmul.f32 %v1567, %v1636
    %v1653 = vmul.f32 %v1569, %v1637
    %v1654 = vmul.f32 %v1571, %v1638
    %v1655 = vmul.f32 %v1573, %v1639
    %v1656 = vmul.f32 %v1575, %v1640
    %v1657 = vmul.f32 %v1577, %v1641
    %1658 = vrot.lane.b32.xlu0 %v183, 64
    %v1659 = vpop.permute.xlu0 %1658
    %v1662 = vsel %vm267, %v1642, 0
    %1664 = vmatprep.subr.mxu0 0.0
    %1665 = vmatpush1.msra.mxu0 %v1659
    %1666 = vmatprep.subr.mxu0 0.0
    %1667 = vmatpush1.msra.mxu0 0.0
    %1668 = vmatprep.subr.mxu0 0.0
    %1669 = vmatpush1.msra.mxu0 0.0
    %1670 = vmatprep.subr.mxu0 0.0
    %1671 = vmatpush1.msra.mxu0 0.0
    %1672 = vmatprep.subr.mxu0 0.0
    %1673 = vmatpush1.msra.mxu0 0.0
    %1674 = vmatprep.subr.mxu0 0.0
    %1675 = vmatpush1.msra.mxu0 0.0
    %1676 = vmatprep.subr.mxu0 0.0
    %1677 = vmatpush1.msra.mxu0 0.0
    %1678 = vmatprep.subr.mxu0 0.0
    %1679 = vmatpush1.msra.mxu0 0.0
    %1680 = vmatprep.subr.mxu0 0.0
    %1681 = vmatpush1.msra.mxu0 0.0
    %1682 = vmatprep.subr.mxu0 0.0
    %1683 = vmatpush1.msra.mxu0 0.0
    %1684 = vmatprep.subr.mxu0 0.0
    %1685 = vmatpush1.msra.mxu0 0.0
    %1686 = vmatprep.subr.mxu0 0.0
    %1687 = vmatpush1.msra.mxu0 0.0
    %1688 = vmatprep.subr.mxu0 0.0
    %1689 = vmatpush1.msra.mxu0 0.0
    %1690 = vmatprep.subr.mxu0 0.0
    %1691 = vmatpush1.msra.mxu0 0.0
    %1692 = vmatprep.subr.mxu0 0.0
    %1693 = vmatpush1.msra.mxu0 0.0
    %1694 = vmatprep.subr.mxu0 0.0
    %1695 = vmatpush1.msra.mxu0 0.0
    %1696 = vmatprep.subr.mxu0 0.0
    %1697 = vmatpush1.msra.mxu0 0.0
    %1698 = vmatprep.subr.mxu0 0.0
    %1699 = vmatpush1.msra.mxu0 0.0
    %1700 = vmatprep.subr.mxu0 0.0
    %1701 = vmatpush1.msra.mxu0 0.0
    %1702 = vmatprep.subr.mxu0 0.0
    %1703 = vmatpush1.msra.mxu0 0.0
    %1704 = vmatprep.subr.mxu0 0.0
    %1705 = vmatpush1.msra.mxu0 0.0
    %1706 = vmatprep.subr.mxu0 0.0
    %1707 = vmatpush1.msra.mxu0 0.0
    %1708 = vmatprep.subr.mxu0 0.0
    %1709 = vmatpush1.msra.mxu0 0.0
    %1710 = vmatprep.subr.mxu0 0.0
    %1711 = vmatpush1.msra.mxu0 0.0
    %1712 = vmatprep.subr.mxu0 0.0
    %1713 = vmatpush1.msra.mxu0 0.0
    %1714 = vmatprep.subr.mxu0 0.0
    %1715 = vmatpush1.msra.mxu0 0.0
    %1716 = vmatprep.subr.mxu0 0.0
    %1717 = vmatpush1.msra.mxu0 0.0
    %1718 = vmatprep.subr.mxu0 0.0
    %1719 = vmatpush1.msra.mxu0 0.0
    %1720 = vmatprep.subr.mxu0 0.0
    %1721 = vmatpush1.msra.mxu0 0.0
    %1722 = vmatprep.subr.mxu0 0.0
    %1723 = vmatpush1.msra.mxu0 0.0
    %1724 = vmatprep.subr.mxu0 0.0
    %1725 = vmatpush1.msra.mxu0 0.0
    %1726 = vmatprep.subr.mxu0 0.0
    %1727 = vmatpush1.msra.mxu0 0.0
    %1728 = vmatprep.mubr.f32.mxu0 0.0
    %1729 = vmatmul.mubr.f32.gmra.mrb[0].mxu0 %v1662
    %v1730 = vpop.f32.mrb[0].mxu0
    %v1731 = vadd.f32 0.0, %v1730
    %v1732 = vpop.f32.mrb[0].mxu0
    %1733 = vdwg.mxu0
    %1734 = vrot.lane.b32.xlu0 %v188, 64
    %v1735 = vpop.permute.xlu0 %1734
    %v1738 = vsel %vm267, %v1643, 0
    %1740 = vmatprep.subr.mxu0 0.0
    %1741 = vmatpush1.msra.mxu0 %v1735
    %1742 = vmatprep.subr.mxu0 0.0
    %1743 = vmatpush1.msra.mxu0 0.0
    %1744 = vmatprep.subr.mxu0 0.0
    %1745 = vmatpush1.msra.mxu0 0.0
    %1746 = vmatprep.subr.mxu0 0.0
    %1747 = vmatpush1.msra.mxu0 0.0
    %1748 = vmatprep.subr.mxu0 0.0
    %1749 = vmatpush1.msra.mxu0 0.0
    %1750 = vmatprep.subr.mxu0 0.0
    %1751 = vmatpush1.msra.mxu0 0.0
    %1752 = vmatprep.subr.mxu0 0.0
    %1753 = vmatpush1.msra.mxu0 0.0
    %1754 = vmatprep.subr.mxu0 0.0
    %1755 = vmatpush1.msra.mxu0 0.0
    %1756 = vmatprep.subr.mxu0 0.0
    %1757 = vmatpush1.msra.mxu0 0.0
    %1758 = vmatprep.subr.mxu0 0.0
    %1759 = vmatpush1.msra.mxu0 0.0
    %1760 = vmatprep.subr.mxu0 0.0
    %1761 = vmatpush1.msra.mxu0 0.0
    %1762 = vmatprep.subr.mxu0 0.0
    %1763 = vmatpush1.msra.mxu0 0.0
    %1764 = vmatprep.subr.mxu0 0.0
    %1765 = vmatpush1.msra.mxu0 0.0
    %1766 = vmatprep.subr.mxu0 0.0
    %1767 = vmatpush1.msra.mxu0 0.0
    %1768 = vmatprep.subr.mxu0 0.0
    %1769 = vmatpush1.msra.mxu0 0.0
    %1770 = vmatprep.subr.mxu0 0.0
    %1771 = vmatpush1.msra.mxu0 0.0
    %1772 = vmatprep.subr.mxu0 0.0
    %1773 = vmatpush1.msra.mxu0 0.0
    %1774 = vmatprep.subr.mxu0 0.0
    %1775 = vmatpush1.msra.mxu0 0.0
    %1776 = vmatprep.subr.mxu0 0.0
    %1777 = vmatpush1.msra.mxu0 0.0
    %1778 = vmatprep.subr.mxu0 0.0
    %1779 = vmatpush1.msra.mxu0 0.0
    %1780 = vmatprep.subr.mxu0 0.0
    %1781 = vmatpush1.msra.mxu0 0.0
    %1782 = vmatprep.subr.mxu0 0.0
    %1783 = vmatpush1.msra.mxu0 0.0
    %1784 = vmatprep.subr.mxu0 0.0
    %1785 = vmatpush1.msra.mxu0 0.0
    %1786 = vmatprep.subr.mxu0 0.0
    %1787 = vmatpush1.msra.mxu0 0.0
    %1788 = vmatprep.subr.mxu0 0.0
    %1789 = vmatpush1.msra.mxu0 0.0
    %1790 = vmatprep.subr.mxu0 0.0
    %1791 = vmatpush1.msra.mxu0 0.0
    %1792 = vmatprep.subr.mxu0 0.0
    %1793 = vmatpush1.msra.mxu0 0.0
    %1794 = vmatprep.subr.mxu0 0.0
    %1795 = vmatpush1.msra.mxu0 0.0
    %1796 = vmatprep.subr.mxu0 0.0
    %1797 = vmatpush1.msra.mxu0 0.0
    %1798 = vmatprep.subr.mxu0 0.0
    %1799 = vmatpush1.msra.mxu0 0.0
    %1800 = vmatprep.subr.mxu0 0.0
    %1801 = vmatpush1.msra.mxu0 0.0
    %1802 = vmatprep.subr.mxu0 0.0
    %1803 = vmatpush1.msra.mxu0 0.0
    %1804 = vmatprep.mubr.f32.mxu0 0.0
    %1805 = vmatmul.mubr.f32.gmra.mrb[0].mxu0 %v1738
    %v1806 = vpop.f32.mrb[0].mxu0
    %v1807 = vadd.f32 0.0, %v1806
    %v1808 = vpop.f32.mrb[0].mxu0
    %1809 = vdwg.mxu0
    %1810 = vrot.lane.b32.xlu0 %v193, 64
    %v1811 = vpop.permute.xlu0 %1810
    %v1814 = vsel %vm267, %v1644, 0
    %1816 = vmatprep.subr.mxu0 0.0
    %1817 = vmatpush1.msra.mxu0 %v1811
    %1818 = vmatprep.subr.mxu0 0.0
    %1819 = vmatpush1.msra.mxu0 0.0
    %1820 = vmatprep.subr.mxu0 0.0
    %1821 = vmatpush1.msra.mxu0 0.0
    %1822 = vmatprep.subr.mxu0 0.0
    %1823 = vmatpush1.msra.mxu0 0.0
    %1824 = vmatprep.subr.mxu0 0.0
    %1825 = vmatpush1.msra.mxu0 0.0
    %1826 = vmatprep.subr.mxu0 0.0
    %1827 = vmatpush1.msra.mxu0 0.0
    %1828 = vmatprep.subr.mxu0 0.0
    %1829 = vmatpush1.msra.mxu0 0.0
    %1830 = vmatprep.subr.mxu0 0.0
    %1831 = vmatpush1.msra.mxu0 0.0
    %1832 = vmatprep.subr.mxu0 0.0
    %1833 = vmatpush1.msra.mxu0 0.0
    %1834 = vmatprep.subr.mxu0 0.0
    %1835 = vmatpush1.msra.mxu0 0.0
    %1836 = vmatprep.subr.mxu0 0.0
    %1837 = vmatpush1.msra.mxu0 0.0
    %1838 = vmatprep.subr.mxu0 0.0
    %1839 = vmatpush1.msra.mxu0 0.0
    %1840 = vmatprep.subr.mxu0 0.0
    %1841 = vmatpush1.msra.mxu0 0.0
    %1842 = vmatprep.subr.mxu0 0.0
    %1843 = vmatpush1.msra.mxu0 0.0
    %1844 = vmatprep.subr.mxu0 0.0
    %1845 = vmatpush1.msra.mxu0 0.0
    %1846 = vmatprep.subr.mxu0 0.0
    %1847 = vmatpush1.msra.mxu0 0.0
    %1848 = vmatprep.subr.mxu0 0.0
    %1849 = vmatpush1.msra.mxu0 0.0
    %1850 = vmatprep.subr.mxu0 0.0
    %1851 = vmatpush1.msra.mxu0 0.0
    %1852 = vmatprep.subr.mxu0 0.0
    %1853 = vmatpush1.msra.mxu0 0.0
    %1854 = vmatprep.subr.mxu0 0.0
    %1855 = vmatpush1.msra.mxu0 0.0
    %1856 = vmatprep.subr.mxu0 0.0
    %1857 = vmatpush1.msra.mxu0 0.0
    %1858 = vmatprep.subr.mxu0 0.0
    %1859 = vmatpush1.msra.mxu0 0.0
    %1860 = vmatprep.subr.mxu0 0.0
    %1861 = vmatpush1.msra.mxu0 0.0
    %1862 = vmatprep.subr.mxu0 0.0
    %1863 = vmatpush1.msra.mxu0 0.0
    %1864 = vmatprep.subr.mxu0 0.0
    %1865 = vmatpush1.msra.mxu0 0.0
    %1866 = vmatprep.subr.mxu0 0.0
    %1867 = vmatpush1.msra.mxu0 0.0
    %1868 = vmatprep.subr.mxu0 0.0
    %1869 = vmatpush1.msra.mxu0 0.0
    %1870 = vmatprep.subr.mxu0 0.0
    %1871 = vmatpush1.msra.mxu0 0.0
    %1872 = vmatprep.subr.mxu0 0.0
    %1873 = vmatpush1.msra.mxu0 0.0
    %1874 = vmatprep.subr.mxu0 0.0
    %1875 = vmatpush1.msra.mxu0 0.0
    %1876 = vmatprep.subr.mxu0 0.0
    %1877 = vmatpush1.msra.mxu0 0.0
    %1878 = vmatprep.subr.mxu0 0.0
    %1879 = vmatpush1.msra.mxu0 0.0
    %1880 = vmatprep.mubr.f32.mxu0 0.0
    %1881 = vmatmul.mubr.f32.gmra.mrb[0].mxu0 %v1814
    %v1882 = vpop.f32.mrb[0].mxu0
    %v1883 = vadd.f32 0.0, %v1882
    %v1884 = vpop.f32.mrb[0].mxu0
    %1885 = vdwg.mxu0
    %1886 = vrot.lane.b32.xlu0 %v198, 64
    %v1887 = vpop.permute.xlu0 %1886
    %v1890 = vsel %vm267, %v1645, 0
    %1892 = vmatprep.subr.mxu0 0.0
    %1893 = vmatpush1.msra.mxu0 %v1887
    %1894 = vmatprep.subr.mxu0 0.0
    %1895 = vmatpush1.msra.mxu0 0.0
    %1896 = vmatprep.subr.mxu0 0.0
    %1897 = vmatpush1.msra.mxu0 0.0
    %1898 = vmatprep.subr.mxu0 0.0
    %1899 = vmatpush1.msra.mxu0 0.0
    %1900 = vmatprep.subr.mxu0 0.0
    %1901 = vmatpush1.msra.mxu0 0.0
    %1902 = vmatprep.subr.mxu0 0.0
    %1903 = vmatpush1.msra.mxu0 0.0
    %1904 = vmatprep.subr.mxu0 0.0
    %1905 = vmatpush1.msra.mxu0 0.0
    %1906 = vmatprep.subr.mxu0 0.0
    %1907 = vmatpush1.msra.mxu0 0.0
    %1908 = vmatprep.subr.mxu0 0.0
    %1909 = vmatpush1.msra.mxu0 0.0
    %1910 = vmatprep.subr.mxu0 0.0
    %1911 = vmatpush1.msra.mxu0 0.0
    %1912 = vmatprep.subr.mxu0 0.0
    %1913 = vmatpush1.msra.mxu0 0.0
    %1914 = vmatprep.subr.mxu0 0.0
    %1915 = vmatpush1.msra.mxu0 0.0
    %1916 = vmatprep.subr.mxu0 0.0
    %1917 = vmatpush1.msra.mxu0 0.0
    %1918 = vmatprep.subr.mxu0 0.0
    %1919 = vmatpush1.msra.mxu0 0.0
    %1920 = vmatprep.subr.mxu0 0.0
    %1921 = vmatpush1.msra.mxu0 0.0
    %1922 = vmatprep.subr.mxu0 0.0
    %1923 = vmatpush1.msra.mxu0 0.0
    %1924 = vmatprep.subr.mxu0 0.0
    %1925 = vmatpush1.msra.mxu0 0.0
    %1926 = vmatprep.subr.mxu0 0.0
    %1927 = vmatpush1.msra.mxu0 0.0
    %1928 = vmatprep.subr.mxu0 0.0
    %1929 = vmatpush1.msra.mxu0 0.0
    %1930 = vmatprep.subr.mxu0 0.0
    %1931 = vmatpush1.msra.mxu0 0.0
    %1932 = vmatprep.subr.mxu0 0.0
    %1933 = vmatpush1.msra.mxu0 0.0
    %1934 = vmatprep.subr.mxu0 0.0
    %1935 = vmatpush1.msra.mxu0 0.0
    %1936 = vmatprep.subr.mxu0 0.0
    %1937 = vmatpush1.msra.mxu0 0.0
    %1938 = vmatprep.subr.mxu0 0.0
    %1939 = vmatpush1.msra.mxu0 0.0
    %1940 = vmatprep.subr.mxu0 0.0
    %1941 = vmatpush1.msra.mxu0 0.0
    %1942 = vmatprep.subr.mxu0 0.0
    %1943 = vmatpush1.msra.mxu0 0.0
    %1944 = vmatprep.subr.mxu0 0.0
    %1945 = vmatpush1.msra.mxu0 0.0
    %1946 = vmatprep.subr.mxu0 0.0
    %1947 = vmatpush1.msra.mxu0 0.0
    %1948 = vmatprep.subr.mxu0 0.0
    %1949 = vmatpush1.msra.mxu0 0.0
    %1950 = vmatprep.subr.mxu0 0.0
    %1951 = vmatpush1.msra.mxu0 0.0
    %1952 = vmatprep.subr.mxu0 0.0
    %1953 = vmatpush1.msra.mxu0 0.0
    %1954 = vmatprep.subr.mxu0 0.0
    %1955 = vmatpush1.msra.mxu0 0.0
    %1956 = vmatprep.mubr.f32.mxu0 0.0
    %1957 = vmatmul.mubr.f32.gmra.mrb[0].mxu0 %v1890
    %v1958 = vpop.f32.mrb[0].mxu0
    %v1959 = vadd.f32 0.0, %v1958
    %v1960 = vpop.f32.mrb[0].mxu0
    %1961 = vdwg.mxu0
    %1962 = vrot.lane.b32.xlu0 %v238, 64
    %v1963 = vpop.permute.xlu0 %1962
    %v1966 = vsel %vm267, %v1646, 0
    %1968 = vmatprep.subr.mxu0 0.0
    %1969 = vmatpush1.msra.mxu0 %v1963
    %1970 = vmatprep.subr.mxu0 0.0
    %1971 = vmatpush1.msra.mxu0 0.0
    %1972 = vmatprep.subr.mxu0 0.0
    %1973 = vmatpush1.msra.mxu0 0.0
    %1974 = vmatprep.subr.mxu0 0.0
    %1975 = vmatpush1.msra.mxu0 0.0
    %1976 = vmatprep.subr.mxu0 0.0
    %1977 = vmatpush1.msra.mxu0 0.0
    %1978 = vmatprep.subr.mxu0 0.0
    %1979 = vmatpush1.msra.mxu0 0.0
    %1980 = vmatprep.subr.mxu0 0.0
    %1981 = vmatpush1.msra.mxu0 0.0
    %1982 = vmatprep.subr.mxu0 0.0
    %1983 = vmatpush1.msra.mxu0 0.0
    %1984 = vmatprep.subr.mxu0 0.0
    %1985 = vmatpush1.msra.mxu0 0.0
    %1986 = vmatprep.subr.mxu0 0.0
    %1987 = vmatpush1.msra.mxu0 0.0
    %1988 = vmatprep.subr.mxu0 0.0
    %1989 = vmatpush1.msra.mxu0 0.0
    %1990 = vmatprep.subr.mxu0 0.0
    %1991 = vmatpush1.msra.mxu0 0.0
    %1992 = vmatprep.subr.mxu0 0.0
    %1993 = vmatpush1.msra.mxu0 0.0
    %1994 = vmatprep.subr.mxu0 0.0
    %1995 = vmatpush1.msra.mxu0 0.0
    %1996 = vmatprep.subr.mxu0 0.0
    %1997 = vmatpush1.msra.mxu0 0.0
    %1998 = vmatprep.subr.mxu0 0.0
    %1999 = vmatpush1.msra.mxu0 0.0
    %2000 = vmatprep.subr.mxu0 0.0
    %2001 = vmatpush1.msra.mxu0 0.0
    %2002 = vmatprep.subr.mxu0 0.0
    %2003 = vmatpush1.msra.mxu0 0.0
    %2004 = vmatprep.subr.mxu0 0.0
    %2005 = vmatpush1.msra.mxu0 0.0
    %2006 = vmatprep.subr.mxu0 0.0
    %2007 = vmatpush1.msra.mxu0 0.0
    %2008 = vmatprep.subr.mxu0 0.0
    %2009 = vmatpush1.msra.mxu0 0.0
    %2010 = vmatprep.subr.mxu0 0.0
    %2011 = vmatpush1.msra.mxu0 0.0
    %2012 = vmatprep.subr.mxu0 0.0
    %2013 = vmatpush1.msra.mxu0 0.0
    %2014 = vmatprep.subr.mxu0 0.0
    %2015 = vmatpush1.msra.mxu0 0.0
    %2016 = vmatprep.subr.mxu0 0.0
    %2017 = vmatpush1.msra.mxu0 0.0
    %2018 = vmatprep.subr.mxu0 0.0
    %2019 = vmatpush1.msra.mxu0 0.0
    %2020 = vmatprep.subr.mxu0 0.0
    %2021 = vmatpush1.msra.mxu0 0.0
    %2022 = vmatprep.subr.mxu0 0.0
    %2023 = vmatpush1.msra.mxu0 0.0
    %2024 = vmatprep.subr.mxu0 0.0
    %2025 = vmatpush1.msra.mxu0 0.0
    %2026 = vmatprep.subr.mxu0 0.0
    %2027 = vmatpush1.msra.mxu0 0.0
    %2028 = vmatprep.subr.mxu0 0.0
    %2029 = vmatpush1.msra.mxu0 0.0
    %2030 = vmatprep.subr.mxu0 0.0
    %2031 = vmatpush1.msra.mxu0 0.0
    %2032 = vmatprep.mubr.f32.mxu0 0.0
    %2033 = vmatmul.mubr.f32.gmra.mrb[0].mxu0 %v1966
    %v2034 = vpop.f32.mrb[0].mxu0
    %v2035 = vadd.f32 0.0, %v2034
    %v2036 = vpop.f32.mrb[0].mxu0
    %2037 = vdwg.mxu0
    %2038 = vrot.lane.b32.xlu0 %v240, 64
    %v2039 = vpop.permute.xlu0 %2038
    %v2042 = vsel %vm267, %v1647, 0
    %2044 = vmatprep.subr.mxu0 0.0
    %2045 = vmatpush1.msra.mxu0 %v2039
    %2046 = vmatprep.subr.mxu0 0.0
    %2047 = vmatpush1.msra.mxu0 0.0
    %2048 = vmatprep.subr.mxu0 0.0
    %2049 = vmatpush1.msra.mxu0 0.0
    %2050 = vmatprep.subr.mxu0 0.0
    %2051 = vmatpush1.msra.mxu0 0.0
    %2052 = vmatprep.subr.mxu0 0.0
    %2053 = vmatpush1.msra.mxu0 0.0
    %2054 = vmatprep.subr.mxu0 0.0
    %2055 = vmatpush1.msra.mxu0 0.0
    %2056 = vmatprep.subr.mxu0 0.0
    %2057 = vmatpush1.msra.mxu0 0.0
    %2058 = vmatprep.subr.mxu0 0.0
    %2059 = vmatpush1.msra.mxu0 0.0
    %2060 = vmatprep.subr.mxu0 0.0
    %2061 = vmatpush1.msra.mxu0 0.0
    %2062 = vmatprep.subr.mxu0 0.0
    %2063 = vmatpush1.msra.mxu0 0.0
    %2064 = vmatprep.subr.mxu0 0.0
    %2065 = vmatpush1.msra.mxu0 0.0
    %2066 = vmatprep.subr.mxu0 0.0
    %2067 = vmatpush1.msra.mxu0 0.0
    %2068 = vmatprep.subr.mxu0 0.0
    %2069 = vmatpush1.msra.mxu0 0.0
    %2070 = vmatprep.subr.mxu0 0.0
    %2071 = vmatpush1.msra.mxu0 0.0
    %2072 = vmatprep.subr.mxu0 0.0
    %2073 = vmatpush1.msra.mxu0 0.0
    %2074 = vmatprep.subr.mxu0 0.0
    %2075 = vmatpush1.msra.mxu0 0.0
    %2076 = vmatprep.subr.mxu0 0.0
    %2077 = vmatpush1.msra.mxu0 0.0
    %2078 = vmatprep.subr.mxu0 0.0
    %2079 = vmatpush1.msra.mxu0 0.0
    %2080 = vmatprep.subr.mxu0 0.0
    %2081 = vmatpush1.msra.mxu0 0.0
    %2082 = vmatprep.subr.mxu0 0.0
    %2083 = vmatpush1.msra.mxu0 0.0
    %2084 = vmatprep.subr.mxu0 0.0
    %2085 = vmatpush1.msra.mxu0 0.0
    %2086 = vmatprep.subr.mxu0 0.0
    %2087 = vmatpush1.msra.mxu0 0.0
    %2088 = vmatprep.subr.mxu0 0.0
    %2089 = vmatpush1.msra.mxu0 0.0
    %2090 = vmatprep.subr.mxu0 0.0
    %2091 = vmatpush1.msra.mxu0 0.0
    %2092 = vmatprep.subr.mxu0 0.0
    %2093 = vmatpush1.msra.mxu0 0.0
    %2094 = vmatprep.subr.mxu0 0.0
    %2095 = vmatpush1.msra.mxu0 0.0
    %2096 = vmatprep.subr.mxu0 0.0
    %2097 = vmatpush1.msra.mxu0 0.0
    %2098 = vmatprep.subr.mxu0 0.0
    %2099 = vmatpush1.msra.mxu0 0.0
    %2100 = vmatprep.subr.mxu0 0.0
    %2101 = vmatpush1.msra.mxu0 0.0
    %2102 = vmatprep.subr.mxu0 0.0
    %2103 = vmatpush1.msra.mxu0 0.0
    %2104 = vmatprep.subr.mxu0 0.0
    %2105 = vmatpush1.msra.mxu0 0.0
    %2106 = vmatprep.subr.mxu0 0.0
    %2107 = vmatpush1.msra.mxu0 0.0
    %2108 = vmatprep.mubr.f32.mxu0 0.0
    %2109 = vmatmul.mubr.f32.gmra.mrb[0].mxu0 %v2042
    %v2110 = vpop.f32.mrb[0].mxu0
    %v2111 = vadd.f32 0.0, %v2110
    %v2112 = vpop.f32.mrb[0].mxu0
    %2113 = vdwg.mxu0
    %2114 = vrot.lane.b32.xlu0 %v242, 64
    %v2115 = vpop.permute.xlu0 %2114
    %v2118 = vsel %vm267, %v1648, 0
    %2120 = vmatprep.subr.mxu0 0.0
    %2121 = vmatpush1.msra.mxu0 %v2115
    %2122 = vmatprep.subr.mxu0 0.0
    %2123 = vmatpush1.msra.mxu0 0.0
    %2124 = vmatprep.subr.mxu0 0.0
    %2125 = vmatpush1.msra.mxu0 0.0
    %2126 = vmatprep.subr.mxu0 0.0
    %2127 = vmatpush1.msra.mxu0 0.0
    %2128 = vmatprep.subr.mxu0 0.0
    %2129 = vmatpush1.msra.mxu0 0.0
    %2130 = vmatprep.subr.mxu0 0.0
    %2131 = vmatpush1.msra.mxu0 0.0
    %2132 = vmatprep.subr.mxu0 0.0
    %2133 = vmatpush1.msra.mxu0 0.0
    %2134 = vmatprep.subr.mxu0 0.0
    %2135 = vmatpush1.msra.mxu0 0.0
    %2136 = vmatprep.subr.mxu0 0.0
    %2137 = vmatpush1.msra.mxu0 0.0
    %2138 = vmatprep.subr.mxu0 0.0
    %2139 = vmatpush1.msra.mxu0 0.0
    %2140 = vmatprep.subr.mxu0 0.0
    %2141 = vmatpush1.msra.mxu0 0.0
    %2142 = vmatprep.subr.mxu0 0.0
    %2143 = vmatpush1.msra.mxu0 0.0
    %2144 = vmatprep.subr.mxu0 0.0
    %2145 = vmatpush1.msra.mxu0 0.0
    %2146 = vmatprep.subr.mxu0 0.0
    %2147 = vmatpush1.msra.mxu0 0.0
    %2148 = vmatprep.subr.mxu0 0.0
    %2149 = vmatpush1.msra.mxu0 0.0
    %2150 = vmatprep.subr.mxu0 0.0
    %2151 = vmatpush1.msra.mxu0 0.0
    %2152 = vmatprep.subr.mxu0 0.0
    %2153 = vmatpush1.msra.mxu0 0.0
    %2154 = vmatprep.subr.mxu0 0.0
    %2155 = vmatpush1.msra.mxu0 0.0
    %2156 = vmatprep.subr.mxu0 0.0
    %2157 = vmatpush1.msra.mxu0 0.0
    %2158 = vmatprep.subr.mxu0 0.0
    %2159 = vmatpush1.msra.mxu0 0.0
    %2160 = vmatprep.subr.mxu0 0.0
    %2161 = vmatpush1.msra.mxu0 0.0
    %2162 = vmatprep.subr.mxu0 0.0
    %2163 = vmatpush1.msra.mxu0 0.0
    %2164 = vmatprep.subr.mxu0 0.0
    %2165 = vmatpush1.msra.mxu0 0.0
    %2166 = vmatprep.subr.mxu0 0.0
    %2167 = vmatpush1.msra.mxu0 0.0
    %2168 = vmatprep.subr.mxu0 0.0
    %2169 = vmatpush1.msra.mxu0 0.0
    %2170 = vmatprep.subr.mxu0 0.0
    %2171 = vmatpush1.msra.mxu0 0.0
    %2172 = vmatprep.subr.mxu0 0.0
    %2173 = vmatpush1.msra.mxu0 0.0
    %2174 = vmatprep.subr.mxu0 0.0
    %2175 = vmatpush1.msra.mxu0 0.0
    %2176 = vmatprep.subr.mxu0 0.0
    %2177 = vmatpush1.msra.mxu0 0.0
    %2178 = vmatprep.subr.mxu0 0.0
    %2179 = vmatpush1.msra.mxu0 0.0
    %2180 = vmatprep.subr.mxu0 0.0
    %2181 = vmatpush1.msra.mxu0 0.0
    %2182 = vmatprep.subr.mxu0 0.0
    %2183 = vmatpush1.msra.mxu0 0.0
    %2184 = vmatprep.mubr.f32.mxu0 0.0
    %2185 = vmatmul.mubr.f32.gmra.mrb[0].mxu0 %v2118
    %v2186 = vpop.f32.mrb[0].mxu0
    %v2187 = vadd.f32 0.0, %v2186
    %v2188 = vpop.f32.mrb[0].mxu0
    %2189 = vdwg.mxu0
    %2190 = vrot.lane.b32.xlu0 %v244, 64
    %v2191 = vpop.permute.xlu0 %2190
    %v2194 = vsel %vm267, %v1649, 0
    %2196 = vmatprep.subr.mxu0 0.0
    %2197 = vmatpush1.msra.mxu0 %v2191
    %2198 = vmatprep.subr.mxu0 0.0
    %2199 = vmatpush1.msra.mxu0 0.0
    %2200 = vmatprep.subr.mxu0 0.0
    %2201 = vmatpush1.msra.mxu0 0.0
    %2202 = vmatprep.subr.mxu0 0.0
    %2203 = vmatpush1.msra.mxu0 0.0
    %2204 = vmatprep.subr.mxu0 0.0
    %2205 = vmatpush1.msra.mxu0 0.0
    %2206 = vmatprep.subr.mxu0 0.0
    %2207 = vmatpush1.msra.mxu0 0.0
    %2208 = vmatprep.subr.mxu0 0.0
    %2209 = vmatpush1.msra.mxu0 0.0
    %2210 = vmatprep.subr.mxu0 0.0
    %2211 = vmatpush1.msra.mxu0 0.0
    %2212 = vmatprep.subr.mxu0 0.0
    %2213 = vmatpush1.msra.mxu0 0.0
    %2214 = vmatprep.subr.mxu0 0.0
    %2215 = vmatpush1.msra.mxu0 0.0
    %2216 = vmatprep.subr.mxu0 0.0
    %2217 = vmatpush1.msra.mxu0 0.0
    %2218 = vmatprep.subr.mxu0 0.0
    %2219 = vmatpush1.msra.mxu0 0.0
    %2220 = vmatprep.subr.mxu0 0.0
    %2221 = vmatpush1.msra.mxu0 0.0
    %2222 = vmatprep.subr.mxu0 0.0
    %2223 = vmatpush1.msra.mxu0 0.0
    %2224 = vmatprep.subr.mxu0 0.0
    %2225 = vmatpush1.msra.mxu0 0.0
    %2226 = vmatprep.subr.mxu0 0.0
    %2227 = vmatpush1.msra.mxu0 0.0
    %2228 = vmatprep.subr.mxu0 0.0
    %2229 = vmatpush1.msra.mxu0 0.0
    %2230 = vmatprep.subr.mxu0 0.0
    %2231 = vmatpush1.msra.mxu0 0.0
    %2232 = vmatprep.subr.mxu0 0.0
    %2233 = vmatpush1.msra.mxu0 0.0
    %2234 = vmatprep.subr.mxu0 0.0
    %2235 = vmatpush1.msra.mxu0 0.0
    %2236 = vmatprep.subr.mxu0 0.0
    %2237 = vmatpush1.msra.mxu0 0.0
    %2238 = vmatprep.subr.mxu0 0.0
    %2239 = vmatpush1.msra.mxu0 0.0
    %2240 = vmatprep.subr.mxu0 0.0
    %2241 = vmatpush1.msra.mxu0 0.0
    %2242 = vmatprep.subr.mxu0 0.0
    %2243 = vmatpush1.msra.mxu0 0.0
    %2244 = vmatprep.subr.mxu0 0.0
    %2245 = vmatpush1.msra.mxu0 0.0
    %2246 = vmatprep.subr.mxu0 0.0
    %2247 = vmatpush1.msra.mxu0 0.0
    %2248 = vmatprep.subr.mxu0 0.0
    %2249 = vmatpush1.msra.mxu0 0.0
    %2250 = vmatprep.subr.mxu0 0.0
    %2251 = vmatpush1.msra.mxu0 0.0
    %2252 = vmatprep.subr.mxu0 0.0
    %2253 = vmatpush1.msra.mxu0 0.0
    %2254 = vmatprep.subr.mxu0 0.0
    %2255 = vmatpush1.msra.mxu0 0.0
    %2256 = vmatprep.subr.mxu0 0.0
    %2257 = vmatpush1.msra.mxu0 0.0
    %2258 = vmatprep.subr.mxu0 0.0
    %2259 = vmatpush1.msra.mxu0 0.0
    %2260 = vmatprep.mubr.f32.mxu0 0.0
    %2261 = vmatmul.mubr.f32.gmra.mrb[0].mxu0 %v2194
    %v2262 = vpop.f32.mrb[0].mxu0
    %v2263 = vadd.f32 0.0, %v2262
    %v2264 = vpop.f32.mrb[0].mxu0
    %2265 = vdwg.mxu0
    %2266 = vrot.lane.b32.xlu0 %v246, 64
    %v2267 = vpop.permute.xlu0 %2266
    %v2270 = vsel %vm267, %v1650, 0
    %2272 = vmatprep.subr.mxu0 0.0
    %2273 = vmatpush1.msra.mxu0 %v2267
    %2274 = vmatprep.subr.mxu0 0.0
    %2275 = vmatpush1.msra.mxu0 0.0
    %2276 = vmatprep.subr.mxu0 0.0
    %2277 = vmatpush1.msra.mxu0 0.0
    %2278 = vmatprep.subr.mxu0 0.0
    %2279 = vmatpush1.msra.mxu0 0.0
    %2280 = vmatprep.subr.mxu0 0.0
    %2281 = vmatpush1.msra.mxu0 0.0
    %2282 = vmatprep.subr.mxu0 0.0
    %2283 = vmatpush1.msra.mxu0 0.0
    %2284 = vmatprep.subr.mxu0 0.0
    %2285 = vmatpush1.msra.mxu0 0.0
    %2286 = vmatprep.subr.mxu0 0.0
    %2287 = vmatpush1.msra.mxu0 0.0
    %2288 = vmatprep.subr.mxu0 0.0
    %2289 = vmatpush1.msra.mxu0 0.0
    %2290 = vmatprep.subr.mxu0 0.0
    %2291 = vmatpush1.msra.mxu0 0.0
    %2292 = vmatprep.subr.mxu0 0.0
    %2293 = vmatpush1.msra.mxu0 0.0
    %2294 = vmatprep.subr.mxu0 0.0
    %2295 = vmatpush1.msra.mxu0 0.0
    %2296 = vmatprep.subr.mxu0 0.0
    %2297 = vmatpush1.msra.mxu0 0.0
    %2298 = vmatprep.subr.mxu0 0.0
    %2299 = vmatpush1.msra.mxu0 0.0
    %2300 = vmatprep.subr.mxu0 0.0
    %2301 = vmatpush1.msra.mxu0 0.0
    %2302 = vmatprep.subr.mxu0 0.0
    %2303 = vmatpush1.msra.mxu0 0.0
    %2304 = vmatprep.subr.mxu0 0.0
    %2305 = vmatpush1.msra.mxu0 0.0
    %2306 = vmatprep.subr.mxu0 0.0
    %2307 = vmatpush1.msra.mxu0 0.0
    %2308 = vmatprep.subr.mxu0 0.0
    %2309 = vmatpush1.msra.mxu0 0.0
    %2310 = vmatprep.subr.mxu0 0.0
    %2311 = vmatpush1.msra.mxu0 0.0
    %2312 = vmatprep.subr.mxu0 0.0
    %2313 = vmatpush1.msra.mxu0 0.0
    %2314 = vmatprep.subr.mxu0 0.0
    %2315 = vmatpush1.msra.mxu0 0.0
    %2316 = vmatprep.subr.mxu0 0.0
    %2317 = vmatpush1.msra.mxu0 0.0
    %2318 = vmatprep.subr.mxu0 0.0
    %2319 = vmatpush1.msra.mxu0 0.0
    %2320 = vmatprep.subr.mxu0 0.0
    %2321 = vmatpush1.msra.mxu0 0.0
    %2322 = vmatprep.subr.mxu0 0.0
    %2323 = vmatpush1.msra.mxu0 0.0
    %2324 = vmatprep.subr.mxu0 0.0
    %2325 = vmatpush1.msra.mxu0 0.0
    %2326 = vmatprep.subr.mxu0 0.0
    %2327 = vmatpush1.msra.mxu0 0.0
    %2328 = vmatprep.subr.mxu0 0.0
    %2329 = vmatpush1.msra.mxu0 0.0
    %2330 = vmatprep.subr.mxu0 0.0
    %2331 = vmatpush1.msra.mxu0 0.0
    %2332 = vmatprep.subr.mxu0 0.0
    %2333 = vmatpush1.msra.mxu0 0.0
    %2334 = vmatprep.subr.mxu0 0.0
    %2335 = vmatpush1.msra.mxu0 0.0
    %2336 = vmatprep.mubr.f32.mxu0 0.0
    %2337 = vmatmul.mubr.f32.gmra.mrb[0].mxu0 %v2270
    %v2338 = vpop.f32.mrb[0].mxu0
    %v2339 = vadd.f32 0.0, %v2338
    %v2340 = vpop.f32.mrb[0].mxu0
    %2341 = vdwg.mxu0
    %2342 = vrot.lane.b32.xlu0 %v248, 64
    %v2343 = vpop.permute.xlu0 %2342
    %v2346 = vsel %vm267, %v1651, 0
    %2348 = vmatprep.subr.mxu0 0.0
    %2349 = vmatpush1.msra.mxu0 %v2343
    %2350 = vmatprep.subr.mxu0 0.0
    %2351 = vmatpush1.msra.mxu0 0.0
    %2352 = vmatprep.subr.mxu0 0.0
    %2353 = vmatpush1.msra.mxu0 0.0
    %2354 = vmatprep.subr.mxu0 0.0
    %2355 = vmatpush1.msra.mxu0 0.0
    %2356 = vmatprep.subr.mxu0 0.0
    %2357 = vmatpush1.msra.mxu0 0.0
    %2358 = vmatprep.subr.mxu0 0.0
    %2359 = vmatpush1.msra.mxu0 0.0
    %2360 = vmatprep.subr.mxu0 0.0
    %2361 = vmatpush1.msra.mxu0 0.0
    %2362 = vmatprep.subr.mxu0 0.0
    %2363 = vmatpush1.msra.mxu0 0.0
    %2364 = vmatprep.subr.mxu0 0.0
    %2365 = vmatpush1.msra.mxu0 0.0
    %2366 = vmatprep.subr.mxu0 0.0
    %2367 = vmatpush1.msra.mxu0 0.0
    %2368 = vmatprep.subr.mxu0 0.0
    %2369 = vmatpush1.msra.mxu0 0.0
    %2370 = vmatprep.subr.mxu0 0.0
    %2371 = vmatpush1.msra.mxu0 0.0
    %2372 = vmatprep.subr.mxu0 0.0
    %2373 = vmatpush1.msra.mxu0 0.0
    %2374 = vmatprep.subr.mxu0 0.0
    %2375 = vmatpush1.msra.mxu0 0.0
    %2376 = vmatprep.subr.mxu0 0.0
    %2377 = vmatpush1.msra.mxu0 0.0
    %2378 = vmatprep.subr.mxu0 0.0
    %2379 = vmatpush1.msra.mxu0 0.0
    %2380 = vmatprep.subr.mxu0 0.0
    %2381 = vmatpush1.msra.mxu0 0.0
    %2382 = vmatprep.subr.mxu0 0.0
    %2383 = vmatpush1.msra.mxu0 0.0
    %2384 = vmatprep.subr.mxu0 0.0
    %2385 = vmatpush1.msra.mxu0 0.0
    %2386 = vmatprep.subr.mxu0 0.0
    %2387 = vmatpush1.msra.mxu0 0.0
    %2388 = vmatprep.subr.mxu0 0.0
    %2389 = vmatpush1.msra.mxu0 0.0
    %2390 = vmatprep.subr.mxu0 0.0
    %2391 = vmatpush1.msra.mxu0 0.0
    %2392 = vmatprep.subr.mxu0 0.0
    %2393 = vmatpush1.msra.mxu0 0.0
    %2394 = vmatprep.subr.mxu0 0.0
    %2395 = vmatpush1.msra.mxu0 0.0
    %2396 = vmatprep.subr.mxu0 0.0
    %2397 = vmatpush1.msra.mxu0 0.0
    %2398 = vmatprep.subr.mxu0 0.0
    %2399 = vmatpush1.msra.mxu0 0.0
    %2400 = vmatprep.subr.mxu0 0.0
    %2401 = vmatpush1.msra.mxu0 0.0
    %2402 = vmatprep.subr.mxu0 0.0
    %2403 = vmatpush1.msra.mxu0 0.0
    %2404 = vmatprep.subr.mxu0 0.0
    %2405 = vmatpush1.msra.mxu0 0.0
    %2406 = vmatprep.subr.mxu0 0.0
    %2407 = vmatpush1.msra.mxu0 0.0
    %2408 = vmatprep.subr.mxu0 0.0
    %2409 = vmatpush1.msra.mxu0 0.0
    %2410 = vmatprep.subr.mxu0 0.0
    %2411 = vmatpush1.msra.mxu0 0.0
    %2412 = vmatprep.mubr.f32.mxu0 0.0
    %2413 = vmatmul.mubr.f32.gmra.mrb[0].mxu0 %v2346
    %v2414 = vpop.f32.mrb[0].mxu0
    %v2415 = vadd.f32 0.0, %v2414
    %v2416 = vpop.f32.mrb[0].mxu0
    %2417 = vdwg.mxu0
    %2418 = vrot.lane.b32.xlu0 %v250, 64
    %v2419 = vpop.permute.xlu0 %2418
    %v2422 = vsel %vm267, %v1652, 0
    %2424 = vmatprep.subr.mxu0 0.0
    %2425 = vmatpush1.msra.mxu0 %v2419
    %2426 = vmatprep.subr.mxu0 0.0
    %2427 = vmatpush1.msra.mxu0 0.0
    %2428 = vmatprep.subr.mxu0 0.0
    %2429 = vmatpush1.msra.mxu0 0.0
    %2430 = vmatprep.subr.mxu0 0.0
    %2431 = vmatpush1.msra.mxu0 0.0
    %2432 = vmatprep.subr.mxu0 0.0
    %2433 = vmatpush1.msra.mxu0 0.0
    %2434 = vmatprep.subr.mxu0 0.0
    %2435 = vmatpush1.msra.mxu0 0.0
    %2436 = vmatprep.subr.mxu0 0.0
    %2437 = vmatpush1.msra.mxu0 0.0
    %2438 = vmatprep.subr.mxu0 0.0
    %2439 = vmatpush1.msra.mxu0 0.0
    %2440 = vmatprep.subr.mxu0 0.0
    %2441 = vmatpush1.msra.mxu0 0.0
    %2442 = vmatprep.subr.mxu0 0.0
    %2443 = vmatpush1.msra.mxu0 0.0
    %2444 = vmatprep.subr.mxu0 0.0
    %2445 = vmatpush1.msra.mxu0 0.0
    %2446 = vmatprep.subr.mxu0 0.0
    %2447 = vmatpush1.msra.mxu0 0.0
    %2448 = vmatprep.subr.mxu0 0.0
    %2449 = vmatpush1.msra.mxu0 0.0
    %2450 = vmatprep.subr.mxu0 0.0
    %2451 = vmatpush1.msra.mxu0 0.0
    %2452 = vmatprep.subr.mxu0 0.0
    %2453 = vmatpush1.msra.mxu0 0.0
    %2454 = vmatprep.subr.mxu0 0.0
    %2455 = vmatpush1.msra.mxu0 0.0
    %2456 = vmatprep.subr.mxu0 0.0
    %2457 = vmatpush1.msra.mxu0 0.0
    %2458 = vmatprep.subr.mxu0 0.0
    %2459 = vmatpush1.msra.mxu0 0.0
    %2460 = vmatprep.subr.mxu0 0.0
    %2461 = vmatpush1.msra.mxu0 0.0
    %2462 = vmatprep.subr.mxu0 0.0
    %2463 = vmatpush1.msra.mxu0 0.0
    %2464 = vmatprep.subr.mxu0 0.0
    %2465 = vmatpush1.msra.mxu0 0.0
    %2466 = vmatprep.subr.mxu0 0.0
    %2467 = vmatpush1.msra.mxu0 0.0
    %2468 = vmatprep.subr.mxu0 0.0
    %2469 = vmatpush1.msra.mxu0 0.0
    %2470 = vmatprep.subr.mxu0 0.0
    %2471 = vmatpush1.msra.mxu0 0.0
    %2472 = vmatprep.subr.mxu0 0.0
    %2473 = vmatpush1.msra.mxu0 0.0
    %2474 = vmatprep.subr.mxu0 0.0
    %2475 = vmatpush1.msra.mxu0 0.0
    %2476 = vmatprep.subr.mxu0 0.0
    %2477 = vmatpush1.msra.mxu0 0.0
    %2478 = vmatprep.subr.mxu0 0.0
    %2479 = vmatpush1.msra.mxu0 0.0
    %2480 = vmatprep.subr.mxu0 0.0
    %2481 = vmatpush1.msra.mxu0 0.0
    %2482 = vmatprep.subr.mxu0 0.0
    %2483 = vmatpush1.msra.mxu0 0.0
    %2484 = vmatprep.subr.mxu0 0.0
    %2485 = vmatpush1.msra.mxu0 0.0
    %2486 = vmatprep.subr.mxu0 0.0
    %2487 = vmatpush1.msra.mxu0 0.0
    %2488 = vmatprep.mubr.f32.mxu0 0.0
    %2489 = vmatmul.mubr.f32.gmra.mrb[0].mxu0 %v2422
    %v2490 = vpop.f32.mrb[0].mxu0
    %v2491 = vadd.f32 0.0, %v2490
    %v2492 = vpop.f32.mrb[0].mxu0
    %2493 = vdwg.mxu0
    %2494 = vrot.lane.b32.xlu0 %v252, 64
    %v2495 = vpop.permute.xlu0 %2494
    %v2498 = vsel %vm267, %v1653, 0
    %2500 = vmatprep.subr.mxu0 0.0
    %2501 = vmatpush1.msra.mxu0 %v2495
    %2502 = vmatprep.subr.mxu0 0.0
    %2503 = vmatpush1.msra.mxu0 0.0
    %2504 = vmatprep.subr.mxu0 0.0
    %2505 = vmatpush1.msra.mxu0 0.0
    %2506 = vmatprep.subr.mxu0 0.0
    %2507 = vmatpush1.msra.mxu0 0.0
    %2508 = vmatprep.subr.mxu0 0.0
    %2509 = vmatpush1.msra.mxu0 0.0
    %2510 = vmatprep.subr.mxu0 0.0
    %2511 = vmatpush1.msra.mxu0 0.0
    %2512 = vmatprep.subr.mxu0 0.0
    %2513 = vmatpush1.msra.mxu0 0.0
    %2514 = vmatprep.subr.mxu0 0.0
    %2515 = vmatpush1.msra.mxu0 0.0
    %2516 = vmatprep.subr.mxu0 0.0
    %2517 = vmatpush1.msra.mxu0 0.0
    %2518 = vmatprep.subr.mxu0 0.0
    %2519 = vmatpush1.msra.mxu0 0.0
    %2520 = vmatprep.subr.mxu0 0.0
    %2521 = vmatpush1.msra.mxu0 0.0
    %2522 = vmatprep.subr.mxu0 0.0
    %2523 = vmatpush1.msra.mxu0 0.0
    %2524 = vmatprep.subr.mxu0 0.0
    %2525 = vmatpush1.msra.mxu0 0.0
    %2526 = vmatprep.subr.mxu0 0.0
    %2527 = vmatpush1.msra.mxu0 0.0
    %2528 = vmatprep.subr.mxu0 0.0
    %2529 = vmatpush1.msra.mxu0 0.0
    %2530 = vmatprep.subr.mxu0 0.0
    %2531 = vmatpush1.msra.mxu0 0.0
    %2532 = vmatprep.subr.mxu0 0.0
    %2533 = vmatpush1.msra.mxu0 0.0
    %2534 = vmatprep.subr.mxu0 0.0
    %2535 = vmatpush1.msra.mxu0 0.0
    %2536 = vmatprep.subr.mxu0 0.0
    %2537 = vmatpush1.msra.mxu0 0.0
    %2538 = vmatprep.subr.mxu0 0.0
    %2539 = vmatpush1.msra.mxu0 0.0
    %2540 = vmatprep.subr.mxu0 0.0
    %2541 = vmatpush1.msra.mxu0 0.0
    %2542 = vmatprep.subr.mxu0 0.0
    %2543 = vmatpush1.msra.mxu0 0.0
    %2544 = vmatprep.subr.mxu0 0.0
    %2545 = vmatpush1.msra.mxu0 0.0
    %2546 = vmatprep.subr.mxu0 0.0
    %2547 = vmatpush1.msra.mxu0 0.0
    %2548 = vmatprep.subr.mxu0 0.0
    %2549 = vmatpush1.msra.mxu0 0.0
    %2550 = vmatprep.subr.mxu0 0.0
    %2551 = vmatpush1.msra.mxu0 0.0
    %2552 = vmatprep.subr.mxu0 0.0
    %2553 = vmatpush1.msra.mxu0 0.0
    %2554 = vmatprep.subr.mxu0 0.0
    %2555 = vmatpush1.msra.mxu0 0.0
    %2556 = vmatprep.subr.mxu0 0.0
    %2557 = vmatpush1.msra.mxu0 0.0
    %2558 = vmatprep.subr.mxu0 0.0
    %2559 = vmatpush1.msra.mxu0 0.0
    %2560 = vmatprep.subr.mxu0 0.0
    %2561 = vmatpush1.msra.mxu0 0.0
    %2562 = vmatprep.subr.mxu0 0.0
    %2563 = vmatpush1.msra.mxu0 0.0
    %2564 = vmatprep.mubr.f32.mxu0 0.0
    %2565 = vmatmul.mubr.f32.gmra.mrb[0].mxu0 %v2498
    %v2566 = vpop.f32.mrb[0].mxu0
    %v2567 = vadd.f32 0.0, %v2566
    %v2568 = vpop.f32.mrb[0].mxu0
    %2569 = vdwg.mxu0
    %2570 = vrot.lane.b32.xlu0 %v254, 64
    %v2571 = vpop.permute.xlu0 %2570
    %v2574 = vsel %vm267, %v1654, 0
    %2576 = vmatprep.subr.mxu0 0.0
    %2577 = vmatpush1.msra.mxu0 %v2571
    %2578 = vmatprep.subr.mxu0 0.0
    %2579 = vmatpush1.msra.mxu0 0.0
    %2580 = vmatprep.subr.mxu0 0.0
    %2581 = vmatpush1.msra.mxu0 0.0
    %2582 = vmatprep.subr.mxu0 0.0
    %2583 = vmatpush1.msra.mxu0 0.0
    %2584 = vmatprep.subr.mxu0 0.0
    %2585 = vmatpush1.msra.mxu0 0.0
    %2586 = vmatprep.subr.mxu0 0.0
    %2587 = vmatpush1.msra.mxu0 0.0
    %2588 = vmatprep.subr.mxu0 0.0
    %2589 = vmatpush1.msra.mxu0 0.0
    %2590 = vmatprep.subr.mxu0 0.0
    %2591 = vmatpush1.msra.mxu0 0.0
    %2592 = vmatprep.subr.mxu0 0.0
    %2593 = vmatpush1.msra.mxu0 0.0
    %2594 = vmatprep.subr.mxu0 0.0
    %2595 = vmatpush1.msra.mxu0 0.0
    %2596 = vmatprep.subr.mxu0 0.0
    %2597 = vmatpush1.msra.mxu0 0.0
    %2598 = vmatprep.subr.mxu0 0.0
    %2599 = vmatpush1.msra.mxu0 0.0
    %2600 = vmatprep.subr.mxu0 0.0
    %2601 = vmatpush1.msra.mxu0 0.0
    %2602 = vmatprep.subr.mxu0 0.0
    %2603 = vmatpush1.msra.mxu0 0.0
    %2604 = vmatprep.subr.mxu0 0.0
    %2605 = vmatpush1.msra.mxu0 0.0
    %2606 = vmatprep.subr.mxu0 0.0
    %2607 = vmatpush1.msra.mxu0 0.0
    %2608 = vmatprep.subr.mxu0 0.0
    %2609 = vmatpush1.msra.mxu0 0.0
    %2610 = vmatprep.subr.mxu0 0.0
    %2611 = vmatpush1.msra.mxu0 0.0
    %2612 = vmatprep.subr.mxu0 0.0
    %2613 = vmatpush1.msra.mxu0 0.0
    %2614 = vmatprep.subr.mxu0 0.0
    %2615 = vmatpush1.msra.mxu0 0.0
    %2616 = vmatprep.subr.mxu0 0.0
    %2617 = vmatpush1.msra.mxu0 0.0
    %2618 = vmatprep.subr.mxu0 0.0
    %2619 = vmatpush1.msra.mxu0 0.0
    %2620 = vmatprep.subr.mxu0 0.0
    %2621 = vmatpush1.msra.mxu0 0.0
    %2622 = vmatprep.subr.mxu0 0.0
    %2623 = vmatpush1.msra.mxu0 0.0
    %2624 = vmatprep.subr.mxu0 0.0
    %2625 = vmatpush1.msra.mxu0 0.0
    %2626 = vmatprep.subr.mxu0 0.0
    %2627 = vmatpush1.msra.mxu0 0.0
    %2628 = vmatprep.subr.mxu0 0.0
    %2629 = vmatpush1.msra.mxu0 0.0
    %2630 = vmatprep.subr.mxu0 0.0
    %2631 = vmatpush1.msra.mxu0 0.0
    %2632 = vmatprep.subr.mxu0 0.0
    %2633 = vmatpush1.msra.mxu0 0.0
    %2634 = vmatprep.subr.mxu0 0.0
    %2635 = vmatpush1.msra.mxu0 0.0
    %2636 = vmatprep.subr.mxu0 0.0
    %2637 = vmatpush1.msra.mxu0 0.0
    %2638 = vmatprep.subr.mxu0 0.0
    %2639 = vmatpush1.msra.mxu0 0.0
    %2640 = vmatprep.mubr.f32.mxu0 0.0
    %2641 = vmatmul.mubr.f32.gmra.mrb[0].mxu0 %v2574
    %v2642 = vpop.f32.mrb[0].mxu0
    %v2643 = vadd.f32 0.0, %v2642
    %v2644 = vpop.f32.mrb[0].mxu0
    %2645 = vdwg.mxu0
    %2646 = vrot.lane.b32.xlu0 %v256, 64
    %v2647 = vpop.permute.xlu0 %2646
    %v2650 = vsel %vm267, %v1655, 0
    %2652 = vmatprep.subr.mxu0 0.0
    %2653 = vmatpush1.msra.mxu0 %v2647
    %2654 = vmatprep.subr.mxu0 0.0
    %2655 = vmatpush1.msra.mxu0 0.0
    %2656 = vmatprep.subr.mxu0 0.0
    %2657 = vmatpush1.msra.mxu0 0.0
    %2658 = vmatprep.subr.mxu0 0.0
    %2659 = vmatpush1.msra.mxu0 0.0
    %2660 = vmatprep.subr.mxu0 0.0
    %2661 = vmatpush1.msra.mxu0 0.0
    %2662 = vmatprep.subr.mxu0 0.0
    %2663 = vmatpush1.msra.mxu0 0.0
    %2664 = vmatprep.subr.mxu0 0.0
    %2665 = vmatpush1.msra.mxu0 0.0
    %2666 = vmatprep.subr.mxu0 0.0
    %2667 = vmatpush1.msra.mxu0 0.0
    %2668 = vmatprep.subr.mxu0 0.0
    %2669 = vmatpush1.msra.mxu0 0.0
    %2670 = vmatprep.subr.mxu0 0.0
    %2671 = vmatpush1.msra.mxu0 0.0
    %2672 = vmatprep.subr.mxu0 0.0
    %2673 = vmatpush1.msra.mxu0 0.0
    %2674 = vmatprep.subr.mxu0 0.0
    %2675 = vmatpush1.msra.mxu0 0.0
    %2676 = vmatprep.subr.mxu0 0.0
    %2677 = vmatpush1.msra.mxu0 0.0
    %2678 = vmatprep.subr.mxu0 0.0
    %2679 = vmatpush1.msra.mxu0 0.0
    %2680 = vmatprep.subr.mxu0 0.0
    %2681 = vmatpush1.msra.mxu0 0.0
    %2682 = vmatprep.subr.mxu0 0.0
    %2683 = vmatpush1.msra.mxu0 0.0
    %2684 = vmatprep.subr.mxu0 0.0
    %2685 = vmatpush1.msra.mxu0 0.0
    %2686 = vmatprep.subr.mxu0 0.0
    %2687 = vmatpush1.msra.mxu0 0.0
    %2688 = vmatprep.subr.mxu0 0.0
    %2689 = vmatpush1.msra.mxu0 0.0
    %2690 = vmatprep.subr.mxu0 0.0
    %2691 = vmatpush1.msra.mxu0 0.0
    %2692 = vmatprep.subr.mxu0 0.0
    %2693 = vmatpush1.msra.mxu0 0.0
    %2694 = vmatprep.subr.mxu0 0.0
    %2695 = vmatpush1.msra.mxu0 0.0
    %2696 = vmatprep.subr.mxu0 0.0
    %2697 = vmatpush1.msra.mxu0 0.0
    %2698 = vmatprep.subr.mxu0 0.0
    %2699 = vmatpush1.msra.mxu0 0.0
    %2700 = vmatprep.subr.mxu0 0.0
    %2701 = vmatpush1.msra.mxu0 0.0
    %2702 = vmatprep.subr.mxu0 0.0
    %2703 = vmatpush1.msra.mxu0 0.0
    %2704 = vmatprep.subr.mxu0 0.0
    %2705 = vmatpush1.msra.mxu0 0.0
    %2706 = vmatprep.subr.mxu0 0.0
    %2707 = vmatpush1.msra.mxu0 0.0
    %2708 = vmatprep.subr.mxu0 0.0
    %2709 = vmatpush1.msra.mxu0 0.0
    %2710 = vmatprep.subr.mxu0 0.0
    %2711 = vmatpush1.msra.mxu0 0.0
    %2712 = vmatprep.subr.mxu0 0.0
    %2713 = vmatpush1.msra.mxu0 0.0
    %2714 = vmatprep.subr.mxu0 0.0
    %2715 = vmatpush1.msra.mxu0 0.0
    %2716 = vmatprep.mubr.f32.mxu0 0.0
    %2717 = vmatmul.mubr.f32.gmra.mrb[0].mxu0 %v2650
    %v2718 = vpop.f32.mrb[0].mxu0
    %v2719 = vadd.f32 0.0, %v2718
    %v2720 = vpop.f32.mrb[0].mxu0
    %2721 = vdwg.mxu0
    %2722 = vrot.lane.b32.xlu0 %v258, 64
    %v2723 = vpop.permute.xlu0 %2722
    %v2726 = vsel %vm267, %v1656, 0
    %2728 = vmatprep.subr.mxu0 0.0
    %2729 = vmatpush1.msra.mxu0 %v2723
    %2730 = vmatprep.subr.mxu0 0.0
    %2731 = vmatpush1.msra.mxu0 0.0
    %2732 = vmatprep.subr.mxu0 0.0
    %2733 = vmatpush1.msra.mxu0 0.0
    %2734 = vmatprep.subr.mxu0 0.0
    %2735 = vmatpush1.msra.mxu0 0.0
    %2736 = vmatprep.subr.mxu0 0.0
    %2737 = vmatpush1.msra.mxu0 0.0
    %2738 = vmatprep.subr.mxu0 0.0
    %2739 = vmatpush1.msra.mxu0 0.0
    %2740 = vmatprep.subr.mxu0 0.0
    %2741 = vmatpush1.msra.mxu0 0.0
    %2742 = vmatprep.subr.mxu0 0.0
    %2743 = vmatpush1.msra.mxu0 0.0
    %2744 = vmatprep.subr.mxu0 0.0
    %2745 = vmatpush1.msra.mxu0 0.0
    %2746 = vmatprep.subr.mxu0 0.0
    %2747 = vmatpush1.msra.mxu0 0.0
    %2748 = vmatprep.subr.mxu0 0.0
    %2749 = vmatpush1.msra.mxu0 0.0
    %2750 = vmatprep.subr.mxu0 0.0
    %2751 = vmatpush1.msra.mxu0 0.0
    %2752 = vmatprep.subr.mxu0 0.0
    %2753 = vmatpush1.msra.mxu0 0.0
    %2754 = vmatprep.subr.mxu0 0.0
    %2755 = vmatpush1.msra.mxu0 0.0
    %2756 = vmatprep.subr.mxu0 0.0
    %2757 = vmatpush1.msra.mxu0 0.0
    %2758 = vmatprep.subr.mxu0 0.0
    %2759 = vmatpush1.msra.mxu0 0.0
    %2760 = vmatprep.subr.mxu0 0.0
    %2761 = vmatpush1.msra.mxu0 0.0
    %2762 = vmatprep.subr.mxu0 0.0
    %2763 = vmatpush1.msra.mxu0 0.0
    %2764 = vmatprep.subr.mxu0 0.0
    %2765 = vmatpush1.msra.mxu0 0.0
    %2766 = vmatprep.subr.mxu0 0.0
    %2767 = vmatpush1.msra.mxu0 0.0
    %2768 = vmatprep.subr.mxu0 0.0
    %2769 = vmatpush1.msra.mxu0 0.0
    %2770 = vmatprep.subr.mxu0 0.0
    %2771 = vmatpush1.msra.mxu0 0.0
    %2772 = vmatprep.subr.mxu0 0.0
    %2773 = vmatpush1.msra.mxu0 0.0
    %2774 = vmatprep.subr.mxu0 0.0
    %2775 = vmatpush1.msra.mxu0 0.0
    %2776 = vmatprep.subr.mxu0 0.0
    %2777 = vmatpush1.msra.mxu0 0.0
    %2778 = vmatprep.subr.mxu0 0.0
    %2779 = vmatpush1.msra.mxu0 0.0
    %2780 = vmatprep.subr.mxu0 0.0
    %2781 = vmatpush1.msra.mxu0 0.0
    %2782 = vmatprep.subr.mxu0 0.0
    %2783 = vmatpush1.msra.mxu0 0.0
    %2784 = vmatprep.subr.mxu0 0.0
    %2785 = vmatpush1.msra.mxu0 0.0
    %2786 = vmatprep.subr.mxu0 0.0
    %2787 = vmatpush1.msra.mxu0 0.0
    %2788 = vmatprep.subr.mxu0 0.0
    %2789 = vmatpush1.msra.mxu0 0.0
    %2790 = vmatprep.subr.mxu0 0.0
    %2791 = vmatpush1.msra.mxu0 0.0
    %2792 = vmatprep.mubr.f32.mxu0 0.0
    %2793 = vmatmul.mubr.f32.gmra.mrb[0].mxu0 %v2726
    %v2794 = vpop.f32.mrb[0].mxu0
    %v2795 = vadd.f32 0.0, %v2794
    %v2796 = vpop.f32.mrb[0].mxu0
    %2797 = vdwg.mxu0
    %2798 = vrot.lane.b32.xlu0 %v260, 64
    %v2799 = vpop.permute.xlu0 %2798
    %v2802 = vsel %vm267, %v1657, 0
    %2804 = vmatprep.subr.mxu0 0.0
    %2805 = vmatpush1.msra.mxu0 %v2799
    %2806 = vmatprep.subr.mxu0 0.0
    %2807 = vmatpush1.msra.mxu0 0.0
    %2808 = vmatprep.subr.mxu0 0.0
    %2809 = vmatpush1.msra.mxu0 0.0
    %2810 = vmatprep.subr.mxu0 0.0
    %2811 = vmatpush1.msra.mxu0 0.0
    %2812 = vmatprep.subr.mxu0 0.0
    %2813 = vmatpush1.msra.mxu0 0.0
    %2814 = vmatprep.subr.mxu0 0.0
    %2815 = vmatpush1.msra.mxu0 0.0
    %2816 = vmatprep.subr.mxu0 0.0
    %2817 = vmatpush1.msra.mxu0 0.0
    %2818 = vmatprep.subr.mxu0 0.0
    %2819 = vmatpush1.msra.mxu0 0.0
    %2820 = vmatprep.subr.mxu0 0.0
    %2821 = vmatpush1.msra.mxu0 0.0
    %2822 = vmatprep.subr.mxu0 0.0
    %2823 = vmatpush1.msra.mxu0 0.0
    %2824 = vmatprep.subr.mxu0 0.0
    %2825 = vmatpush1.msra.mxu0 0.0
    %2826 = vmatprep.subr.mxu0 0.0
    %2827 = vmatpush1.msra.mxu0 0.0
    %2828 = vmatprep.subr.mxu0 0.0
    %2829 = vmatpush1.msra.mxu0 0.0
    %2830 = vmatprep.subr.mxu0 0.0
    %2831 = vmatpush1.msra.mxu0 0.0
    %2832 = vmatprep.subr.mxu0 0.0
    %2833 = vmatpush1.msra.mxu0 0.0
    %2834 = vmatprep.subr.mxu0 0.0
    %2835 = vmatpush1.msra.mxu0 0.0
    %2836 = vmatprep.subr.mxu0 0.0
    %2837 = vmatpush1.msra.mxu0 0.0
    %2838 = vmatprep.subr.mxu0 0.0
    %2839 = vmatpush1.msra.mxu0 0.0
    %2840 = vmatprep.subr.mxu0 0.0
    %2841 = vmatpush1.msra.mxu0 0.0
    %2842 = vmatprep.subr.mxu0 0.0
    %2843 = vmatpush1.msra.mxu0 0.0
    %2844 = vmatprep.subr.mxu0 0.0
    %2845 = vmatpush1.msra.mxu0 0.0
    %2846 = vmatprep.subr.mxu0 0.0
    %2847 = vmatpush1.msra.mxu0 0.0
    %2848 = vmatprep.subr.mxu0 0.0
    %2849 = vmatpush1.msra.mxu0 0.0
    %2850 = vmatprep.subr.mxu0 0.0
    %2851 = vmatpush1.msra.mxu0 0.0
    %2852 = vmatprep.subr.mxu0 0.0
    %2853 = vmatpush1.msra.mxu0 0.0
    %2854 = vmatprep.subr.mxu0 0.0
    %2855 = vmatpush1.msra.mxu0 0.0
    %2856 = vmatprep.subr.mxu0 0.0
    %2857 = vmatpush1.msra.mxu0 0.0
    %2858 = vmatprep.subr.mxu0 0.0
    %2859 = vmatpush1.msra.mxu0 0.0
    %2860 = vmatprep.subr.mxu0 0.0
    %2861 = vmatpush1.msra.mxu0 0.0
    %2862 = vmatprep.subr.mxu0 0.0
    %2863 = vmatpush1.msra.mxu0 0.0
    %2864 = vmatprep.subr.mxu0 0.0
    %2865 = vmatpush1.msra.mxu0 0.0
    %2866 = vmatprep.subr.mxu0 0.0
    %2867 = vmatpush1.msra.mxu0 0.0
    %2868 = vmatprep.mubr.f32.mxu0 0.0
    %2869 = vmatmul.mubr.f32.gmra.mrb[0].mxu0 %v2802
    %v2870 = vpop.f32.mrb[0].mxu0
    %v2871 = vadd.f32 0.0, %v2870
    %v2872 = vpop.f32.mrb[0].mxu0
    %2873 = vdwg.mxu0
    %v2874 = vld [vmem:[#allocation8] sm:$0xff]
    %v2875 = vld [vmem:[#allocation8 + $0x8] sm:$0xff]
    %v2876 = vld [vmem:[#allocation8 + $0x10] sm:$0xff]
    %v2877 = vld [vmem:[#allocation8 + $0x18] sm:$0xff]
    %v2879 = vsel %vm267, %v2035, 0
    %v2882 = vsel %vm267, %v2111, 0
    %v2885 = vsel %vm267, %v2187, 0
    %v2888 = vsel %vm267, %v2263, 0
    %2890 = vmatprep.subr.mxu0 0.0
    %2891 = vmatpush1.msra.mxu0 %v2875
    %2892 = vmatprep.subr.mxu0 0.0
    %2893 = vmatpush1.msra.mxu0 0.0
    %2894 = vmatprep.subr.mxu0 0.0
    %2895 = vmatpush1.msra.mxu0 0.0
    %2896 = vmatprep.subr.mxu0 0.0
    %2897 = vmatpush1.msra.mxu0 0.0
    %2898 = vmatprep.subr.mxu0 0.0
    %2899 = vmatpush1.msra.mxu0 0.0
    %2900 = vmatprep.subr.mxu0 0.0
    %2901 = vmatpush1.msra.mxu0 0.0
    %2902 = vmatprep.subr.mxu0 0.0
    %2903 = vmatpush1.msra.mxu0 0.0
    %2904 = vmatprep.subr.mxu0 0.0
    %2905 = vmatpush1.msra.mxu0 0.0
    %2906 = vmatprep.subr.mxu0 0.0
    %2907 = vmatpush1.msra.mxu0 0.0
    %2908 = vmatprep.subr.mxu0 0.0
    %2909 = vmatpush1.msra.mxu0 0.0
    %2910 = vmatprep.subr.mxu0 0.0
    %2911 = vmatpush1.msra.mxu0 0.0
    %2912 = vmatprep.subr.mxu0 0.0
    %2913 = vmatpush1.msra.mxu0 0.0
    %2914 = vmatprep.subr.mxu0 0.0
    %2915 = vmatpush1.msra.mxu0 0.0
    %2916 = vmatprep.subr.mxu0 0.0
    %2917 = vmatpush1.msra.mxu0 0.0
    %2918 = vmatprep.subr.mxu0 0.0
    %2919 = vmatpush1.msra.mxu0 0.0
    %2920 = vmatprep.subr.mxu0 0.0
    %2921 = vmatpush1.msra.mxu0 0.0
    %2922 = vmatprep.subr.mxu0 0.0
    %2923 = vmatpush1.msra.mxu0 0.0
    %2924 = vmatprep.subr.mxu0 0.0
    %2925 = vmatpush1.msra.mxu0 0.0
    %2926 = vmatprep.subr.mxu0 0.0
    %2927 = vmatpush1.msra.mxu0 0.0
    %2928 = vmatprep.subr.mxu0 0.0
    %2929 = vmatpush1.msra.mxu0 0.0
    %2930 = vmatprep.subr.mxu0 0.0
    %2931 = vmatpush1.msra.mxu0 0.0
    %2932 = vmatprep.subr.mxu0 0.0
    %2933 = vmatpush1.msra.mxu0 0.0
    %2934 = vmatprep.subr.mxu0 0.0
    %2935 = vmatpush1.msra.mxu0 0.0
    %2936 = vmatprep.subr.mxu0 0.0
    %2937 = vmatpush1.msra.mxu0 0.0
    %2938 = vmatprep.subr.mxu0 0.0
    %2939 = vmatpush1.msra.mxu0 0.0
    %2940 = vmatprep.subr.mxu0 0.0
    %2941 = vmatpush1.msra.mxu0 0.0
    %2942 = vmatprep.subr.mxu0 0.0
    %2943 = vmatpush1.msra.mxu0 0.0
    %2944 = vmatprep.subr.mxu0 0.0
    %2945 = vmatpush1.msra.mxu0 0.0
    %2946 = vmatprep.subr.mxu0 0.0
    %2947 = vmatpush1.msra.mxu0 0.0
    %2948 = vmatprep.subr.mxu0 0.0
    %2949 = vmatpush1.msra.mxu0 0.0
    %2950 = vmatprep.subr.mxu0 0.0
    %2951 = vmatpush1.msra.mxu0 0.0
    %2952 = vmatprep.subr.mxu0 0.0
    %2953 = vmatpush1.msra.mxu0 0.0
    %2954 = vmatprep.mubr.f32.mxu0 0.0
    %2955 = vmatmul.mubr.f32.gmra.mrb[0].mxu0 %v2879
    %v2956 = vpop.f32.mrb[0].mxu0
    %v2957 = vadd.f32 0.0, %v2956
    %v2958 = vpop.f32.mrb[0].mxu0
    %2959 = vmatprep.mubr.f32.mxu0 0.0
    %2960 = vmatmul.mubr.f32.gmra.mrb[0].mxu0 %v2882
    %v2961 = vpop.f32.mrb[0].mxu0
    %v2962 = vadd.f32 0.0, %v2961
    %v2963 = vpop.f32.mrb[0].mxu0
    %2964 = vmatprep.mubr.f32.mxu0 0.0
    %2965 = vmatmul.mubr.f32.gmra.mrb[0].mxu0 %v2885
    %v2966 = vpop.f32.mrb[0].mxu0
    %v2967 = vadd.f32 0.0, %v2966
    %v2968 = vpop.f32.mrb[0].mxu0
    %2969 = vmatprep.mubr.f32.mxu0 0.0
    %2970 = vmatmul.mubr.f32.gmra.mrb[0].mxu0 %v2888
    %v2971 = vpop.f32.mrb[0].mxu0
    %v2972 = vadd.f32 0.0, %v2971
    %v2973 = vpop.f32.mrb[0].mxu0
    %2974 = vdwg.mxu0
    %v2976 = vsel %vm267, %v1731, 0
    %v2979 = vsel %vm267, %v1807, 0
    %v2982 = vsel %vm267, %v1883, 0
    %v2985 = vsel %vm267, %v1959, 0
    %2987 = vmatprep.subr.mxu0 0.0
    %2988 = vmatpush1.msra.mxu0 %v2874
    %2989 = vmatprep.subr.mxu0 0.0
    %2990 = vmatpush1.msra.mxu0 0.0
    %2991 = vmatprep.subr.mxu0 0.0
    %2992 = vmatpush1.msra.mxu0 0.0
    %2993 = vmatprep.subr.mxu0 0.0
    %2994 = vmatpush1.msra.mxu0 0.0
    %2995 = vmatprep.subr.mxu0 0.0
    %2996 = vmatpush1.msra.mxu0 0.0
    %2997 = vmatprep.subr.mxu0 0.0
    %2998 = vmatpush1.msra.mxu0 0.0
    %2999 = vmatprep.subr.mxu0 0.0
    %3000 = vmatpush1.msra.mxu0 0.0
    %3001 = vmatprep.subr.mxu0 0.0
    %3002 = vmatpush1.msra.mxu0 0.0
    %3003 = vmatprep.subr.mxu0 0.0
    %3004 = vmatpush1.msra.mxu0 0.0
    %3005 = vmatprep.subr.mxu0 0.0
    %3006 = vmatpush1.msra.mxu0 0.0
    %3007 = vmatprep.subr.mxu0 0.0
    %3008 = vmatpush1.msra.mxu0 0.0
    %3009 = vmatprep.subr.mxu0 0.0
    %3010 = vmatpush1.msra.mxu0 0.0
    %3011 = vmatprep.subr.mxu0 0.0
    %3012 = vmatpush1.msra.mxu0 0.0
    %3013 = vmatprep.subr.mxu0 0.0
    %3014 = vmatpush1.msra.mxu0 0.0
    %3015 = vmatprep.subr.mxu0 0.0
    %3016 = vmatpush1.msra.mxu0 0.0
    %3017 = vmatprep.subr.mxu0 0.0
    %3018 = vmatpush1.msra.mxu0 0.0
    %3019 = vmatprep.subr.mxu0 0.0
    %3020 = vmatpush1.msra.mxu0 0.0
    %3021 = vmatprep.subr.mxu0 0.0
    %3022 = vmatpush1.msra.mxu0 0.0
    %3023 = vmatprep.subr.mxu0 0.0
    %3024 = vmatpush1.msra.mxu0 0.0
    %3025 = vmatprep.subr.mxu0 0.0
    %3026 = vmatpush1.msra.mxu0 0.0
    %3027 = vmatprep.subr.mxu0 0.0
    %3028 = vmatpush1.msra.mxu0 0.0
    %3029 = vmatprep.subr.mxu0 0.0
    %3030 = vmatpush1.msra.mxu0 0.0
    %3031 = vmatprep.subr.mxu0 0.0
    %3032 = vmatpush1.msra.mxu0 0.0
    %3033 = vmatprep.subr.mxu0 0.0
    %3034 = vmatpush1.msra.mxu0 0.0
    %3035 = vmatprep.subr.mxu0 0.0
    %3036 = vmatpush1.msra.mxu0 0.0
    %3037 = vmatprep.subr.mxu0 0.0
    %3038 = vmatpush1.msra.mxu0 0.0
    %3039 = vmatprep.subr.mxu0 0.0
    %3040 = vmatpush1.msra.mxu0 0.0
    %3041 = vmatprep.subr.mxu0 0.0
    %3042 = vmatpush1.msra.mxu0 0.0
    %3043 = vmatprep.subr.mxu0 0.0
    %3044 = vmatpush1.msra.mxu0 0.0
    %3045 = vmatprep.subr.mxu0 0.0
    %3046 = vmatpush1.msra.mxu0 0.0
    %3047 = vmatprep.subr.mxu0 0.0
    %3048 = vmatpush1.msra.mxu0 0.0
    %3049 = vmatprep.subr.mxu0 0.0
    %3050 = vmatpush1.msra.mxu0 0.0
    %3051 = vmatprep.mubr.f32.mxu0 0.0
    %3052 = vmatmul.mubr.f32.gmra.mrb[0].mxu0 %v2976
    %v3053 = vpop.f32.mrb[0].mxu0
    %v3054 = vadd.f32 %v2957, %v3053
    %v3055 = vpop.f32.mrb[0].mxu0
    %3056 = vmatprep.mubr.f32.mxu0 0.0
    %3057 = vmatmul.mubr.f32.gmra.mrb[0].mxu0 %v2979
    %v3058 = vpop.f32.mrb[0].mxu0
    %v3059 = vadd.f32 %v2962, %v3058
    %v3060 = vpop.f32.mrb[0].mxu0
    %3061 = vmatprep.mubr.f32.mxu0 0.0
    %3062 = vmatmul.mubr.f32.gmra.mrb[0].mxu0 %v2982
    %v3063 = vpop.f32.mrb[0].mxu0
    %v3064 = vadd.f32 %v2967, %v3063
    %v3065 = vpop.f32.mrb[0].mxu0
    %3066 = vmatprep.mubr.f32.mxu0 0.0
    %3067 = vmatmul.mubr.f32.gmra.mrb[0].mxu0 %v2985
    %v3068 = vpop.f32.mrb[0].mxu0
    %v3069 = vadd.f32 %v2972, %v3068
    %v3070 = vpop.f32.mrb[0].mxu0
    %3071 = vdwg.mxu0
    %v3073 = vsel %vm267, %v2339, 0
    %v3076 = vsel %vm267, %v2415, 0
    %v3079 = vsel %vm267, %v2491, 0
    %v3082 = vsel %vm267, %v2567, 0
    %3084 = vmatprep.subr.mxu0 0.0
    %3085 = vmatpush1.msra.mxu0 %v2876
    %3086 = vmatprep.subr.mxu0 0.0
    %3087 = vmatpush1.msra.mxu0 0.0
    %3088 = vmatprep.subr.mxu0 0.0
    %3089 = vmatpush1.msra.mxu0 0.0
    %3090 = vmatprep.subr.mxu0 0.0
    %3091 = vmatpush1.msra.mxu0 0.0
    %3092 = vmatprep.subr.mxu0 0.0
    %3093 = vmatpush1.msra.mxu0 0.0
    %3094 = vmatprep.subr.mxu0 0.0
    %3095 = vmatpush1.msra.mxu0 0.0
    %3096 = vmatprep.subr.mxu0 0.0
    %3097 = vmatpush1.msra.mxu0 0.0
    %3098 = vmatprep.subr.mxu0 0.0
    %3099 = vmatpush1.msra.mxu0 0.0
    %3100 = vmatprep.subr.mxu0 0.0
    %3101 = vmatpush1.msra.mxu0 0.0
    %3102 = vmatprep.subr.mxu0 0.0
    %3103 = vmatpush1.msra.mxu0 0.0
    %3104 = vmatprep.subr.mxu0 0.0
    %3105 = vmatpush1.msra.mxu0 0.0
    %3106 = vmatprep.subr.mxu0 0.0
    %3107 = vmatpush1.msra.mxu0 0.0
    %3108 = vmatprep.subr.mxu0 0.0
    %3109 = vmatpush1.msra.mxu0 0.0
    %3110 = vmatprep.subr.mxu0 0.0
    %3111 = vmatpush1.msra.mxu0 0.0
    %3112 = vmatprep.subr.mxu0 0.0
    %3113 = vmatpush1.msra.mxu0 0.0
    %3114 = vmatprep.subr.mxu0 0.0
    %3115 = vmatpush1.msra.mxu0 0.0
    %3116 = vmatprep.subr.mxu0 0.0
    %3117 = vmatpush1.msra.mxu0 0.0
    %3118 = vmatprep.subr.mxu0 0.0
    %3119 = vmatpush1.msra.mxu0 0.0
    %3120 = vmatprep.subr.mxu0 0.0
    %3121 = vmatpush1.msra.mxu0 0.0
    %3122 = vmatprep.subr.mxu0 0.0
    %3123 = vmatpush1.msra.mxu0 0.0
    %3124 = vmatprep.subr.mxu0 0.0
    %3125 = vmatpush1.msra.mxu0 0.0
    %3126 = vmatprep.subr.mxu0 0.0
    %3127 = vmatpush1.msra.mxu0 0.0
    %3128 = vmatprep.subr.mxu0 0.0
    %3129 = vmatpush1.msra.mxu0 0.0
    %3130 = vmatprep.subr.mxu0 0.0
    %3131 = vmatpush1.msra.mxu0 0.0
    %3132 = vmatprep.subr.mxu0 0.0
    %3133 = vmatpush1.msra.mxu0 0.0
    %3134 = vmatprep.subr.mxu0 0.0
    %3135 = vmatpush1.msra.mxu0 0.0
    %3136 = vmatprep.subr.mxu0 0.0
    %3137 = vmatpush1.msra.mxu0 0.0
    %3138 = vmatprep.subr.mxu0 0.0
    %3139 = vmatpush1.msra.mxu0 0.0
    %3140 = vmatprep.subr.mxu0 0.0
    %3141 = vmatpush1.msra.mxu0 0.0
    %3142 = vmatprep.subr.mxu0 0.0
    %3143 = vmatpush1.msra.mxu0 0.0
    %3144 = vmatprep.subr.mxu0 0.0
    %3145 = vmatpush1.msra.mxu0 0.0
    %3146 = vmatprep.subr.mxu0 0.0
    %3147 = vmatpush1.msra.mxu0 0.0
    %3148 = vmatprep.mubr.f32.mxu0 0.0
    %3149 = vmatmul.mubr.f32.gmra.mrb[0].mxu0 %v3073
    %v3150 = vpop.f32.mrb[0].mxu0
    %v3151 = vadd.f32 0.0, %v3150
    %v3152 = vpop.f32.mrb[0].mxu0
    %3153 = vmatprep.mubr.f32.mxu0 0.0
    %3154 = vmatmul.mubr.f32.gmra.mrb[0].mxu0 %v3076
    %v3155 = vpop.f32.mrb[0].mxu0
    %v3156 = vadd.f32 0.0, %v3155
    %v3157 = vpop.f32.mrb[0].mxu0
    %3158 = vmatprep.mubr.f32.mxu0 0.0
    %3159 = vmatmul.mubr.f32.gmra.mrb[0].mxu0 %v3079
    %v3160 = vpop.f32.mrb[0].mxu0
    %v3161 = vadd.f32 0.0, %v3160
    %v3162 = vpop.f32.mrb[0].mxu0
    %3163 = vmatprep.mubr.f32.mxu0 0.0
    %3164 = vmatmul.mubr.f32.gmra.mrb[0].mxu0 %v3082
    %v3165 = vpop.f32.mrb[0].mxu0
    %v3166 = vadd.f32 0.0, %v3165
    %v3167 = vpop.f32.mrb[0].mxu0
    %3168 = vdwg.mxu0
    %v3169 = vadd.f32 %v3054, %v3151
    %v3170 = vadd.f32 %v3059, %v3156
    %v3171 = vadd.f32 %v3064, %v3161
    %v3172 = vadd.f32 %v3069, %v3166
    %v3174 = vsel %vm267, %v2643, 0
    %v3177 = vsel %vm267, %v2719, 0
    %v3180 = vsel %vm267, %v2795, 0
    %v3183 = vsel %vm267, %v2871, 0
    %3185 = vmatprep.subr.mxu0 0.0
    %3186 = vmatpush1.msra.mxu0 %v2877
    %3187 = vmatprep.subr.mxu0 0.0
    %3188 = vmatpush1.msra.mxu0 0.0
    %3189 = vmatprep.subr.mxu0 0.0
    %3190 = vmatpush1.msra.mxu0 0.0
    %3191 = vmatprep.subr.mxu0 0.0
    %3192 = vmatpush1.msra.mxu0 0.0
    %3193 = vmatprep.subr.mxu0 0.0
    %3194 = vmatpush1.msra.mxu0 0.0
    %3195 = vmatprep.subr.mxu0 0.0
    %3196 = vmatpush1.msra.mxu0 0.0
    %3197 = vmatprep.subr.mxu0 0.0
    %3198 = vmatpush1.msra.mxu0 0.0
    %3199 = vmatprep.subr.mxu0 0.0
    %3200 = vmatpush1.msra.mxu0 0.0
    %3201 = vmatprep.subr.mxu0 0.0
    %3202 = vmatpush1.msra.mxu0 0.0
    %3203 = vmatprep.subr.mxu0 0.0
    %3204 = vmatpush1.msra.mxu0 0.0
    %3205 = vmatprep.subr.mxu0 0.0
    %3206 = vmatpush1.msra.mxu0 0.0
    %3207 = vmatprep.subr.mxu0 0.0
    %3208 = vmatpush1.msra.mxu0 0.0
    %3209 = vmatprep.subr.mxu0 0.0
    %3210 = vmatpush1.msra.mxu0 0.0
    %3211 = vmatprep.subr.mxu0 0.0
    %3212 = vmatpush1.msra.mxu0 0.0
    %3213 = vmatprep.subr.mxu0 0.0
    %3214 = vmatpush1.msra.mxu0 0.0
    %3215 = vmatprep.subr.mxu0 0.0
    %3216 = vmatpush1.msra.mxu0 0.0
    %3217 = vmatprep.subr.mxu0 0.0
    %3218 = vmatpush1.msra.mxu0 0.0
    %3219 = vmatprep.subr.mxu0 0.0
    %3220 = vmatpush1.msra.mxu0 0.0
    %3221 = vmatprep.subr.mxu0 0.0
    %3222 = vmatpush1.msra.mxu0 0.0
    %3223 = vmatprep.subr.mxu0 0.0
    %3224 = vmatpush1.msra.mxu0 0.0
    %3225 = vmatprep.subr.mxu0 0.0
    %3226 = vmatpush1.msra.mxu0 0.0
    %3227 = vmatprep.subr.mxu0 0.0
    %3228 = vmatpush1.msra.mxu0 0.0
    %3229 = vmatprep.subr.mxu0 0.0
    %3230 = vmatpush1.msra.mxu0 0.0
    %3231 = vmatprep.subr.mxu0 0.0
    %3232 = vmatpush1.msra.mxu0 0.0
    %3233 = vmatprep.subr.mxu0 0.0
    %3234 = vmatpush1.msra.mxu0 0.0
    %3235 = vmatprep.subr.mxu0 0.0
    %3236 = vmatpush1.msra.mxu0 0.0
    %3237 = vmatprep.subr.mxu0 0.0
    %3238 = vmatpush1.msra.mxu0 0.0
    %3239 = vmatprep.subr.mxu0 0.0
    %3240 = vmatpush1.msra.mxu0 0.0
    %3241 = vmatprep.subr.mxu0 0.0
    %3242 = vmatpush1.msra.mxu0 0.0
    %3243 = vmatprep.subr.mxu0 0.0
    %3244 = vmatpush1.msra.mxu0 0.0
    %3245 = vmatprep.subr.mxu0 0.0
    %3246 = vmatpush1.msra.mxu0 0.0
    %3247 = vmatprep.subr.mxu0 0.0
    %3248 = vmatpush1.msra.mxu0 0.0
    %3249 = vmatprep.mubr.f32.mxu0 0.0
    %3250 = vmatmul.mubr.f32.gmra.mrb[0].mxu0 %v3174
    %v3251 = vpop.f32.mrb[0].mxu0
    %v3252 = vadd.f32 0.0, %v3251
    %v3253 = vpop.f32.mrb[0].mxu0
    %3254 = vmatprep.mubr.f32.mxu0 0.0
    %3255 = vmatmul.mubr.f32.gmra.mrb[0].mxu0 %v3177
    %v3256 = vpop.f32.mrb[0].mxu0
    %v3257 = vadd.f32 0.0, %v3256
    %v3258 = vpop.f32.mrb[0].mxu0
    %3259 = vmatprep.mubr.f32.mxu0 0.0
    %3260 = vmatmul.mubr.f32.gmra.mrb[0].mxu0 %v3180
    %v3261 = vpop.f32.mrb[0].mxu0
    %v3262 = vadd.f32 0.0, %v3261
    %v3263 = vpop.f32.mrb[0].mxu0
    %3264 = vmatprep.mubr.f32.mxu0 0.0
    %3265 = vmatmul.mubr.f32.gmra.mrb[0].mxu0 %v3183
    %v3266 = vpop.f32.mrb[0].mxu0
    %v3267 = vadd.f32 0.0, %v3266
    %v3268 = vpop.f32.mrb[0].mxu0
    %3269 = vdwg.mxu0
    %v3270 = vadd.f32 %v3169, %v3252
    %v3271 = vadd.f32 %v3170, %v3257
    %v3272 = vadd.f32 %v3171, %v3262
    %v3273 = vadd.f32 %v3172, %v3267
    %v3274 = vld [vmem:[%s5] sm:$0x1]
    %v3276 = vlaneseq
    %v3277 = vshrl.u32 %v3276, 7
    %v3278 = vsub.s32 0, %v3277
    %v3279 = vrot.slane %v3274, %v3278
    %v3281 = vadd.f32 %v3270, %v3279
    %v3282 = vadd.f32 %v3271, %v3279
    %v3283 = vadd.f32 %v3272, %v3279
    %v3284 = vadd.f32 %v3273, %v3279
    %v3285 = vadd.f32 %v3281, %v88
    %v3286 = vadd.f32 %v3282, %v89
    %v3287 = vadd.f32 %v3283, %v90
    %v3288 = vadd.f32 %v3284, %v91
    %v3289 = vsel %vm103, %v3285, 0.0
    %3290 = vadd.xlane.f32.xlu0 %v3289
    %v3291 = vpop.xlane.xlu0 %3290
    %v3292 = vsel %vm103, %v3286, 0.0
    %3293 = vadd.xlane.f32.xlu0 %v3292
    %v3294 = vpop.xlane.xlu0 %3293
    %v3295 = vsel %vm103, %v3287, 0.0
    %3296 = vadd.xlane.f32.xlu0 %v3295
    %v3297 = vpop.xlane.xlu0 %3296
    %v3298 = vsel %vm103, %v3288, 0.0
    %3299 = vadd.xlane.f32.xlu0 %v3298
    %v3300 = vpop.xlane.xlu0 %3299
    %v3301 = vrcp.pop 32.0
    %v3302 = vmul.f32 %v3291, %v3301
    %v3303 = vmul.f32 %v3294, %v3301
    %v3304 = vmul.f32 %v3297, %v3301
    %v3305 = vmul.f32 %v3300, %v3301
    %v3306 = vsub.f32 %v3285, %v3302
    %v3307 = vsub.f32 %v3286, %v3303
    %v3308 = vsub.f32 %v3287, %v3304
    %v3309 = vsub.f32 %v3288, %v3305
    %v3310 = vmul.f32 %v3306, %v3306
    %v3311 = vmul.f32 %v3307, %v3307
    %v3312 = vmul.f32 %v3308, %v3308
    %v3313 = vmul.f32 %v3309, %v3309
    %v3314 = vsel %vm103, %v3310, 0.0
    %3315 = vadd.xlane.f32.xlu0 %v3314
    %v3316 = vpop.xlane.xlu0 %3315
    %v3317 = vsel %vm103, %v3311, 0.0
    %3318 = vadd.xlane.f32.xlu0 %v3317
    %v3319 = vpop.xlane.xlu0 %3318
    %v3320 = vsel %vm103, %v3312, 0.0
    %3321 = vadd.xlane.f32.xlu0 %v3320
    %v3322 = vpop.xlane.xlu0 %3321
    %v3323 = vsel %vm103, %v3313, 0.0
    %3324 = vadd.xlane.f32.xlu0 %v3323
    %v3325 = vpop.xlane.xlu0 %3324
    %v3326 = vmul.f32 %v3316, %v3301
    %v3327 = vmul.f32 %v3319, %v3301
    %v3328 = vmul.f32 %v3322, %v3301
    %v3329 = vmul.f32 %v3325, %v3301
    %v3330 = vadd.f32 %v3326, 1e-12
    %v3331 = vadd.f32 %v3327, 1e-12
    %v3332 = vadd.f32 %v3328, 1e-12
    %v3333 = vadd.f32 %v3329, 1e-12
    %v3334 = vrsqrt.pop %v3330
    %v3335 = vrsqrt.pop %v3331
    %v3336 = vrsqrt.pop %v3332
    %v3337 = vrsqrt.pop %v3333
    %v3338 = vmul.f32 %v3306, %v3334
    %v3339 = vmul.f32 %v3307, %v3335
    %v3340 = vmul.f32 %v3308, %v3336
    %v3341 = vmul.f32 %v3309, %v3337
    %v3342 = vld [vmem:[%s6] sm:$0x1]
    %v3344 = vlaneseq
    %v3345 = vshrl.u32 %v3344, 7
    %v3346 = vsub.s32 0, %v3345
    %v3347 = vrot.slane %v3342, %v3346
    %v3349 = vmul.f32 %v3338, %v3347
    %v3350 = vmul.f32 %v3339, %v3347
    %v3351 = vmul.f32 %v3340, %v3347
    %v3352 = vmul.f32 %v3341, %v3347
    %v3353 = vld [vmem:[%s7] sm:$0x1]
    %v3355 = vlaneseq
    %v3356 = vshrl.u32 %v3355, 7
    %v3357 = vsub.s32 0, %v3356
    %v3358 = vrot.slane %v3353, %v3357
    %v3360 = vadd.f32 %v3349, %v3358
    %v3361 = vadd.f32 %v3350, %v3358
    %v3362 = vadd.f32 %v3351, %v3358
    %v3363 = vadd.f32 %v3352, %v3358
    %3364 = vst.msk [vmem:[#allocation10] sm:$0xff] %vm103, %v3360
    %3365 = vst.msk [vmem:[#allocation10 + $0x8] sm:$0xff] %vm103, %v3361
    %3366 = vst.msk [vmem:[#allocation10 + $0x10] sm:$0xff] %vm103, %v3362
    %3367 = vst.msk [vmem:[#allocation10 + $0x18] sm:$0xff] %vm103, %v3363
    %v3368 = vadd.f32 %v1642, %v1646
    %v3369 = vadd.f32 %v1643, %v1647
    %v3370 = vadd.f32 %v1644, %v1648
    %v3371 = vadd.f32 %v1645, %v1649
    %v3372 = vadd.f32 %v3368, %v1650
    %v3373 = vadd.f32 %v3369, %v1651
    %v3374 = vadd.f32 %v3370, %v1652
    %v3375 = vadd.f32 %v3371, %v1653
    %v3376 = vadd.f32 %v3372, %v1654
    %v3377 = vadd.f32 %v3373, %v1655
    %v3378 = vadd.f32 %v3374, %v1656
    %v3379 = vadd.f32 %v3375, %v1657
    %v3380 = vmul.f32 %v3376, 0.25
    %v3381 = vmul.f32 %v3377, 0.25
    %v3382 = vmul.f32 %v3378, 0.25
    %v3383 = vmul.f32 %v3379, 0.25
    %3384 = vst.msk [vmem:[#allocation11] sm:$0xff] %vm267, %v3380
    %3385 = vst.msk [vmem:[#allocation11 + $0x8] sm:$0xff] %vm267, %v3381
    %3386 = vst.msk [vmem:[#allocation11 + $0x10] sm:$0xff] %vm267, %v3382
    %3387 = vst.msk [vmem:[#allocation11 + $0x18] sm:$0xff] %vm267, %v3383
    // Predicated region
    $region50: #{tpu_custom_call.1} parent=1 // pred_check
      _
    $region51: #{tpu_custom_call.1} parent=1 // pred_check_branch
      %3389 = sbr.rel (0) target = $region53
    $region52: #{tpu_custom_call.1} parent=1 // pred_region
      %s3391 = ssub.s32 512, 512
      %3392 = vsyncadd [#allocation4], %s3391
      %s3393 = sshll.u32 [#allocation10], 4
      %s3394 = int_to_ptr.vmem [resolvable:$true] %s3393
      %3399 = dma.vmem_to_hbm [thread:$0]  %s3394, 512, %s8, [#allocation4], 128, 128, 8
    $region53: #{tpu_custom_call.1} parent=1 // pred_fallthru
      _
    // Predicated region
    $region54: #{tpu_custom_call.1} parent=1 // pred_check
      _
    $region55: #{tpu_custom_call.1} parent=1 // pred_check_branch
      %3401 = sbr.rel (0) target = $region57
    $region56: #{tpu_custom_call.1} parent=1 // pred_region
      %s3403 = ssub.s32 512, 512
      %3404 = vsyncadd [#allocation12], %s3403
      %s3405 = sshll.u32 [#allocation11], 4
      %s3406 = int_to_ptr.vmem [resolvable:$true] %s3405
      %3411 = dma.vmem_to_hbm [thread:$0]  %s3406, 512, %s9, [#allocation12], 128, 128, 8
    $region57: #{tpu_custom_call.1} parent=1 // pred_fallthru
      _
    // Predicated region
    $region58: #{tpu_custom_call.1} parent=1 // pred_check
      _
    $region59: #{tpu_custom_call.1} parent=1 // pred_check_branch
      %3413 = sbr.rel (0) target = $region61
    $region60: #{tpu_custom_call.1} parent=1 // pred_region
      %3414 = dma.done [#allocation4], 512
    $region61: #{tpu_custom_call.1} parent=1 // pred_fallthru
      _
    // Predicated region
    $region62: #{tpu_custom_call.1} parent=1 // pred_check
      _
    $region63: #{tpu_custom_call.1} parent=1 // pred_check_branch
      %3416 = sbr.rel (0) target = $region65
    $region64: #{tpu_custom_call.1} parent=1 // pred_region
      %3417 = dma.done [#allocation12], 512
    $region65: #{tpu_custom_call.1} parent=1 // pred_fallthru
      _
    %3418 = vsyncpa [#allocation3], 1
    %3419 = vsyncpa [#allocation6], 1
    %3420 = vsyncpa [#allocation9], 1
    %3421 = vsyncpa [#allocation4], 1
    %3422 = vsyncpa [#allocation12], 1

</llo_original>
